<compile_context>
chip_gen: v7x
topology: tpu7x:2x2x1
jax: 0.10.0
libtpu: 0.0.40
codegen_flags: <defaults>
</compile_context>

<pallas_src>
import jax
import jax.numpy as jnp
from jax.experimental import pallas as pl
from jax.experimental.pallas import tpu as pltpu

BN_EPS = 1e-5
K = 5                     # conv kernel size
H1 = 14                   # conv1 output spatial size (28 -> 14)
H2 = 7                    # conv2 output spatial size (14 -> 7)
C1 = 16                   # conv1 channels
C2 = 32                   # conv2 channels
L1 = H1 * C1              # 224 lanes of f1  : lane = w1*16 + c
L2 = H2 * C2              # 224 lanes of f2  : lane = ow*32 + co
XW = 32                   # padded input width (28 + 2 + 2)


# ----------------------------------------------------------------------------
# The single fused kernel
# ----------------------------------------------------------------------------
def fused_net_kernel(x1_ref, w1f_ref, g1_ref, b1_ref,
                     w2f_ref, g2_ref, b2_ref,
                     s1_ref, s1t_ref, s2_ref, s2t_ref,
                     wl_ref, bl_ref, out_ref, f1_ref):
    f32 = jnp.float32
    N = x1_ref.shape[2]

    # ---------------- conv1 (folded weights), raw pre-BN outputs ------------
    raw1 = {}
    sum1 = jnp.zeros((1, L1), f32)
    sq1 = jnp.zeros((1, L1), f32)
    for hp in range(2):                       # H parity of the conv1 output row
        for n in range(N):
            acc = jnp.zeros((H2, L1), f32)    # 7 output rows of this parity
            for kh in range(K):
                acc = acc + jnp.dot(x1_ref[hp, kh, n], w1f_ref[kh],
                                    preferred_element_type=f32)
            raw1[(hp, n)] = acc
            sum1 = sum1 + jnp.sum(acc, axis=0, keepdims=True)
            sq1 = sq1 + jnp.sum(acc * acc, axis=0, keepdims=True)

    # ---------------- BN1 statistics (whole batch) ---------------------------
    cnt1 = f32(N * H1 * H1)
    ch_sum1 = jnp.dot(sum1, s1_ref[...], preferred_element_type=f32)   # (1,16)
    ch_sq1 = jnp.dot(sq1, s1_ref[...], preferred_element_type=f32)
    mean1 = ch_sum1 / cnt1
    var1 = jnp.maximum(ch_sq1 / cnt1 - mean1 * mean1, 0.0)             # clamp
    scale1 = g1_ref[...] * jax.lax.rsqrt(var1 + BN_EPS)
    shift1 = b1_ref[...] - mean1 * scale1
    scale1_l = jnp.dot(scale1, s1t_ref[...], preferred_element_type=f32)  # (1,224)
    shift1_l = jnp.dot(shift1, s1t_ref[...], preferred_element_type=f32)

    # ---------------- normalize + ReLU, write padded f1 scratch --------------
    f1_ref[...] = jnp.zeros(f1_ref.shape, f32)          # zero pad rows a=0, a=8
    for hp in range(2):
        for n in range(N):
            y = jnp.maximum(raw1[(hp, n)] * scale1_l + shift1_l, 0.0)
            f1_ref[hp, n, 1:8, :] = y

    # ---------------- conv2 (folded weights), raw pre-BN outputs ------------
    raw2 = {}
    sum2 = jnp.zeros((1, L2), f32)
    sq2 = jnp.zeros((1, L2), f32)
    for n in range(N):
        acc = jnp.zeros((H2, L2), f32)
        for kh in range(K):
            hp, sh = kh % 2, kh // 2
            acc = acc + jnp.dot(f1_ref[hp, n, sh:sh + H2, :], w2f_ref[kh],
                                preferred_element_type=f32)
        raw2[n] = acc
        sum2 = sum2 + jnp.sum(acc, axis=0, keepdims=True)
        sq2 = sq2 + jnp.sum(acc * acc, axis=0, keepdims=True)

    # ---------------- BN2 statistics -----------------------------------------
    cnt2 = f32(N * H2 * H2)
    ch_sum2 = jnp.dot(sum2, s2_ref[...], preferred_element_type=f32)   # (1,32)
    ch_sq2 = jnp.dot(sq2, s2_ref[...], preferred_element_type=f32)
    mean2 = ch_sum2 / cnt2
    var2 = jnp.maximum(ch_sq2 / cnt2 - mean2 * mean2, 0.0)
    scale2 = g2_ref[...] * jax.lax.rsqrt(var2 + BN_EPS)
    shift2 = b2_ref[...] - mean2 * scale2
    scale2_l = jnp.dot(scale2, s2t_ref[...], preferred_element_type=f32)  # (1,224)
    shift2_l = jnp.dot(shift2, s2t_ref[...], preferred_element_type=f32)

    # ---------------- ReLU + global average pool + Linear --------------------
    logits = []
    for n in range(N):
        y = jnp.maximum(raw2[n] * scale2_l + shift2_l, 0.0)              # (7,224)
        pooled = jnp.dot(jnp.sum(y, axis=0, keepdims=True), s2_ref[...],
                         preferred_element_type=f32) * (1.0 / (H2 * H2))  # (1,32)
        logits.append(jnp.dot(pooled, wl_ref[...],
                              preferred_element_type=f32) + bl_ref[...])  # (1,10)
    out_ref[...] = jnp.concatenate(logits, axis=0)       # single (N,10) store


# ----------------------------------------------------------------------------
# Host-side weight folding (tiny, weights-only; no activation traffic)
# ----------------------------------------------------------------------------
def fold_conv1(w):                       # w: (16, 1, 5, 5) OIHW
    # W1f[kh, win, w1*16 + c] = w[c, 0, kh, win - 2*w1]  (0 if kw out of range)
    win = jnp.arange(XW)[:, None]        # (32,1) padded input column
    wo = jnp.arange(H1)[None, :]         # (1,14) output column
    kw = win - 2 * wo                    # (32,14)
    valid = (kw >= 0) & (kw < K)
    kwc = jnp.clip(kw, 0, K - 1)
    taps = w[:, 0]                       # (16, 5, 5)  [c, kh, kw]
    g = taps[:, :, kwc]                  # (16, 5, 32, 14)
    g = jnp.where(valid[None, None], g, 0.0)
    w1f = jnp.transpose(g, (1, 2, 3, 0)) # (kh, win, wo, c)
    return w1f.reshape(K, XW, L1).astype(jnp.float32)


def fold_conv2(w):                       # w: (32, 16, 5, 5) OIHW
    # W2f[kh, w1*16 + c, ow*32 + co] = w[co, c, kh, w1 - 2*ow + 2]
    w1i = jnp.arange(H1)[:, None]        # (14,1)
    ow = jnp.arange(H2)[None, :]         # (1,7)
    kw = w1i - 2 * ow + 2                # (14,7)
    valid = (kw >= 0) & (kw < K)
    kwc = jnp.clip(kw, 0, K - 1)
    t = jnp.transpose(w, (2, 1, 0, 3))   # (kh, c, co, kw)
    g = t[:, :, :, kwc]                  # (kh, c, co, 14, 7)
    g = jnp.where(valid[None, None, None], g, 0.0)
    w2f = jnp.transpose(g, (0, 3, 1, 4, 2))   # (kh, w1, c, ow, co)
    return w2f.reshape(K, L1, L2).astype(jnp.float32)


def _full_spec(shape):
    nd = len(shape)
    return pl.BlockSpec(shape, lambda *_: (0,) * nd)


# ----------------------------------------------------------------------------
# Forward pass: one pallas_call
# ----------------------------------------------------------------------------
def _net_forward(x, params):
    """x: (N, 1, 28, 28) float32  ->  logits (N, 10)."""
    w1, g1, b1, w2, g2, b2, wl, bl = params
    N = x.shape[0]

    # --- input prep (tiny, input-only): pad + phase-ordered row gather -------
    xpad = jnp.pad(x[:, 0].astype(jnp.float32), ((0, 0), (2, 2), (2, 2)))  # (N,32,32)
    hp = jnp.arange(2)[:, None, None]
    kh = jnp.arange(K)[None, :, None]
    jj = jnp.arange(H2)[None, None, :]
    rows = 4 * jj + 2 * hp + kh                       # (2,5,7), all in [0,31]
    x1 = jnp.transpose(xpad[:, rows, :], (1, 2, 0, 3, 4))   # (2,5,N,7,32)

    # --- folded weights + channel-sum / broadcast matrices -------------------
    w1f = fold_conv1(w1)                              # (5, 32, 224)
    w2f = fold_conv2(w2)                              # (5, 224, 224)
    s1 = jnp.tile(jnp.eye(C1, dtype=jnp.float32), (H1, 1))   # (224,16)
    s2 = jnp.tile(jnp.eye(C2, dtype=jnp.float32), (H2, 1))   # (224,32)

    args = (x1, w1f,
            g1.reshape(1, C1).astype(jnp.float32), b1.reshape(1, C1).astype(jnp.float32),
            w2f,
            g2.reshape(1, C2).astype(jnp.float32), b2.reshape(1, C2).astype(jnp.float32),
            s1, s1.T, s2, s2.T,
            wl.T.astype(jnp.float32), bl.reshape(1, -1).astype(jnp.float32))

    return pl.pallas_call(
        fused_net_kernel,
        out_shape=jax.ShapeDtypeStruct((N, 10), jnp.float32),
        grid=(1,),
        in_specs=[_full_spec(a.shape) for a in args],
        out_specs=_full_spec((N, 10)),
        scratch_shapes=[pltpu.VMEM((2, N, H2 + 2, L1), jnp.float32)],
        compiler_params=pltpu.CompilerParams(dimension_semantics=("arbitrary",)),
    )(*args)


net_forward = jax.jit(_net_forward)


# ----------------------------------------------------------------------------
# Pure-JAX reference (lax.conv, NCHW) for correctness checking
# ----------------------------------------------------------------------------
def net_reference(x, params):
    w1, g1, b1, w2, g2, b2, wl, bl = params

    def bn_relu(y, g, b):
        mean = jnp.mean(y, axis=(0, 2, 3), keepdims=True)
        var = jnp.var(y, axis=(0, 2, 3), keepdims=True)
        yn = (y - mean) / jnp.sqrt(var + BN_EPS)
        return jnp.maximum(yn * g.reshape(1, -1, 1, 1) + b.reshape(1, -1, 1, 1), 0.0)

    dn = ("NCHW", "OIHW", "NCHW")
    y = jax.lax.conv_general_dilated(x, w1, (2, 2), ((2, 2), (2, 2)),
                                     dimension_numbers=dn)
    y = bn_relu(y, g1, b1)
    y = jax.lax.conv_general_dilated(y, w2, (2, 2), ((2, 2), (2, 2)),
                                     dimension_numbers=dn)
    y = bn_relu(y, g2, b2)
    pooled = jnp.mean(y, axis=(2, 3))                 # AvgPool2d(7) -> squeeze
    return pooled @ wl.T + bl


# ----------------------------------------------------------------------------
if __name__ == "__main__":
    key = jax.random.PRNGKey(0)
    kx, k1, k2, k3, k4 = jax.random.split(key, 5)

    # deterministic parameter init (shapes from the PyTorch __init__)
    w1 = 0.1 * jax.random.normal(k1, (16, 1, 5, 5), jnp.float32)    # Conv2d(1,16,5)
    g1 = jnp.ones((16,), jnp.float32)                               # BN gamma
    b1 = jnp.zeros((16,), jnp.float32)                              # BN beta
    w2 = 0.05 * jax.random.normal(k2, (32, 16, 5, 5), jnp.float32)  # Conv2d(16,32,5)
    g2 = jnp.ones((32,), jnp.float32)
    b2 = jnp.zeros((32,), jnp.float32)
    wl = 0.1 * jax.random.normal(k3, (10, 32), jnp.float32)         # Linear(32,10)
    bl = 0.01 * jax.random.normal(k4, (10,), jnp.float32)
    params = (w1, g1, b1, w2, g2, b2, wl, bl)

    # input: MNIST-like (batch=2, 1 channel, 28x28) so AvgPool2d(7) yields 1x1
    x = jax.random.normal(kx, (2, 1, 28, 28), jnp.float32)

    out = jax.block_until_ready(net_forward(x, params))
    ref = jax.block_until_ready(net_reference(x, params))

    assert out.shape == (2, 10), out.shape
    assert jnp.allclose(out, ref, atol=1e-3, rtol=1e-3), (out, ref)
    print("KERNEL_OK")
</pallas_src>

<mosaic_0001>
module attributes {stable_mosaic.version = 11 : i64} {
  func.func @fused_net_kernel(%arg0: i32, %arg1: memref<2x5x2x7x32xf32, #tpu.memory_space<vmem>>, %arg2: memref<5x32x224xf32, #tpu.memory_space<vmem>>, %arg3: memref<1x16xf32, #tpu.memory_space<vmem>>, %arg4: memref<1x16xf32, #tpu.memory_space<vmem>>, %arg5: memref<5x224x224xf32, #tpu.memory_space<vmem>>, %arg6: memref<1x32xf32, #tpu.memory_space<vmem>>, %arg7: memref<1x32xf32, #tpu.memory_space<vmem>>, %arg8: memref<224x16xf32, #tpu.memory_space<vmem>>, %arg9: memref<16x224xf32, #tpu.memory_space<vmem>>, %arg10: memref<224x32xf32, #tpu.memory_space<vmem>>, %arg11: memref<32x224xf32, #tpu.memory_space<vmem>>, %arg12: memref<32x10xf32, #tpu.memory_space<vmem>>, %arg13: memref<1x10xf32, #tpu.memory_space<vmem>>, %arg14: memref<2x10xf32, #tpu.memory_space<vmem>>, %arg15: memref<2x2x9x224xf32, #tpu.memory_space<vmem>>) attributes {dimension_semantics = [#tpu.dimension_semantics<arbitrary>], iteration_bounds = array<i64: 1>, scalar_prefetch = 0 : i64, scratch_operands = 1 : i64, tpu.core_type = #tpu.core_type<tc>, window_params = [{pipeline_mode = #tpu.pipeline_mode<synchronous>, transform_indices = @transform_0, window_bounds = array<i64: 2, 5, 2, 7, 32>}, {pipeline_mode = #tpu.pipeline_mode<synchronous>, transform_indices = @transform_1, window_bounds = array<i64: 5, 32, 224>}, {pipeline_mode = #tpu.pipeline_mode<synchronous>, transform_indices = @transform_2, window_bounds = array<i64: 1, 16>}, {pipeline_mode = #tpu.pipeline_mode<synchronous>, transform_indices = @transform_3, window_bounds = array<i64: 1, 16>}, {pipeline_mode = #tpu.pipeline_mode<synchronous>, transform_indices = @transform_4, window_bounds = array<i64: 5, 224, 224>}, {pipeline_mode = #tpu.pipeline_mode<synchronous>, transform_indices = @transform_5, window_bounds = array<i64: 1, 32>}, {pipeline_mode = #tpu.pipeline_mode<synchronous>, transform_indices = @transform_6, window_bounds = array<i64: 1, 32>}, {pipeline_mode = #tpu.pipeline_mode<synchronous>, transform_indices = @transform_7, window_bounds = array<i64: 224, 16>}, {pipeline_mode = #tpu.pipeline_mode<synchronous>, transform_indices = @transform_8, window_bounds = array<i64: 16, 224>}, {pipeline_mode = #tpu.pipeline_mode<synchronous>, transform_indices = @transform_9, window_bounds = array<i64: 224, 32>}, {pipeline_mode = #tpu.pipeline_mode<synchronous>, transform_indices = @transform_10, window_bounds = array<i64: 32, 224>}, {pipeline_mode = #tpu.pipeline_mode<synchronous>, transform_indices = @transform_11, window_bounds = array<i64: 32, 10>}, {pipeline_mode = #tpu.pipeline_mode<synchronous>, transform_indices = @transform_12, window_bounds = array<i64: 1, 10>}, {pipeline_mode = #tpu.pipeline_mode<synchronous>, transform_indices = @transform_13, window_bounds = array<i64: 2, 10>}]} {
    %cst = arith.constant 0.000000e+00 : f32
    %0 = vector.broadcast %cst : f32 to vector<1x224xf32>
    %cst_0 = arith.constant 0.000000e+00 : f32
    %1 = vector.broadcast %cst_0 : f32 to vector<1x224xf32>
    %cst_1 = arith.constant 0.000000e+00 : f32
    %2 = vector.broadcast %cst_1 : f32 to vector<7x224xf32>
    %c0 = arith.constant 0 : index
    %c0_2 = arith.constant 0 : index
    %c0_3 = arith.constant 0 : index
    %c0_4 = arith.constant 0 : index
    %c0_5 = arith.constant 0 : index
    %3 = vector.load %arg1[%c0, %c0_2, %c0_3, %c0_4, %c0_5] : memref<2x5x2x7x32xf32, #tpu.memory_space<vmem>>, vector<1x1x1x7x32xf32>
    %4 = vector.shape_cast %3 : vector<1x1x1x7x32xf32> to vector<7x32xf32>
    %c0_6 = arith.constant 0 : index
    %c0_7 = arith.constant 0 : index
    %c0_8 = arith.constant 0 : index
    %5 = vector.load %arg2[%c0_6, %c0_7, %c0_8] : memref<5x32x224xf32, #tpu.memory_space<vmem>>, vector<1x32x224xf32>
    %6 = vector.shape_cast %5 : vector<1x32x224xf32> to vector<32x224xf32>
    %cst_9 = arith.constant dense<0.000000e+00> : vector<7x224xf32>
    %7 = tpu.matmul %4, %6, %cst_9 {dimension_numbers = #tpu.dot_dimension_numbers<[1], [0], [0], [1], [0, 0, 1, 1], [], []>} : vector<7x32xf32>, vector<32x224xf32>, vector<7x224xf32> -> vector<7x224xf32>
    %8 = arith.addf %2, %7 : vector<7x224xf32>
    %c0_10 = arith.constant 0 : index
    %c1 = arith.constant 1 : index
    %c0_11 = arith.constant 0 : index
    %c0_12 = arith.constant 0 : index
    %c0_13 = arith.constant 0 : index
    %9 = vector.load %arg1[%c0_10, %c1, %c0_11, %c0_12, %c0_13] : memref<2x5x2x7x32xf32, #tpu.memory_space<vmem>>, vector<1x1x1x7x32xf32>
    %10 = vector.shape_cast %9 : vector<1x1x1x7x32xf32> to vector<7x32xf32>
    %c1_14 = arith.constant 1 : index
    %c0_15 = arith.constant 0 : index
    %c0_16 = arith.constant 0 : index
    %11 = vector.load %arg2[%c1_14, %c0_15, %c0_16] : memref<5x32x224xf32, #tpu.memory_space<vmem>>, vector<1x32x224xf32>
    %12 = vector.shape_cast %11 : vector<1x32x224xf32> to vector<32x224xf32>
    %cst_17 = arith.constant dense<0.000000e+00> : vector<7x224xf32>
    %13 = tpu.matmul %10, %12, %cst_17 {dimension_numbers = #tpu.dot_dimension_numbers<[1], [0], [0], [1], [0, 0, 1, 1], [], []>} : vector<7x32xf32>, vector<32x224xf32>, vector<7x224xf32> -> vector<7x224xf32>
    %14 = arith.addf %8, %13 : vector<7x224xf32>
    %c0_18 = arith.constant 0 : index
    %c2 = arith.constant 2 : index
    %c0_19 = arith.constant 0 : index
    %c0_20 = arith.constant 0 : index
    %c0_21 = arith.constant 0 : index
    %15 = vector.load %arg1[%c0_18, %c2, %c0_19, %c0_20, %c0_21] : memref<2x5x2x7x32xf32, #tpu.memory_space<vmem>>, vector<1x1x1x7x32xf32>
    %16 = vector.shape_cast %15 : vector<1x1x1x7x32xf32> to vector<7x32xf32>
    %c2_22 = arith.constant 2 : index
    %c0_23 = arith.constant 0 : index
    %c0_24 = arith.constant 0 : index
    %17 = vector.load %arg2[%c2_22, %c0_23, %c0_24] : memref<5x32x224xf32, #tpu.memory_space<vmem>>, vector<1x32x224xf32>
    %18 = vector.shape_cast %17 : vector<1x32x224xf32> to vector<32x224xf32>
    %cst_25 = arith.constant dense<0.000000e+00> : vector<7x224xf32>
    %19 = tpu.matmul %16, %18, %cst_25 {dimension_numbers = #tpu.dot_dimension_numbers<[1], [0], [0], [1], [0, 0, 1, 1], [], []>} : vector<7x32xf32>, vector<32x224xf32>, vector<7x224xf32> -> vector<7x224xf32>
    %20 = arith.addf %14, %19 : vector<7x224xf32>
    %c0_26 = arith.constant 0 : index
    %c3 = arith.constant 3 : index
    %c0_27 = arith.constant 0 : index
    %c0_28 = arith.constant 0 : index
    %c0_29 = arith.constant 0 : index
    %21 = vector.load %arg1[%c0_26, %c3, %c0_27, %c0_28, %c0_29] : memref<2x5x2x7x32xf32, #tpu.memory_space<vmem>>, vector<1x1x1x7x32xf32>
    %22 = vector.shape_cast %21 : vector<1x1x1x7x32xf32> to vector<7x32xf32>
    %c3_30 = arith.constant 3 : index
    %c0_31 = arith.constant 0 : index
    %c0_32 = arith.constant 0 : index
    %23 = vector.load %arg2[%c3_30, %c0_31, %c0_32] : memref<5x32x224xf32, #tpu.memory_space<vmem>>, vector<1x32x224xf32>
    %24 = vector.shape_cast %23 : vector<1x32x224xf32> to vector<32x224xf32>
    %cst_33 = arith.constant dense<0.000000e+00> : vector<7x224xf32>
    %25 = tpu.matmul %22, %24, %cst_33 {dimension_numbers = #tpu.dot_dimension_numbers<[1], [0], [0], [1], [0, 0, 1, 1], [], []>} : vector<7x32xf32>, vector<32x224xf32>, vector<7x224xf32> -> vector<7x224xf32>
    %26 = arith.addf %20, %25 : vector<7x224xf32>
    %c0_34 = arith.constant 0 : index
    %c4 = arith.constant 4 : index
    %c0_35 = arith.constant 0 : index
    %c0_36 = arith.constant 0 : index
    %c0_37 = arith.constant 0 : index
    %27 = vector.load %arg1[%c0_34, %c4, %c0_35, %c0_36, %c0_37] : memref<2x5x2x7x32xf32, #tpu.memory_space<vmem>>, vector<1x1x1x7x32xf32>
    %28 = vector.shape_cast %27 : vector<1x1x1x7x32xf32> to vector<7x32xf32>
    %c4_38 = arith.constant 4 : index
    %c0_39 = arith.constant 0 : index
    %c0_40 = arith.constant 0 : index
    %29 = vector.load %arg2[%c4_38, %c0_39, %c0_40] : memref<5x32x224xf32, #tpu.memory_space<vmem>>, vector<1x32x224xf32>
    %30 = vector.shape_cast %29 : vector<1x32x224xf32> to vector<32x224xf32>
    %cst_41 = arith.constant dense<0.000000e+00> : vector<7x224xf32>
    %31 = tpu.matmul %28, %30, %cst_41 {dimension_numbers = #tpu.dot_dimension_numbers<[1], [0], [0], [1], [0, 0, 1, 1], [], []>} : vector<7x32xf32>, vector<32x224xf32>, vector<7x224xf32> -> vector<7x224xf32>
    %32 = arith.addf %26, %31 : vector<7x224xf32>
    %cst_42 = arith.constant dense<0.000000e+00> : vector<224xf32>
    %33 = vector.multi_reduction <add>, %32, %cst_42 [0] : vector<7x224xf32> to vector<224xf32>
    %34 = vector.shape_cast %33 : vector<224xf32> to vector<1x224xf32>
    %35 = arith.addf %0, %34 : vector<1x224xf32>
    %36 = arith.mulf %32, %32 : vector<7x224xf32>
    %cst_43 = arith.constant dense<0.000000e+00> : vector<224xf32>
    %37 = vector.multi_reduction <add>, %36, %cst_43 [0] : vector<7x224xf32> to vector<224xf32>
    %38 = vector.shape_cast %37 : vector<224xf32> to vector<1x224xf32>
    %39 = arith.addf %1, %38 : vector<1x224xf32>
    %cst_44 = arith.constant 0.000000e+00 : f32
    %40 = vector.broadcast %cst_44 : f32 to vector<7x224xf32>
    %c0_45 = arith.constant 0 : index
    %c0_46 = arith.constant 0 : index
    %c1_47 = arith.constant 1 : index
    %c0_48 = arith.constant 0 : index
    %c0_49 = arith.constant 0 : index
    %41 = vector.load %arg1[%c0_45, %c0_46, %c1_47, %c0_48, %c0_49] : memref<2x5x2x7x32xf32, #tpu.memory_space<vmem>>, vector<1x1x1x7x32xf32>
    %42 = vector.shape_cast %41 : vector<1x1x1x7x32xf32> to vector<7x32xf32>
    %c0_50 = arith.constant 0 : index
    %c0_51 = arith.constant 0 : index
    %c0_52 = arith.constant 0 : index
    %43 = vector.load %arg2[%c0_50, %c0_51, %c0_52] : memref<5x32x224xf32, #tpu.memory_space<vmem>>, vector<1x32x224xf32>
    %44 = vector.shape_cast %43 : vector<1x32x224xf32> to vector<32x224xf32>
    %cst_53 = arith.constant dense<0.000000e+00> : vector<7x224xf32>
    %45 = tpu.matmul %42, %44, %cst_53 {dimension_numbers = #tpu.dot_dimension_numbers<[1], [0], [0], [1], [0, 0, 1, 1], [], []>} : vector<7x32xf32>, vector<32x224xf32>, vector<7x224xf32> -> vector<7x224xf32>
    %46 = arith.addf %40, %45 : vector<7x224xf32>
    %c0_54 = arith.constant 0 : index
    %c1_55 = arith.constant 1 : index
    %c1_56 = arith.constant 1 : index
    %c0_57 = arith.constant 0 : index
    %c0_58 = arith.constant 0 : index
    %47 = vector.load %arg1[%c0_54, %c1_55, %c1_56, %c0_57, %c0_58] : memref<2x5x2x7x32xf32, #tpu.memory_space<vmem>>, vector<1x1x1x7x32xf32>
    %48 = vector.shape_cast %47 : vector<1x1x1x7x32xf32> to vector<7x32xf32>
    %c1_59 = arith.constant 1 : index
    %c0_60 = arith.constant 0 : index
    %c0_61 = arith.constant 0 : index
    %49 = vector.load %arg2[%c1_59, %c0_60, %c0_61] : memref<5x32x224xf32, #tpu.memory_space<vmem>>, vector<1x32x224xf32>
    %50 = vector.shape_cast %49 : vector<1x32x224xf32> to vector<32x224xf32>
    %cst_62 = arith.constant dense<0.000000e+00> : vector<7x224xf32>
    %51 = tpu.matmul %48, %50, %cst_62 {dimension_numbers = #tpu.dot_dimension_numbers<[1], [0], [0], [1], [0, 0, 1, 1], [], []>} : vector<7x32xf32>, vector<32x224xf32>, vector<7x224xf32> -> vector<7x224xf32>
    %52 = arith.addf %46, %51 : vector<7x224xf32>
    %c0_63 = arith.constant 0 : index
    %c2_64 = arith.constant 2 : index
    %c1_65 = arith.constant 1 : index
    %c0_66 = arith.constant 0 : index
    %c0_67 = arith.constant 0 : index
    %53 = vector.load %arg1[%c0_63, %c2_64, %c1_65, %c0_66, %c0_67] : memref<2x5x2x7x32xf32, #tpu.memory_space<vmem>>, vector<1x1x1x7x32xf32>
    %54 = vector.shape_cast %53 : vector<1x1x1x7x32xf32> to vector<7x32xf32>
    %c2_68 = arith.constant 2 : index
    %c0_69 = arith.constant 0 : index
    %c0_70 = arith.constant 0 : index
    %55 = vector.load %arg2[%c2_68, %c0_69, %c0_70] : memref<5x32x224xf32, #tpu.memory_space<vmem>>, vector<1x32x224xf32>
    %56 = vector.shape_cast %55 : vector<1x32x224xf32> to vector<32x224xf32>
    %cst_71 = arith.constant dense<0.000000e+00> : vector<7x224xf32>
    %57 = tpu.matmul %54, %56, %cst_71 {dimension_numbers = #tpu.dot_dimension_numbers<[1], [0], [0], [1], [0, 0, 1, 1], [], []>} : vector<7x32xf32>, vector<32x224xf32>, vector<7x224xf32> -> vector<7x224xf32>
    %58 = arith.addf %52, %57 : vector<7x224xf32>
    %c0_72 = arith.constant 0 : index
    %c3_73 = arith.constant 3 : index
    %c1_74 = arith.constant 1 : index
    %c0_75 = arith.constant 0 : index
    %c0_76 = arith.constant 0 : index
    %59 = vector.load %arg1[%c0_72, %c3_73, %c1_74, %c0_75, %c0_76] : memref<2x5x2x7x32xf32, #tpu.memory_space<vmem>>, vector<1x1x1x7x32xf32>
    %60 = vector.shape_cast %59 : vector<1x1x1x7x32xf32> to vector<7x32xf32>
    %c3_77 = arith.constant 3 : index
    %c0_78 = arith.constant 0 : index
    %c0_79 = arith.constant 0 : index
    %61 = vector.load %arg2[%c3_77, %c0_78, %c0_79] : memref<5x32x224xf32, #tpu.memory_space<vmem>>, vector<1x32x224xf32>
    %62 = vector.shape_cast %61 : vector<1x32x224xf32> to vector<32x224xf32>
    %cst_80 = arith.constant dense<0.000000e+00> : vector<7x224xf32>
    %63 = tpu.matmul %60, %62, %cst_80 {dimension_numbers = #tpu.dot_dimension_numbers<[1], [0], [0], [1], [0, 0, 1, 1], [], []>} : vector<7x32xf32>, vector<32x224xf32>, vector<7x224xf32> -> vector<7x224xf32>
    %64 = arith.addf %58, %63 : vector<7x224xf32>
    %c0_81 = arith.constant 0 : index
    %c4_82 = arith.constant 4 : index
    %c1_83 = arith.constant 1 : index
    %c0_84 = arith.constant 0 : index
    %c0_85 = arith.constant 0 : index
    %65 = vector.load %arg1[%c0_81, %c4_82, %c1_83, %c0_84, %c0_85] : memref<2x5x2x7x32xf32, #tpu.memory_space<vmem>>, vector<1x1x1x7x32xf32>
    %66 = vector.shape_cast %65 : vector<1x1x1x7x32xf32> to vector<7x32xf32>
    %c4_86 = arith.constant 4 : index
    %c0_87 = arith.constant 0 : index
    %c0_88 = arith.constant 0 : index
    %67 = vector.load %arg2[%c4_86, %c0_87, %c0_88] : memref<5x32x224xf32, #tpu.memory_space<vmem>>, vector<1x32x224xf32>
    %68 = vector.shape_cast %67 : vector<1x32x224xf32> to vector<32x224xf32>
    %cst_89 = arith.constant dense<0.000000e+00> : vector<7x224xf32>
    %69 = tpu.matmul %66, %68, %cst_89 {dimension_numbers = #tpu.dot_dimension_numbers<[1], [0], [0], [1], [0, 0, 1, 1], [], []>} : vector<7x32xf32>, vector<32x224xf32>, vector<7x224xf32> -> vector<7x224xf32>
    %70 = arith.addf %64, %69 : vector<7x224xf32>
    %cst_90 = arith.constant dense<0.000000e+00> : vector<224xf32>
    %71 = vector.multi_reduction <add>, %70, %cst_90 [0] : vector<7x224xf32> to vector<224xf32>
    %72 = vector.shape_cast %71 : vector<224xf32> to vector<1x224xf32>
    %73 = arith.addf %35, %72 : vector<1x224xf32>
    %74 = arith.mulf %70, %70 : vector<7x224xf32>
    %cst_91 = arith.constant dense<0.000000e+00> : vector<224xf32>
    %75 = vector.multi_reduction <add>, %74, %cst_91 [0] : vector<7x224xf32> to vector<224xf32>
    %76 = vector.shape_cast %75 : vector<224xf32> to vector<1x224xf32>
    %77 = arith.addf %39, %76 : vector<1x224xf32>
    %cst_92 = arith.constant 0.000000e+00 : f32
    %78 = vector.broadcast %cst_92 : f32 to vector<7x224xf32>
    %c1_93 = arith.constant 1 : index
    %c0_94 = arith.constant 0 : index
    %c0_95 = arith.constant 0 : index
    %c0_96 = arith.constant 0 : index
    %c0_97 = arith.constant 0 : index
    %79 = vector.load %arg1[%c1_93, %c0_94, %c0_95, %c0_96, %c0_97] : memref<2x5x2x7x32xf32, #tpu.memory_space<vmem>>, vector<1x1x1x7x32xf32>
    %80 = vector.shape_cast %79 : vector<1x1x1x7x32xf32> to vector<7x32xf32>
    %c0_98 = arith.constant 0 : index
    %c0_99 = arith.constant 0 : index
    %c0_100 = arith.constant 0 : index
    %81 = vector.load %arg2[%c0_98, %c0_99, %c0_100] : memref<5x32x224xf32, #tpu.memory_space<vmem>>, vector<1x32x224xf32>
    %82 = vector.shape_cast %81 : vector<1x32x224xf32> to vector<32x224xf32>
    %cst_101 = arith.constant dense<0.000000e+00> : vector<7x224xf32>
    %83 = tpu.matmul %80, %82, %cst_101 {dimension_numbers = #tpu.dot_dimension_numbers<[1], [0], [0], [1], [0, 0, 1, 1], [], []>} : vector<7x32xf32>, vector<32x224xf32>, vector<7x224xf32> -> vector<7x224xf32>
    %84 = arith.addf %78, %83 : vector<7x224xf32>
    %c1_102 = arith.constant 1 : index
    %c1_103 = arith.constant 1 : index
    %c0_104 = arith.constant 0 : index
    %c0_105 = arith.constant 0 : index
    %c0_106 = arith.constant 0 : index
    %85 = vector.load %arg1[%c1_102, %c1_103, %c0_104, %c0_105, %c0_106] : memref<2x5x2x7x32xf32, #tpu.memory_space<vmem>>, vector<1x1x1x7x32xf32>
    %86 = vector.shape_cast %85 : vector<1x1x1x7x32xf32> to vector<7x32xf32>
    %c1_107 = arith.constant 1 : index
    %c0_108 = arith.constant 0 : index
    %c0_109 = arith.constant 0 : index
    %87 = vector.load %arg2[%c1_107, %c0_108, %c0_109] : memref<5x32x224xf32, #tpu.memory_space<vmem>>, vector<1x32x224xf32>
    %88 = vector.shape_cast %87 : vector<1x32x224xf32> to vector<32x224xf32>
    %cst_110 = arith.constant dense<0.000000e+00> : vector<7x224xf32>
    %89 = tpu.matmul %86, %88, %cst_110 {dimension_numbers = #tpu.dot_dimension_numbers<[1], [0], [0], [1], [0, 0, 1, 1], [], []>} : vector<7x32xf32>, vector<32x224xf32>, vector<7x224xf32> -> vector<7x224xf32>
    %90 = arith.addf %84, %89 : vector<7x224xf32>
    %c1_111 = arith.constant 1 : index
    %c2_112 = arith.constant 2 : index
    %c0_113 = arith.constant 0 : index
    %c0_114 = arith.constant 0 : index
    %c0_115 = arith.constant 0 : index
    %91 = vector.load %arg1[%c1_111, %c2_112, %c0_113, %c0_114, %c0_115] : memref<2x5x2x7x32xf32, #tpu.memory_space<vmem>>, vector<1x1x1x7x32xf32>
    %92 = vector.shape_cast %91 : vector<1x1x1x7x32xf32> to vector<7x32xf32>
    %c2_116 = arith.constant 2 : index
    %c0_117 = arith.constant 0 : index
    %c0_118 = arith.constant 0 : index
    %93 = vector.load %arg2[%c2_116, %c0_117, %c0_118] : memref<5x32x224xf32, #tpu.memory_space<vmem>>, vector<1x32x224xf32>
    %94 = vector.shape_cast %93 : vector<1x32x224xf32> to vector<32x224xf32>
    %cst_119 = arith.constant dense<0.000000e+00> : vector<7x224xf32>
    %95 = tpu.matmul %92, %94, %cst_119 {dimension_numbers = #tpu.dot_dimension_numbers<[1], [0], [0], [1], [0, 0, 1, 1], [], []>} : vector<7x32xf32>, vector<32x224xf32>, vector<7x224xf32> -> vector<7x224xf32>
    %96 = arith.addf %90, %95 : vector<7x224xf32>
    %c1_120 = arith.constant 1 : index
    %c3_121 = arith.constant 3 : index
    %c0_122 = arith.constant 0 : index
    %c0_123 = arith.constant 0 : index
    %c0_124 = arith.constant 0 : index
    %97 = vector.load %arg1[%c1_120, %c3_121, %c0_122, %c0_123, %c0_124] : memref<2x5x2x7x32xf32, #tpu.memory_space<vmem>>, vector<1x1x1x7x32xf32>
    %98 = vector.shape_cast %97 : vector<1x1x1x7x32xf32> to vector<7x32xf32>
    %c3_125 = arith.constant 3 : index
    %c0_126 = arith.constant 0 : index
    %c0_127 = arith.constant 0 : index
    %99 = vector.load %arg2[%c3_125, %c0_126, %c0_127] : memref<5x32x224xf32, #tpu.memory_space<vmem>>, vector<1x32x224xf32>
    %100 = vector.shape_cast %99 : vector<1x32x224xf32> to vector<32x224xf32>
    %cst_128 = arith.constant dense<0.000000e+00> : vector<7x224xf32>
    %101 = tpu.matmul %98, %100, %cst_128 {dimension_numbers = #tpu.dot_dimension_numbers<[1], [0], [0], [1], [0, 0, 1, 1], [], []>} : vector<7x32xf32>, vector<32x224xf32>, vector<7x224xf32> -> vector<7x224xf32>
    %102 = arith.addf %96, %101 : vector<7x224xf32>
    %c1_129 = arith.constant 1 : index
    %c4_130 = arith.constant 4 : index
    %c0_131 = arith.constant 0 : index
    %c0_132 = arith.constant 0 : index
    %c0_133 = arith.constant 0 : index
    %103 = vector.load %arg1[%c1_129, %c4_130, %c0_131, %c0_132, %c0_133] : memref<2x5x2x7x32xf32, #tpu.memory_space<vmem>>, vector<1x1x1x7x32xf32>
    %104 = vector.shape_cast %103 : vector<1x1x1x7x32xf32> to vector<7x32xf32>
    %c4_134 = arith.constant 4 : index
    %c0_135 = arith.constant 0 : index
    %c0_136 = arith.constant 0 : index
    %105 = vector.load %arg2[%c4_134, %c0_135, %c0_136] : memref<5x32x224xf32, #tpu.memory_space<vmem>>, vector<1x32x224xf32>
    %106 = vector.shape_cast %105 : vector<1x32x224xf32> to vector<32x224xf32>
    %cst_137 = arith.constant dense<0.000000e+00> : vector<7x224xf32>
    %107 = tpu.matmul %104, %106, %cst_137 {dimension_numbers = #tpu.dot_dimension_numbers<[1], [0], [0], [1], [0, 0, 1, 1], [], []>} : vector<7x32xf32>, vector<32x224xf32>, vector<7x224xf32> -> vector<7x224xf32>
    %108 = arith.addf %102, %107 : vector<7x224xf32>
    %cst_138 = arith.constant dense<0.000000e+00> : vector<224xf32>
    %109 = vector.multi_reduction <add>, %108, %cst_138 [0] : vector<7x224xf32> to vector<224xf32>
    %110 = vector.shape_cast %109 : vector<224xf32> to vector<1x224xf32>
    %111 = arith.addf %73, %110 : vector<1x224xf32>
    %112 = arith.mulf %108, %108 : vector<7x224xf32>
    %cst_139 = arith.constant dense<0.000000e+00> : vector<224xf32>
    %113 = vector.multi_reduction <add>, %112, %cst_139 [0] : vector<7x224xf32> to vector<224xf32>
    %114 = vector.shape_cast %113 : vector<224xf32> to vector<1x224xf32>
    %115 = arith.addf %77, %114 : vector<1x224xf32>
    %cst_140 = arith.constant 0.000000e+00 : f32
    %116 = vector.broadcast %cst_140 : f32 to vector<7x224xf32>
    %c1_141 = arith.constant 1 : index
    %c0_142 = arith.constant 0 : index
    %c1_143 = arith.constant 1 : index
    %c0_144 = arith.constant 0 : index
    %c0_145 = arith.constant 0 : index
    %117 = vector.load %arg1[%c1_141, %c0_142, %c1_143, %c0_144, %c0_145] : memref<2x5x2x7x32xf32, #tpu.memory_space<vmem>>, vector<1x1x1x7x32xf32>
    %118 = vector.shape_cast %117 : vector<1x1x1x7x32xf32> to vector<7x32xf32>
    %c0_146 = arith.constant 0 : index
    %c0_147 = arith.constant 0 : index
    %c0_148 = arith.constant 0 : index
    %119 = vector.load %arg2[%c0_146, %c0_147, %c0_148] : memref<5x32x224xf32, #tpu.memory_space<vmem>>, vector<1x32x224xf32>
    %120 = vector.shape_cast %119 : vector<1x32x224xf32> to vector<32x224xf32>
    %cst_149 = arith.constant dense<0.000000e+00> : vector<7x224xf32>
    %121 = tpu.matmul %118, %120, %cst_149 {dimension_numbers = #tpu.dot_dimension_numbers<[1], [0], [0], [1], [0, 0, 1, 1], [], []>} : vector<7x32xf32>, vector<32x224xf32>, vector<7x224xf32> -> vector<7x224xf32>
    %122 = arith.addf %116, %121 : vector<7x224xf32>
    %c1_150 = arith.constant 1 : index
    %c1_151 = arith.constant 1 : index
    %c1_152 = arith.constant 1 : index
    %c0_153 = arith.constant 0 : index
    %c0_154 = arith.constant 0 : index
    %123 = vector.load %arg1[%c1_150, %c1_151, %c1_152, %c0_153, %c0_154] : memref<2x5x2x7x32xf32, #tpu.memory_space<vmem>>, vector<1x1x1x7x32xf32>
    %124 = vector.shape_cast %123 : vector<1x1x1x7x32xf32> to vector<7x32xf32>
    %c1_155 = arith.constant 1 : index
    %c0_156 = arith.constant 0 : index
    %c0_157 = arith.constant 0 : index
    %125 = vector.load %arg2[%c1_155, %c0_156, %c0_157] : memref<5x32x224xf32, #tpu.memory_space<vmem>>, vector<1x32x224xf32>
    %126 = vector.shape_cast %125 : vector<1x32x224xf32> to vector<32x224xf32>
    %cst_158 = arith.constant dense<0.000000e+00> : vector<7x224xf32>
    %127 = tpu.matmul %124, %126, %cst_158 {dimension_numbers = #tpu.dot_dimension_numbers<[1], [0], [0], [1], [0, 0, 1, 1], [], []>} : vector<7x32xf32>, vector<32x224xf32>, vector<7x224xf32> -> vector<7x224xf32>
    %128 = arith.addf %122, %127 : vector<7x224xf32>
    %c1_159 = arith.constant 1 : index
    %c2_160 = arith.constant 2 : index
    %c1_161 = arith.constant 1 : index
    %c0_162 = arith.constant 0 : index
    %c0_163 = arith.constant 0 : index
    %129 = vector.load %arg1[%c1_159, %c2_160, %c1_161, %c0_162, %c0_163] : memref<2x5x2x7x32xf32, #tpu.memory_space<vmem>>, vector<1x1x1x7x32xf32>
    %130 = vector.shape_cast %129 : vector<1x1x1x7x32xf32> to vector<7x32xf32>
    %c2_164 = arith.constant 2 : index
    %c0_165 = arith.constant 0 : index
    %c0_166 = arith.constant 0 : index
    %131 = vector.load %arg2[%c2_164, %c0_165, %c0_166] : memref<5x32x224xf32, #tpu.memory_space<vmem>>, vector<1x32x224xf32>
    %132 = vector.shape_cast %131 : vector<1x32x224xf32> to vector<32x224xf32>
    %cst_167 = arith.constant dense<0.000000e+00> : vector<7x224xf32>
    %133 = tpu.matmul %130, %132, %cst_167 {dimension_numbers = #tpu.dot_dimension_numbers<[1], [0], [0], [1], [0, 0, 1, 1], [], []>} : vector<7x32xf32>, vector<32x224xf32>, vector<7x224xf32> -> vector<7x224xf32>
    %134 = arith.addf %128, %133 : vector<7x224xf32>
    %c1_168 = arith.constant 1 : index
    %c3_169 = arith.constant 3 : index
    %c1_170 = arith.constant 1 : index
    %c0_171 = arith.constant 0 : index
    %c0_172 = arith.constant 0 : index
    %135 = vector.load %arg1[%c1_168, %c3_169, %c1_170, %c0_171, %c0_172] : memref<2x5x2x7x32xf32, #tpu.memory_space<vmem>>, vector<1x1x1x7x32xf32>
    %136 = vector.shape_cast %135 : vector<1x1x1x7x32xf32> to vector<7x32xf32>
    %c3_173 = arith.constant 3 : index
    %c0_174 = arith.constant 0 : index
    %c0_175 = arith.constant 0 : index
    %137 = vector.load %arg2[%c3_173, %c0_174, %c0_175] : memref<5x32x224xf32, #tpu.memory_space<vmem>>, vector<1x32x224xf32>
    %138 = vector.shape_cast %137 : vector<1x32x224xf32> to vector<32x224xf32>
    %cst_176 = arith.constant dense<0.000000e+00> : vector<7x224xf32>
    %139 = tpu.matmul %136, %138, %cst_176 {dimension_numbers = #tpu.dot_dimension_numbers<[1], [0], [0], [1], [0, 0, 1, 1], [], []>} : vector<7x32xf32>, vector<32x224xf32>, vector<7x224xf32> -> vector<7x224xf32>
    %140 = arith.addf %134, %139 : vector<7x224xf32>
    %c1_177 = arith.constant 1 : index
    %c4_178 = arith.constant 4 : index
    %c1_179 = arith.constant 1 : index
    %c0_180 = arith.constant 0 : index
    %c0_181 = arith.constant 0 : index
    %141 = vector.load %arg1[%c1_177, %c4_178, %c1_179, %c0_180, %c0_181] : memref<2x5x2x7x32xf32, #tpu.memory_space<vmem>>, vector<1x1x1x7x32xf32>
    %142 = vector.shape_cast %141 : vector<1x1x1x7x32xf32> to vector<7x32xf32>
    %c4_182 = arith.constant 4 : index
    %c0_183 = arith.constant 0 : index
    %c0_184 = arith.constant 0 : index
    %143 = vector.load %arg2[%c4_182, %c0_183, %c0_184] : memref<5x32x224xf32, #tpu.memory_space<vmem>>, vector<1x32x224xf32>
    %144 = vector.shape_cast %143 : vector<1x32x224xf32> to vector<32x224xf32>
    %cst_185 = arith.constant dense<0.000000e+00> : vector<7x224xf32>
    %145 = tpu.matmul %142, %144, %cst_185 {dimension_numbers = #tpu.dot_dimension_numbers<[1], [0], [0], [1], [0, 0, 1, 1], [], []>} : vector<7x32xf32>, vector<32x224xf32>, vector<7x224xf32> -> vector<7x224xf32>
    %146 = arith.addf %140, %145 : vector<7x224xf32>
    %cst_186 = arith.constant dense<0.000000e+00> : vector<224xf32>
    %147 = vector.multi_reduction <add>, %146, %cst_186 [0] : vector<7x224xf32> to vector<224xf32>
    %148 = vector.shape_cast %147 : vector<224xf32> to vector<1x224xf32>
    %149 = arith.addf %111, %148 : vector<1x224xf32>
    %150 = arith.mulf %146, %146 : vector<7x224xf32>
    %cst_187 = arith.constant dense<0.000000e+00> : vector<224xf32>
    %151 = vector.multi_reduction <add>, %150, %cst_187 [0] : vector<7x224xf32> to vector<224xf32>
    %152 = vector.shape_cast %151 : vector<224xf32> to vector<1x224xf32>
    %153 = arith.addf %115, %152 : vector<1x224xf32>
    %c0_188 = arith.constant 0 : index
    %c0_189 = arith.constant 0 : index
    %154 = vector.load %arg8[%c0_188, %c0_189] : memref<224x16xf32, #tpu.memory_space<vmem>>, vector<224x16xf32>
    %cst_190 = arith.constant dense<0.000000e+00> : vector<1x16xf32>
    %155 = tpu.matmul %149, %154, %cst_190 {dimension_numbers = #tpu.dot_dimension_numbers<[1], [0], [0], [1], [0, 0, 1, 1], [], []>} : vector<1x224xf32>, vector<224x16xf32>, vector<1x16xf32> -> vector<1x16xf32>
    %c0_191 = arith.constant 0 : index
    %c0_192 = arith.constant 0 : index
    %156 = vector.load %arg8[%c0_191, %c0_192] : memref<224x16xf32, #tpu.memory_space<vmem>>, vector<224x16xf32>
    %cst_193 = arith.constant dense<0.000000e+00> : vector<1x16xf32>
    %157 = tpu.matmul %153, %156, %cst_193 {dimension_numbers = #tpu.dot_dimension_numbers<[1], [0], [0], [1], [0, 0, 1, 1], [], []>} : vector<1x224xf32>, vector<224x16xf32>, vector<1x16xf32> -> vector<1x16xf32>
    %cst_194 = arith.constant 3.920000e+02 : f32
    %158 = vector.broadcast %cst_194 : f32 to vector<1x16xf32>
    %159 = arith.divf %155, %158 : vector<1x16xf32>
    %cst_195 = arith.constant 3.920000e+02 : f32
    %160 = vector.broadcast %cst_195 : f32 to vector<1x16xf32>
    %161 = arith.divf %157, %160 : vector<1x16xf32>
    %162 = arith.mulf %159, %159 : vector<1x16xf32>
    %163 = arith.subf %161, %162 : vector<1x16xf32>
    %cst_196 = arith.constant 0.000000e+00 : f32
    %164 = vector.broadcast %cst_196 : f32 to vector<1x16xf32>
    %165 = arith.maximumf %163, %164 : vector<1x16xf32>
    %c0_197 = arith.constant 0 : index
    %c0_198 = arith.constant 0 : index
    %166 = vector.load %arg3[%c0_197, %c0_198] : memref<1x16xf32, #tpu.memory_space<vmem>>, vector<1x16xf32>
    %cst_199 = arith.constant 9.99999974E-6 : f32
    %167 = vector.broadcast %cst_199 : f32 to vector<1x16xf32>
    %168 = arith.addf %165, %167 : vector<1x16xf32>
    %169 = math.rsqrt %168 : vector<1x16xf32>
    %170 = arith.mulf %166, %169 : vector<1x16xf32>
    %c0_200 = arith.constant 0 : index
    %c0_201 = arith.constant 0 : index
    %171 = vector.load %arg4[%c0_200, %c0_201] : memref<1x16xf32, #tpu.memory_space<vmem>>, vector<1x16xf32>
    %172 = arith.mulf %159, %170 : vector<1x16xf32>
    %173 = arith.subf %171, %172 : vector<1x16xf32>
    %c0_202 = arith.constant 0 : index
    %c0_203 = arith.constant 0 : index
    %174 = vector.load %arg9[%c0_202, %c0_203] : memref<16x224xf32, #tpu.memory_space<vmem>>, vector<16x224xf32>
    %cst_204 = arith.constant dense<0.000000e+00> : vector<1x224xf32>
    %175 = tpu.matmul %170, %174, %cst_204 {dimension_numbers = #tpu.dot_dimension_numbers<[1], [0], [0], [1], [0, 0, 1, 1], [], []>} : vector<1x16xf32>, vector<16x224xf32>, vector<1x224xf32> -> vector<1x224xf32>
    %c0_205 = arith.constant 0 : index
    %c0_206 = arith.constant 0 : index
    %176 = vector.load %arg9[%c0_205, %c0_206] : memref<16x224xf32, #tpu.memory_space<vmem>>, vector<16x224xf32>
    %cst_207 = arith.constant dense<0.000000e+00> : vector<1x224xf32>
    %177 = tpu.matmul %173, %176, %cst_207 {dimension_numbers = #tpu.dot_dimension_numbers<[1], [0], [0], [1], [0, 0, 1, 1], [], []>} : vector<1x16xf32>, vector<16x224xf32>, vector<1x224xf32> -> vector<1x224xf32>
    %cst_208 = arith.constant 0.000000e+00 : f32
    %178 = vector.broadcast %cst_208 : f32 to vector<2x2x9x224xf32>
    %c0_209 = arith.constant 0 : index
    %c0_210 = arith.constant 0 : index
    %c0_211 = arith.constant 0 : index
    %c0_212 = arith.constant 0 : index
    %179 = vector.load %arg15[%c0_209, %c0_210, %c0_211, %c0_212] : memref<2x2x9x224xf32, #tpu.memory_space<vmem>>, vector<2x2x9x224xf32>
    tpu.vector_store %arg15[%c0_209, %c0_210, %c0_211, %c0_212], %178 {strides = array<i32>} : memref<2x2x9x224xf32, #tpu.memory_space<vmem>>, vector<2x2x9x224xf32>,
    %180 = vector.broadcast %175 : vector<1x224xf32> to vector<7x224xf32>
    %181 = arith.mulf %32, %180 : vector<7x224xf32>
    %182 = vector.broadcast %177 : vector<1x224xf32> to vector<7x224xf32>
    %183 = arith.addf %181, %182 : vector<7x224xf32>
    %cst_213 = arith.constant 0.000000e+00 : f32
    %184 = vector.broadcast %cst_213 : f32 to vector<7x224xf32>
    %185 = arith.maximumf %183, %184 : vector<7x224xf32>
    %c0_214 = arith.constant 0 : index
    %c0_215 = arith.constant 0 : index
    %c1_216 = arith.constant 1 : index
    %c0_217 = arith.constant 0 : index
    %186 = vector.load %arg15[%c0_214, %c0_215, %c1_216, %c0_217] : memref<2x2x9x224xf32, #tpu.memory_space<vmem>>, vector<1x1x7x224xf32>
    %187 = vector.shape_cast %186 : vector<1x1x7x224xf32> to vector<7x224xf32>
    %188 = vector.shape_cast %185 : vector<7x224xf32> to vector<1x1x7x224xf32>
    tpu.vector_store %arg15[%c0_214, %c0_215, %c1_216, %c0_217], %188 {strides = array<i32>} : memref<2x2x9x224xf32, #tpu.memory_space<vmem>>, vector<1x1x7x224xf32>,
    %189 = vector.broadcast %175 : vector<1x224xf32> to vector<7x224xf32>
    %190 = arith.mulf %70, %189 : vector<7x224xf32>
    %191 = vector.broadcast %177 : vector<1x224xf32> to vector<7x224xf32>
    %192 = arith.addf %190, %191 : vector<7x224xf32>
    %cst_218 = arith.constant 0.000000e+00 : f32
    %193 = vector.broadcast %cst_218 : f32 to vector<7x224xf32>
    %194 = arith.maximumf %192, %193 : vector<7x224xf32>
    %c0_219 = arith.constant 0 : index
    %c1_220 = arith.constant 1 : index
    %c1_221 = arith.constant 1 : index
    %c0_222 = arith.constant 0 : index
    %195 = vector.load %arg15[%c0_219, %c1_220, %c1_221, %c0_222] : memref<2x2x9x224xf32, #tpu.memory_space<vmem>>, vector<1x1x7x224xf32>
    %196 = vector.shape_cast %195 : vector<1x1x7x224xf32> to vector<7x224xf32>
    %197 = vector.shape_cast %194 : vector<7x224xf32> to vector<1x1x7x224xf32>
    tpu.vector_store %arg15[%c0_219, %c1_220, %c1_221, %c0_222], %197 {strides = array<i32>} : memref<2x2x9x224xf32, #tpu.memory_space<vmem>>, vector<1x1x7x224xf32>,
    %198 = vector.broadcast %175 : vector<1x224xf32> to vector<7x224xf32>
    %199 = arith.mulf %108, %198 : vector<7x224xf32>
    %200 = vector.broadcast %177 : vector<1x224xf32> to vector<7x224xf32>
    %201 = arith.addf %199, %200 : vector<7x224xf32>
    %cst_223 = arith.constant 0.000000e+00 : f32
    %202 = vector.broadcast %cst_223 : f32 to vector<7x224xf32>
    %203 = arith.maximumf %201, %202 : vector<7x224xf32>
    %c1_224 = arith.constant 1 : index
    %c0_225 = arith.constant 0 : index
    %c1_226 = arith.constant 1 : index
    %c0_227 = arith.constant 0 : index
    %204 = vector.load %arg15[%c1_224, %c0_225, %c1_226, %c0_227] : memref<2x2x9x224xf32, #tpu.memory_space<vmem>>, vector<1x1x7x224xf32>
    %205 = vector.shape_cast %204 : vector<1x1x7x224xf32> to vector<7x224xf32>
    %206 = vector.shape_cast %203 : vector<7x224xf32> to vector<1x1x7x224xf32>
    tpu.vector_store %arg15[%c1_224, %c0_225, %c1_226, %c0_227], %206 {strides = array<i32>} : memref<2x2x9x224xf32, #tpu.memory_space<vmem>>, vector<1x1x7x224xf32>,
    %207 = vector.broadcast %175 : vector<1x224xf32> to vector<7x224xf32>
    %208 = arith.mulf %146, %207 : vector<7x224xf32>
    %209 = vector.broadcast %177 : vector<1x224xf32> to vector<7x224xf32>
    %210 = arith.addf %208, %209 : vector<7x224xf32>
    %cst_228 = arith.constant 0.000000e+00 : f32
    %211 = vector.broadcast %cst_228 : f32 to vector<7x224xf32>
    %212 = arith.maximumf %210, %211 : vector<7x224xf32>
    %c1_229 = arith.constant 1 : index
    %c1_230 = arith.constant 1 : index
    %c1_231 = arith.constant 1 : index
    %c0_232 = arith.constant 0 : index
    %213 = vector.load %arg15[%c1_229, %c1_230, %c1_231, %c0_232] : memref<2x2x9x224xf32, #tpu.memory_space<vmem>>, vector<1x1x7x224xf32>
    %214 = vector.shape_cast %213 : vector<1x1x7x224xf32> to vector<7x224xf32>
    %215 = vector.shape_cast %212 : vector<7x224xf32> to vector<1x1x7x224xf32>
    tpu.vector_store %arg15[%c1_229, %c1_230, %c1_231, %c0_232], %215 {strides = array<i32>} : memref<2x2x9x224xf32, #tpu.memory_space<vmem>>, vector<1x1x7x224xf32>,
    %cst_233 = arith.constant 0.000000e+00 : f32
    %216 = vector.broadcast %cst_233 : f32 to vector<1x224xf32>
    %cst_234 = arith.constant 0.000000e+00 : f32
    %217 = vector.broadcast %cst_234 : f32 to vector<1x224xf32>
    %cst_235 = arith.constant 0.000000e+00 : f32
    %218 = vector.broadcast %cst_235 : f32 to vector<7x224xf32>
    %c0_236 = arith.constant 0 : index
    %c0_237 = arith.constant 0 : index
    %c0_238 = arith.constant 0 : index
    %c0_239 = arith.constant 0 : index
    %219 = vector.load %arg15[%c0_236, %c0_237, %c0_238, %c0_239] : memref<2x2x9x224xf32, #tpu.memory_space<vmem>>, vector<1x1x7x224xf32>
    %220 = vector.shape_cast %219 : vector<1x1x7x224xf32> to vector<7x224xf32>
    %c0_240 = arith.constant 0 : index
    %c0_241 = arith.constant 0 : index
    %c0_242 = arith.constant 0 : index
    %221 = vector.load %arg5[%c0_240, %c0_241, %c0_242] : memref<5x224x224xf32, #tpu.memory_space<vmem>>, vector<1x224x224xf32>
    %222 = vector.shape_cast %221 : vector<1x224x224xf32> to vector<224x224xf32>
    %cst_243 = arith.constant dense<0.000000e+00> : vector<7x224xf32>
    %223 = tpu.matmul %220, %222, %cst_243 {dimension_numbers = #tpu.dot_dimension_numbers<[1], [0], [0], [1], [0, 0, 1, 1], [], []>} : vector<7x224xf32>, vector<224x224xf32>, vector<7x224xf32> -> vector<7x224xf32>
    %224 = arith.addf %218, %223 : vector<7x224xf32>
    %c1_244 = arith.constant 1 : index
    %c0_245 = arith.constant 0 : index
    %c0_246 = arith.constant 0 : index
    %c0_247 = arith.constant 0 : index
    %225 = vector.load %arg15[%c1_244, %c0_245, %c0_246, %c0_247] : memref<2x2x9x224xf32, #tpu.memory_space<vmem>>, vector<1x1x7x224xf32>
    %226 = vector.shape_cast %225 : vector<1x1x7x224xf32> to vector<7x224xf32>
    %c1_248 = arith.constant 1 : index
    %c0_249 = arith.constant 0 : index
    %c0_250 = arith.constant 0 : index
    %227 = vector.load %arg5[%c1_248, %c0_249, %c0_250] : memref<5x224x224xf32, #tpu.memory_space<vmem>>, vector<1x224x224xf32>
    %228 = vector.shape_cast %227 : vector<1x224x224xf32> to vector<224x224xf32>
    %cst_251 = arith.constant dense<0.000000e+00> : vector<7x224xf32>
    %229 = tpu.matmul %226, %228, %cst_251 {dimension_numbers = #tpu.dot_dimension_numbers<[1], [0], [0], [1], [0, 0, 1, 1], [], []>} : vector<7x224xf32>, vector<224x224xf32>, vector<7x224xf32> -> vector<7x224xf32>
    %230 = arith.addf %224, %229 : vector<7x224xf32>
    %c0_252 = arith.constant 0 : index
    %c0_253 = arith.constant 0 : index
    %c1_254 = arith.constant 1 : index
    %c0_255 = arith.constant 0 : index
    %231 = vector.load %arg15[%c0_252, %c0_253, %c1_254, %c0_255] : memref<2x2x9x224xf32, #tpu.memory_space<vmem>>, vector<1x1x7x224xf32>
    %232 = vector.shape_cast %231 : vector<1x1x7x224xf32> to vector<7x224xf32>
    %c2_256 = arith.constant 2 : index
    %c0_257 = arith.constant 0 : index
    %c0_258 = arith.constant 0 : index
    %233 = vector.load %arg5[%c2_256, %c0_257, %c0_258] : memref<5x224x224xf32, #tpu.memory_space<vmem>>, vector<1x224x224xf32>
    %234 = vector.shape_cast %233 : vector<1x224x224xf32> to vector<224x224xf32>
    %cst_259 = arith.constant dense<0.000000e+00> : vector<7x224xf32>
    %235 = tpu.matmul %232, %234, %cst_259 {dimension_numbers = #tpu.dot_dimension_numbers<[1], [0], [0], [1], [0, 0, 1, 1], [], []>} : vector<7x224xf32>, vector<224x224xf32>, vector<7x224xf32> -> vector<7x224xf32>
    %236 = arith.addf %230, %235 : vector<7x224xf32>
    %c1_260 = arith.constant 1 : index
    %c0_261 = arith.constant 0 : index
    %c1_262 = arith.constant 1 : index
    %c0_263 = arith.constant 0 : index
    %237 = vector.load %arg15[%c1_260, %c0_261, %c1_262, %c0_263] : memref<2x2x9x224xf32, #tpu.memory_space<vmem>>, vector<1x1x7x224xf32>
    %238 = vector.shape_cast %237 : vector<1x1x7x224xf32> to vector<7x224xf32>
    %c3_264 = arith.constant 3 : index
    %c0_265 = arith.constant 0 : index
    %c0_266 = arith.constant 0 : index
    %239 = vector.load %arg5[%c3_264, %c0_265, %c0_266] : memref<5x224x224xf32, #tpu.memory_space<vmem>>, vector<1x224x224xf32>
    %240 = vector.shape_cast %239 : vector<1x224x224xf32> to vector<224x224xf32>
    %cst_267 = arith.constant dense<0.000000e+00> : vector<7x224xf32>
    %241 = tpu.matmul %238, %240, %cst_267 {dimension_numbers = #tpu.dot_dimension_numbers<[1], [0], [0], [1], [0, 0, 1, 1], [], []>} : vector<7x224xf32>, vector<224x224xf32>, vector<7x224xf32> -> vector<7x224xf32>
    %242 = arith.addf %236, %241 : vector<7x224xf32>
    %c0_268 = arith.constant 0 : index
    %c0_269 = arith.constant 0 : index
    %c2_270 = arith.constant 2 : index
    %c0_271 = arith.constant 0 : index
    %243 = vector.load %arg15[%c0_268, %c0_269, %c2_270, %c0_271] : memref<2x2x9x224xf32, #tpu.memory_space<vmem>>, vector<1x1x7x224xf32>
    %244 = vector.shape_cast %243 : vector<1x1x7x224xf32> to vector<7x224xf32>
    %c4_272 = arith.constant 4 : index
    %c0_273 = arith.constant 0 : index
    %c0_274 = arith.constant 0 : index
    %245 = vector.load %arg5[%c4_272, %c0_273, %c0_274] : memref<5x224x224xf32, #tpu.memory_space<vmem>>, vector<1x224x224xf32>
    %246 = vector.shape_cast %245 : vector<1x224x224xf32> to vector<224x224xf32>
    %cst_275 = arith.constant dense<0.000000e+00> : vector<7x224xf32>
    %247 = tpu.matmul %244, %246, %cst_275 {dimension_numbers = #tpu.dot_dimension_numbers<[1], [0], [0], [1], [0, 0, 1, 1], [], []>} : vector<7x224xf32>, vector<224x224xf32>, vector<7x224xf32> -> vector<7x224xf32>
    %248 = arith.addf %242, %247 : vector<7x224xf32>
    %cst_276 = arith.constant dense<0.000000e+00> : vector<224xf32>
    %249 = vector.multi_reduction <add>, %248, %cst_276 [0] : vector<7x224xf32> to vector<224xf32>
    %250 = vector.shape_cast %249 : vector<224xf32> to vector<1x224xf32>
    %251 = arith.addf %216, %250 : vector<1x224xf32>
    %252 = arith.mulf %248, %248 : vector<7x224xf32>
    %cst_277 = arith.constant dense<0.000000e+00> : vector<224xf32>
    %253 = vector.multi_reduction <add>, %252, %cst_277 [0] : vector<7x224xf32> to vector<224xf32>
    %254 = vector.shape_cast %253 : vector<224xf32> to vector<1x224xf32>
    %255 = arith.addf %217, %254 : vector<1x224xf32>
    %cst_278 = arith.constant 0.000000e+00 : f32
    %256 = vector.broadcast %cst_278 : f32 to vector<7x224xf32>
    %c0_279 = arith.constant 0 : index
    %c1_280 = arith.constant 1 : index
    %c0_281 = arith.constant 0 : index
    %c0_282 = arith.constant 0 : index
    %257 = vector.load %arg15[%c0_279, %c1_280, %c0_281, %c0_282] : memref<2x2x9x224xf32, #tpu.memory_space<vmem>>, vector<1x1x7x224xf32>
    %258 = vector.shape_cast %257 : vector<1x1x7x224xf32> to vector<7x224xf32>
    %c0_283 = arith.constant 0 : index
    %c0_284 = arith.constant 0 : index
    %c0_285 = arith.constant 0 : index
    %259 = vector.load %arg5[%c0_283, %c0_284, %c0_285] : memref<5x224x224xf32, #tpu.memory_space<vmem>>, vector<1x224x224xf32>
    %260 = vector.shape_cast %259 : vector<1x224x224xf32> to vector<224x224xf32>
    %cst_286 = arith.constant dense<0.000000e+00> : vector<7x224xf32>
    %261 = tpu.matmul %258, %260, %cst_286 {dimension_numbers = #tpu.dot_dimension_numbers<[1], [0], [0], [1], [0, 0, 1, 1], [], []>} : vector<7x224xf32>, vector<224x224xf32>, vector<7x224xf32> -> vector<7x224xf32>
    %262 = arith.addf %256, %261 : vector<7x224xf32>
    %c1_287 = arith.constant 1 : index
    %c1_288 = arith.constant 1 : index
    %c0_289 = arith.constant 0 : index
    %c0_290 = arith.constant 0 : index
    %263 = vector.load %arg15[%c1_287, %c1_288, %c0_289, %c0_290] : memref<2x2x9x224xf32, #tpu.memory_space<vmem>>, vector<1x1x7x224xf32>
    %264 = vector.shape_cast %263 : vector<1x1x7x224xf32> to vector<7x224xf32>
    %c1_291 = arith.constant 1 : index
    %c0_292 = arith.constant 0 : index
    %c0_293 = arith.constant 0 : index
    %265 = vector.load %arg5[%c1_291, %c0_292, %c0_293] : memref<5x224x224xf32, #tpu.memory_space<vmem>>, vector<1x224x224xf32>
    %266 = vector.shape_cast %265 : vector<1x224x224xf32> to vector<224x224xf32>
    %cst_294 = arith.constant dense<0.000000e+00> : vector<7x224xf32>
    %267 = tpu.matmul %264, %266, %cst_294 {dimension_numbers = #tpu.dot_dimension_numbers<[1], [0], [0], [1], [0, 0, 1, 1], [], []>} : vector<7x224xf32>, vector<224x224xf32>, vector<7x224xf32> -> vector<7x224xf32>
    %268 = arith.addf %262, %267 : vector<7x224xf32>
    %c0_295 = arith.constant 0 : index
    %c1_296 = arith.constant 1 : index
    %c1_297 = arith.constant 1 : index
    %c0_298 = arith.constant 0 : index
    %269 = vector.load %arg15[%c0_295, %c1_296, %c1_297, %c0_298] : memref<2x2x9x224xf32, #tpu.memory_space<vmem>>, vector<1x1x7x224xf32>
    %270 = vector.shape_cast %269 : vector<1x1x7x224xf32> to vector<7x224xf32>
    %c2_299 = arith.constant 2 : index
    %c0_300 = arith.constant 0 : index
    %c0_301 = arith.constant 0 : index
    %271 = vector.load %arg5[%c2_299, %c0_300, %c0_301] : memref<5x224x224xf32, #tpu.memory_space<vmem>>, vector<1x224x224xf32>
    %272 = vector.shape_cast %271 : vector<1x224x224xf32> to vector<224x224xf32>
    %cst_302 = arith.constant dense<0.000000e+00> : vector<7x224xf32>
    %273 = tpu.matmul %270, %272, %cst_302 {dimension_numbers = #tpu.dot_dimension_numbers<[1], [0], [0], [1], [0, 0, 1, 1], [], []>} : vector<7x224xf32>, vector<224x224xf32>, vector<7x224xf32> -> vector<7x224xf32>
    %274 = arith.addf %268, %273 : vector<7x224xf32>
    %c1_303 = arith.constant 1 : index
    %c1_304 = arith.constant 1 : index
    %c1_305 = arith.constant 1 : index
    %c0_306 = arith.constant 0 : index
    %275 = vector.load %arg15[%c1_303, %c1_304, %c1_305, %c0_306] : memref<2x2x9x224xf32, #tpu.memory_space<vmem>>, vector<1x1x7x224xf32>
    %276 = vector.shape_cast %275 : vector<1x1x7x224xf32> to vector<7x224xf32>
    %c3_307 = arith.constant 3 : index
    %c0_308 = arith.constant 0 : index
    %c0_309 = arith.constant 0 : index
    %277 = vector.load %arg5[%c3_307, %c0_308, %c0_309] : memref<5x224x224xf32, #tpu.memory_space<vmem>>, vector<1x224x224xf32>
    %278 = vector.shape_cast %277 : vector<1x224x224xf32> to vector<224x224xf32>
    %cst_310 = arith.constant dense<0.000000e+00> : vector<7x224xf32>
    %279 = tpu.matmul %276, %278, %cst_310 {dimension_numbers = #tpu.dot_dimension_numbers<[1], [0], [0], [1], [0, 0, 1, 1], [], []>} : vector<7x224xf32>, vector<224x224xf32>, vector<7x224xf32> -> vector<7x224xf32>
    %280 = arith.addf %274, %279 : vector<7x224xf32>
    %c0_311 = arith.constant 0 : index
    %c1_312 = arith.constant 1 : index
    %c2_313 = arith.constant 2 : index
    %c0_314 = arith.constant 0 : index
    %281 = vector.load %arg15[%c0_311, %c1_312, %c2_313, %c0_314] : memref<2x2x9x224xf32, #tpu.memory_space<vmem>>, vector<1x1x7x224xf32>
    %282 = vector.shape_cast %281 : vector<1x1x7x224xf32> to vector<7x224xf32>
    %c4_315 = arith.constant 4 : index
    %c0_316 = arith.constant 0 : index
    %c0_317 = arith.constant 0 : index
    %283 = vector.load %arg5[%c4_315, %c0_316, %c0_317] : memref<5x224x224xf32, #tpu.memory_space<vmem>>, vector<1x224x224xf32>
    %284 = vector.shape_cast %283 : vector<1x224x224xf32> to vector<224x224xf32>
    %cst_318 = arith.constant dense<0.000000e+00> : vector<7x224xf32>
    %285 = tpu.matmul %282, %284, %cst_318 {dimension_numbers = #tpu.dot_dimension_numbers<[1], [0], [0], [1], [0, 0, 1, 1], [], []>} : vector<7x224xf32>, vector<224x224xf32>, vector<7x224xf32> -> vector<7x224xf32>
    %286 = arith.addf %280, %285 : vector<7x224xf32>
    %cst_319 = arith.constant dense<0.000000e+00> : vector<224xf32>
    %287 = vector.multi_reduction <add>, %286, %cst_319 [0] : vector<7x224xf32> to vector<224xf32>
    %288 = vector.shape_cast %287 : vector<224xf32> to vector<1x224xf32>
    %289 = arith.addf %251, %288 : vector<1x224xf32>
    %290 = arith.mulf %286, %286 : vector<7x224xf32>
    %cst_320 = arith.constant dense<0.000000e+00> : vector<224xf32>
    %291 = vector.multi_reduction <add>, %290, %cst_320 [0] : vector<7x224xf32> to vector<224xf32>
    %292 = vector.shape_cast %291 : vector<224xf32> to vector<1x224xf32>
    %293 = arith.addf %255, %292 : vector<1x224xf32>
    %c0_321 = arith.constant 0 : index
    %c0_322 = arith.constant 0 : index
    %294 = vector.load %arg10[%c0_321, %c0_322] : memref<224x32xf32, #tpu.memory_space<vmem>>, vector<224x32xf32>
    %cst_323 = arith.constant dense<0.000000e+00> : vector<1x32xf32>
    %295 = tpu.matmul %289, %294, %cst_323 {dimension_numbers = #tpu.dot_dimension_numbers<[1], [0], [0], [1], [0, 0, 1, 1], [], []>} : vector<1x224xf32>, vector<224x32xf32>, vector<1x32xf32> -> vector<1x32xf32>
    %c0_324 = arith.constant 0 : index
    %c0_325 = arith.constant 0 : index
    %296 = vector.load %arg10[%c0_324, %c0_325] : memref<224x32xf32, #tpu.memory_space<vmem>>, vector<224x32xf32>
    %cst_326 = arith.constant dense<0.000000e+00> : vector<1x32xf32>
    %297 = tpu.matmul %293, %296, %cst_326 {dimension_numbers = #tpu.dot_dimension_numbers<[1], [0], [0], [1], [0, 0, 1, 1], [], []>} : vector<1x224xf32>, vector<224x32xf32>, vector<1x32xf32> -> vector<1x32xf32>
    %cst_327 = arith.constant 9.800000e+01 : f32
    %298 = vector.broadcast %cst_327 : f32 to vector<1x32xf32>
    %299 = arith.divf %295, %298 : vector<1x32xf32>
    %cst_328 = arith.constant 9.800000e+01 : f32
    %300 = vector.broadcast %cst_328 : f32 to vector<1x32xf32>
    %301 = arith.divf %297, %300 : vector<1x32xf32>
    %302 = arith.mulf %299, %299 : vector<1x32xf32>
    %303 = arith.subf %301, %302 : vector<1x32xf32>
    %cst_329 = arith.constant 0.000000e+00 : f32
    %304 = vector.broadcast %cst_329 : f32 to vector<1x32xf32>
    %305 = arith.maximumf %303, %304 : vector<1x32xf32>
    %c0_330 = arith.constant 0 : index
    %c0_331 = arith.constant 0 : index
    %306 = vector.load %arg6[%c0_330, %c0_331] : memref<1x32xf32, #tpu.memory_space<vmem>>, vector<1x32xf32>
    %cst_332 = arith.constant 9.99999974E-6 : f32
    %307 = vector.broadcast %cst_332 : f32 to vector<1x32xf32>
    %308 = arith.addf %305, %307 : vector<1x32xf32>
    %309 = math.rsqrt %308 : vector<1x32xf32>
    %310 = arith.mulf %306, %309 : vector<1x32xf32>
    %c0_333 = arith.constant 0 : index
    %c0_334 = arith.constant 0 : index
    %311 = vector.load %arg7[%c0_333, %c0_334] : memref<1x32xf32, #tpu.memory_space<vmem>>, vector<1x32xf32>
    %312 = arith.mulf %299, %310 : vector<1x32xf32>
    %313 = arith.subf %311, %312 : vector<1x32xf32>
    %c0_335 = arith.constant 0 : index
    %c0_336 = arith.constant 0 : index
    %314 = vector.load %arg11[%c0_335, %c0_336] : memref<32x224xf32, #tpu.memory_space<vmem>>, vector<32x224xf32>
    %cst_337 = arith.constant dense<0.000000e+00> : vector<1x224xf32>
    %315 = tpu.matmul %310, %314, %cst_337 {dimension_numbers = #tpu.dot_dimension_numbers<[1], [0], [0], [1], [0, 0, 1, 1], [], []>} : vector<1x32xf32>, vector<32x224xf32>, vector<1x224xf32> -> vector<1x224xf32>
    %c0_338 = arith.constant 0 : index
    %c0_339 = arith.constant 0 : index
    %316 = vector.load %arg11[%c0_338, %c0_339] : memref<32x224xf32, #tpu.memory_space<vmem>>, vector<32x224xf32>
    %cst_340 = arith.constant dense<0.000000e+00> : vector<1x224xf32>
    %317 = tpu.matmul %313, %316, %cst_340 {dimension_numbers = #tpu.dot_dimension_numbers<[1], [0], [0], [1], [0, 0, 1, 1], [], []>} : vector<1x32xf32>, vector<32x224xf32>, vector<1x224xf32> -> vector<1x224xf32>
    %318 = vector.broadcast %315 : vector<1x224xf32> to vector<7x224xf32>
    %319 = arith.mulf %248, %318 : vector<7x224xf32>
    %320 = vector.broadcast %317 : vector<1x224xf32> to vector<7x224xf32>
    %321 = arith.addf %319, %320 : vector<7x224xf32>
    %cst_341 = arith.constant 0.000000e+00 : f32
    %322 = vector.broadcast %cst_341 : f32 to vector<7x224xf32>
    %323 = arith.maximumf %321, %322 : vector<7x224xf32>
    %cst_342 = arith.constant dense<0.000000e+00> : vector<224xf32>
    %324 = vector.multi_reduction <add>, %323, %cst_342 [0] : vector<7x224xf32> to vector<224xf32>
    %325 = vector.shape_cast %324 : vector<224xf32> to vector<1x224xf32>
    %c0_343 = arith.constant 0 : index
    %c0_344 = arith.constant 0 : index
    %326 = vector.load %arg10[%c0_343, %c0_344] : memref<224x32xf32, #tpu.memory_space<vmem>>, vector<224x32xf32>
    %cst_345 = arith.constant dense<0.000000e+00> : vector<1x32xf32>
    %327 = tpu.matmul %325, %326, %cst_345 {dimension_numbers = #tpu.dot_dimension_numbers<[1], [0], [0], [1], [0, 0, 1, 1], [], []>} : vector<1x224xf32>, vector<224x32xf32>, vector<1x32xf32> -> vector<1x32xf32>
    %cst_346 = arith.constant 0.0204081628 : f32
    %328 = vector.broadcast %cst_346 : f32 to vector<1x32xf32>
    %329 = arith.mulf %327, %328 : vector<1x32xf32>
    %c0_347 = arith.constant 0 : index
    %c0_348 = arith.constant 0 : index
    %330 = vector.load %arg12[%c0_347, %c0_348] : memref<32x10xf32, #tpu.memory_space<vmem>>, vector<32x10xf32>
    %cst_349 = arith.constant dense<0.000000e+00> : vector<1x10xf32>
    %331 = tpu.matmul %329, %330, %cst_349 {dimension_numbers = #tpu.dot_dimension_numbers<[1], [0], [0], [1], [0, 0, 1, 1], [], []>} : vector<1x32xf32>, vector<32x10xf32>, vector<1x10xf32> -> vector<1x10xf32>
    %c0_350 = arith.constant 0 : index
    %c0_351 = arith.constant 0 : index
    %332 = vector.load %arg13[%c0_350, %c0_351] : memref<1x10xf32, #tpu.memory_space<vmem>>, vector<1x10xf32>
    %333 = arith.addf %331, %332 : vector<1x10xf32>
    %334 = vector.broadcast %315 : vector<1x224xf32> to vector<7x224xf32>
    %335 = arith.mulf %286, %334 : vector<7x224xf32>
    %336 = vector.broadcast %317 : vector<1x224xf32> to vector<7x224xf32>
    %337 = arith.addf %335, %336 : vector<7x224xf32>
    %cst_352 = arith.constant 0.000000e+00 : f32
    %338 = vector.broadcast %cst_352 : f32 to vector<7x224xf32>
    %339 = arith.maximumf %337, %338 : vector<7x224xf32>
    %cst_353 = arith.constant dense<0.000000e+00> : vector<224xf32>
    %340 = vector.multi_reduction <add>, %339, %cst_353 [0] : vector<7x224xf32> to vector<224xf32>
    %341 = vector.shape_cast %340 : vector<224xf32> to vector<1x224xf32>
    %c0_354 = arith.constant 0 : index
    %c0_355 = arith.constant 0 : index
    %342 = vector.load %arg10[%c0_354, %c0_355] : memref<224x32xf32, #tpu.memory_space<vmem>>, vector<224x32xf32>
    %cst_356 = arith.constant dense<0.000000e+00> : vector<1x32xf32>
    %343 = tpu.matmul %341, %342, %cst_356 {dimension_numbers = #tpu.dot_dimension_numbers<[1], [0], [0], [1], [0, 0, 1, 1], [], []>} : vector<1x224xf32>, vector<224x32xf32>, vector<1x32xf32> -> vector<1x32xf32>
    %cst_357 = arith.constant 0.0204081628 : f32
    %344 = vector.broadcast %cst_357 : f32 to vector<1x32xf32>
    %345 = arith.mulf %343, %344 : vector<1x32xf32>
    %c0_358 = arith.constant 0 : index
    %c0_359 = arith.constant 0 : index
    %346 = vector.load %arg12[%c0_358, %c0_359] : memref<32x10xf32, #tpu.memory_space<vmem>>, vector<32x10xf32>
    %cst_360 = arith.constant dense<0.000000e+00> : vector<1x10xf32>
    %347 = tpu.matmul %345, %346, %cst_360 {dimension_numbers = #tpu.dot_dimension_numbers<[1], [0], [0], [1], [0, 0, 1, 1], [], []>} : vector<1x32xf32>, vector<32x10xf32>, vector<1x10xf32> -> vector<1x10xf32>
    %c0_361 = arith.constant 0 : index
    %c0_362 = arith.constant 0 : index
    %348 = vector.load %arg13[%c0_361, %c0_362] : memref<1x10xf32, #tpu.memory_space<vmem>>, vector<1x10xf32>
    %349 = arith.addf %347, %348 : vector<1x10xf32>
    %350 = tpu.concatenate %333, %349 in 0 : vector<1x10xf32>, vector<1x10xf32> -> vector<2x10xf32>
    %c0_363 = arith.constant 0 : index
    %c0_364 = arith.constant 0 : index
    %351 = vector.load %arg14[%c0_363, %c0_364] : memref<2x10xf32, #tpu.memory_space<vmem>>, vector<2x10xf32>
    tpu.vector_store %arg14[%c0_363, %c0_364], %350 {strides = array<i32>} : memref<2x10xf32, #tpu.memory_space<vmem>>, vector<2x10xf32>,
    return
  }
  func.func @transform_0(%arg0: i32) -> (i32, i32, i32, i32, i32) {
    %c0_i32 = arith.constant 0 : i32
    %c0_i32_0 = arith.constant 0 : i32
    %c0_i32_1 = arith.constant 0 : i32
    %c0_i32_2 = arith.constant 0 : i32
    %c0_i32_3 = arith.constant 0 : i32
    %c0_i32_4 = arith.constant 0 : i32
    return %c0_i32, %c0_i32_0, %c0_i32_1, %c0_i32_2, %c0_i32_3 : i32, i32, i32, i32, i32
  }
  func.func @transform_1(%arg0: i32) -> (i32, i32, i32) {
    %c0_i32 = arith.constant 0 : i32
    %c0_i32_0 = arith.constant 0 : i32
    %c0_i32_1 = arith.constant 0 : i32
    %c0_i32_2 = arith.constant 0 : i32
    return %c0_i32, %c0_i32_0, %c0_i32_1 : i32, i32, i32
  }
  func.func @transform_2(%arg0: i32) -> (i32, i32) {
    %c0_i32 = arith.constant 0 : i32
    %c0_i32_0 = arith.constant 0 : i32
    %c0_i32_1 = arith.constant 0 : i32
    return %c0_i32, %c0_i32_0 : i32, i32
  }
  func.func @transform_3(%arg0: i32) -> (i32, i32) {
    %c0_i32 = arith.constant 0 : i32
    %c0_i32_0 = arith.constant 0 : i32
    %c0_i32_1 = arith.constant 0 : i32
    return %c0_i32, %c0_i32_0 : i32, i32
  }
  func.func @transform_4(%arg0: i32) -> (i32, i32, i32) {
    %c0_i32 = arith.constant 0 : i32
    %c0_i32_0 = arith.constant 0 : i32
    %c0_i32_1 = arith.constant 0 : i32
    %c0_i32_2 = arith.constant 0 : i32
    return %c0_i32, %c0_i32_0, %c0_i32_1 : i32, i32, i32
  }
  func.func @transform_5(%arg0: i32) -> (i32, i32) {
    %c0_i32 = arith.constant 0 : i32
    %c0_i32_0 = arith.constant 0 : i32
    %c0_i32_1 = arith.constant 0 : i32
    return %c0_i32, %c0_i32_0 : i32, i32
  }
  func.func @transform_6(%arg0: i32) -> (i32, i32) {
    %c0_i32 = arith.constant 0 : i32
    %c0_i32_0 = arith.constant 0 : i32
    %c0_i32_1 = arith.constant 0 : i32
    return %c0_i32, %c0_i32_0 : i32, i32
  }
  func.func @transform_7(%arg0: i32) -> (i32, i32) {
    %c0_i32 = arith.constant 0 : i32
    %c0_i32_0 = arith.constant 0 : i32
    %c0_i32_1 = arith.constant 0 : i32
    return %c0_i32, %c0_i32_0 : i32, i32
  }
  func.func @transform_8(%arg0: i32) -> (i32, i32) {
    %c0_i32 = arith.constant 0 : i32
    %c0_i32_0 = arith.constant 0 : i32
    %c0_i32_1 = arith.constant 0 : i32
    return %c0_i32, %c0_i32_0 : i32, i32
  }
  func.func @transform_9(%arg0: i32) -> (i32, i32) {
    %c0_i32 = arith.constant 0 : i32
    %c0_i32_0 = arith.constant 0 : i32
    %c0_i32_1 = arith.constant 0 : i32
    return %c0_i32, %c0_i32_0 : i32, i32
  }
  func.func @transform_10(%arg0: i32) -> (i32, i32) {
    %c0_i32 = arith.constant 0 : i32
    %c0_i32_0 = arith.constant 0 : i32
    %c0_i32_1 = arith.constant 0 : i32
    return %c0_i32, %c0_i32_0 : i32, i32
  }
  func.func @transform_11(%arg0: i32) -> (i32, i32) {
    %c0_i32 = arith.constant 0 : i32
    %c0_i32_0 = arith.constant 0 : i32
    %c0_i32_1 = arith.constant 0 : i32
    return %c0_i32, %c0_i32_0 : i32, i32
  }
  func.func @transform_12(%arg0: i32) -> (i32, i32) {
    %c0_i32 = arith.constant 0 : i32
    %c0_i32_0 = arith.constant 0 : i32
    %c0_i32_1 = arith.constant 0 : i32
    return %c0_i32, %c0_i32_0 : i32, i32
  }
  func.func @transform_13(%arg0: i32) -> (i32, i32) {
    %c0_i32 = arith.constant 0 : i32
    %c0_i32_0 = arith.constant 0 : i32
    %c0_i32_1 = arith.constant 0 : i32
    return %c0_i32, %c0_i32_0 : i32, i32
  }
}

</mosaic_0001>

<llo_original>
// kernel: tile.19
$region0: #{tile.19}
  %s0 = inlined_call_operand.vmem [shape: f32[7,32,32], index: 0, kind: input, shape index: {}]
  %s1 = inlined_call_operand.vmem [shape: f32[224,32], index: 1, kind: output, shape index: {}]
  %v2 = vld [vmem:[%s0] ss:$4 sm:$0xff]
  %vm3 = vcmask 261120
  %4 = vst.msk [vmem:[%s1] ss:$8 sm:$0x3] %vm3, %v2
  %s5 = scalar_lea.vmem %s1, 4294967281
  %6 = vst.msk [vmem:[%s5] ss:$8 sm:$0xc] %vm3, %v2
  %s7 = scalar_lea.vmem %s1, 4294967266
  %8 = vst.msk [vmem:[%s7] ss:$8 sm:$0x30] %vm3, %v2
  %s9 = scalar_lea.vmem %s1, 4294967251
  %10 = vst.msk [vmem:[%s9] ss:$8 sm:$0xc0] %vm3, %v2
  %s11 = scalar_lea.vmem %s0, 32
  %v12 = vld [vmem:[%s11] ss:$4 sm:$0xff]
  %vm13 = vcmask 261120
  %s14 = scalar_lea.vmem %s1, 4
  %15 = vst.msk [vmem:[%s14] ss:$8 sm:$0x3] %vm13, %v12
  %s16 = scalar_lea.vmem %s1, 4294967285
  %17 = vst.msk [vmem:[%s16] ss:$8 sm:$0xc] %vm13, %v12
  %s18 = scalar_lea.vmem %s1, 4294967270
  %19 = vst.msk [vmem:[%s18] ss:$8 sm:$0x30] %vm13, %v12
  %s20 = scalar_lea.vmem %s1, 4294967255
  %21 = vst.msk [vmem:[%s20] ss:$8 sm:$0xc0] %vm13, %v12
  %s22 = scalar_lea.vmem %s0, 64
  %v23 = vld [vmem:[%s22] ss:$4 sm:$0xff]
  %vm24 = vcmask 261120
  %s25 = scalar_lea.vmem %s1, 16
  %26 = vst.msk [vmem:[%s25] ss:$8 sm:$0x3] %vm24, %v23
  %s27 = scalar_lea.vmem %s1, 1
  %28 = vst.msk [vmem:[%s27] ss:$8 sm:$0xc] %vm24, %v23
  %s29 = scalar_lea.vmem %s1, 4294967282
  %30 = vst.msk [vmem:[%s29] ss:$8 sm:$0x30] %vm24, %v23
  %s31 = scalar_lea.vmem %s1, 4294967267
  %32 = vst.msk [vmem:[%s31] ss:$8 sm:$0xc0] %vm24, %v23
  %s33 = scalar_lea.vmem %s0, 96
  %v34 = vld [vmem:[%s33] ss:$4 sm:$0xff]
  %vm35 = vcmask 261120
  %s36 = scalar_lea.vmem %s1, 20
  %37 = vst.msk [vmem:[%s36] ss:$8 sm:$0x3] %vm35, %v34
  %s38 = scalar_lea.vmem %s1, 5
  %39 = vst.msk [vmem:[%s38] ss:$8 sm:$0xc] %vm35, %v34
  %s40 = scalar_lea.vmem %s1, 4294967286
  %41 = vst.msk [vmem:[%s40] ss:$8 sm:$0x30] %vm35, %v34
  %s42 = scalar_lea.vmem %s1, 4294967271
  %43 = vst.msk [vmem:[%s42] ss:$8 sm:$0xc0] %vm35, %v34
  %s44 = scalar_lea.vmem %s0, 128
  %v45 = vld [vmem:[%s44] ss:$4 sm:$0xff]
  %vm46 = vcmask 261120
  %s47 = scalar_lea.vmem %s1, 32
  %48 = vst.msk [vmem:[%s47] ss:$8 sm:$0x3] %vm46, %v45
  %s49 = scalar_lea.vmem %s1, 17
  %50 = vst.msk [vmem:[%s49] ss:$8 sm:$0xc] %vm46, %v45
  %s51 = scalar_lea.vmem %s1, 2
  %52 = vst.msk [vmem:[%s51] ss:$8 sm:$0x30] %vm46, %v45
  %s53 = scalar_lea.vmem %s1, 4294967283
  %54 = vst.msk [vmem:[%s53] ss:$8 sm:$0xc0] %vm46, %v45
  %s55 = scalar_lea.vmem %s0, 160
  %v56 = vld [vmem:[%s55] ss:$4 sm:$0xff]
  %vm57 = vcmask 261120
  %s58 = scalar_lea.vmem %s1, 36
  %59 = vst.msk [vmem:[%s58] ss:$8 sm:$0x3] %vm57, %v56
  %s60 = scalar_lea.vmem %s1, 21
  %61 = vst.msk [vmem:[%s60] ss:$8 sm:$0xc] %vm57, %v56
  %s62 = scalar_lea.vmem %s1, 6
  %63 = vst.msk [vmem:[%s62] ss:$8 sm:$0x30] %vm57, %v56
  %s64 = scalar_lea.vmem %s1, 4294967287
  %65 = vst.msk [vmem:[%s64] ss:$8 sm:$0xc0] %vm57, %v56
  %s66 = scalar_lea.vmem %s0, 192
  %v67 = vld [vmem:[%s66] ss:$4 sm:$0xff]
  %vm68 = vcmask 261120
  %s69 = scalar_lea.vmem %s1, 48
  %70 = vst.msk [vmem:[%s69] ss:$8 sm:$0x3] %vm68, %v67
  %s71 = scalar_lea.vmem %s1, 33
  %72 = vst.msk [vmem:[%s71] ss:$8 sm:$0xc] %vm68, %v67
  %s73 = scalar_lea.vmem %s1, 18
  %74 = vst.msk [vmem:[%s73] ss:$8 sm:$0x30] %vm68, %v67
  %s75 = scalar_lea.vmem %s1, 3
  %76 = vst.msk [vmem:[%s75] ss:$8 sm:$0xc0] %vm68, %v67
  %s77 = scalar_lea.vmem %s0, 224
  %v78 = vld [vmem:[%s77] ss:$4 sm:$0xff]
  %vm79 = vcmask 261120
  %s80 = scalar_lea.vmem %s1, 52
  %81 = vst.msk [vmem:[%s80] ss:$8 sm:$0x3] %vm79, %v78
  %s82 = scalar_lea.vmem %s1, 37
  %83 = vst.msk [vmem:[%s82] ss:$8 sm:$0xc] %vm79, %v78
  %s84 = scalar_lea.vmem %s1, 22
  %85 = vst.msk [vmem:[%s84] ss:$8 sm:$0x30] %vm79, %v78
  %s86 = scalar_lea.vmem %s1, 7
  %87 = vst.msk [vmem:[%s86] ss:$8 sm:$0xc0] %vm79, %v78
  %s88 = scalar_lea.vmem %s0, 3
  %v89 = vld [vmem:[%s88] ss:$8 sm:$0xf]
  %s90 = scalar_lea.vmem %s0, 3
  %v91 = vld [vmem:[%s90] ss:$8 sm:$0xf0]
  %vm92 = vcmask 1047556
  %v93 = vsel %vm92, %v91, %v89
  %94 = vrot.lane.b32.xlu0 %v93, 96
  %v95 = vpop.permute.xlu0 %94
  %vm96 = vcmask 1048320
  %97 = vst.msk [vmem:[%s1] sm:$0xff] %vm96, %v95
  %s98 = scalar_lea.vmem %s0, 131
  %v99 = vld [vmem:[%s98] ss:$8 sm:$0xf]
  %s100 = scalar_lea.vmem %s0, 131
  %v101 = vld [vmem:[%s100] ss:$8 sm:$0xf0]
  %vm102 = vcmask 1047556
  %v103 = vsel %vm102, %v101, %v99
  %104 = vrot.lane.b32.xlu0 %v103, 96
  %v105 = vpop.permute.xlu0 %104
  %vm106 = vcmask 1048320
  %s107 = scalar_lea.vmem %s1, 32
  %108 = vst.msk [vmem:[%s107] sm:$0xff] %vm106, %v105
  %s109 = scalar_lea.vmem %s0, 67
  %v110 = vld [vmem:[%s109] ss:$8 sm:$0xf]
  %s111 = scalar_lea.vmem %s0, 67
  %v112 = vld [vmem:[%s111] ss:$8 sm:$0xf0]
  %vm113 = vcmask 1047556
  %v114 = vsel %vm113, %v112, %v110
  %115 = vrot.lane.b32.xlu0 %v114, 96
  %v116 = vpop.permute.xlu0 %115
  %vm117 = vcmask 1048320
  %s118 = scalar_lea.vmem %s1, 16
  %119 = vst.msk [vmem:[%s118] sm:$0xff] %vm117, %v116
  %s120 = scalar_lea.vmem %s0, 195
  %v121 = vld [vmem:[%s120] ss:$8 sm:$0xf]
  %s122 = scalar_lea.vmem %s0, 195
  %v123 = vld [vmem:[%s122] ss:$8 sm:$0xf0]
  %vm124 = vcmask 1047556
  %v125 = vsel %vm124, %v123, %v121
  %126 = vrot.lane.b32.xlu0 %v125, 96
  %v127 = vpop.permute.xlu0 %126
  %vm128 = vcmask 1048320
  %s129 = scalar_lea.vmem %s1, 48
  %130 = vst.msk [vmem:[%s129] sm:$0xff] %vm128, %v127
  %s131 = scalar_lea.vmem %s0, 2
  %v132 = vld [vmem:[%s131] ss:$8 sm:$0xf]
  %s133 = scalar_lea.vmem %s0, 2
  %v134 = vld [vmem:[%s133] ss:$8 sm:$0xf0]
  %vm135 = vcmask 1047556
  %v136 = vsel %vm135, %v134, %v132
  %137 = vrot.lane.b32.xlu0 %v136, 64
  %v138 = vpop.permute.xlu0 %137
  %vm139 = vcmask 785920
  %140 = vst.msk [vmem:[%s1] sm:$0xff] %vm139, %v138
  %s141 = scalar_lea.vmem %s0, 130
  %v142 = vld [vmem:[%s141] ss:$8 sm:$0xf]
  %s143 = scalar_lea.vmem %s0, 130
  %v144 = vld [vmem:[%s143] ss:$8 sm:$0xf0]
  %vm145 = vcmask 1047556
  %v146 = vsel %vm145, %v144, %v142
  %147 = vrot.lane.b32.xlu0 %v146, 64
  %v148 = vpop.permute.xlu0 %147
  %vm149 = vcmask 785920
  %s150 = scalar_lea.vmem %s1, 32
  %151 = vst.msk [vmem:[%s150] sm:$0xff] %vm149, %v148
  %s152 = scalar_lea.vmem %s0, 6
  %v153 = vld [vmem:[%s152] ss:$8 sm:$0xf]
  %s154 = scalar_lea.vmem %s0, 6
  %v155 = vld [vmem:[%s154] ss:$8 sm:$0xf0]
  %vm156 = vcmask 1047556
  %v157 = vsel %vm156, %v155, %v153
  %158 = vrot.lane.b32.xlu0 %v157, 64
  %v159 = vpop.permute.xlu0 %158
  %vm160 = vcmask 785920
  %s161 = scalar_lea.vmem %s1, 8
  %162 = vst.msk [vmem:[%s161] sm:$0xff] %vm160, %v159
  %s163 = scalar_lea.vmem %s0, 134
  %v164 = vld [vmem:[%s163] ss:$8 sm:$0xf]
  %s165 = scalar_lea.vmem %s0, 134
  %v166 = vld [vmem:[%s165] ss:$8 sm:$0xf0]
  %vm167 = vcmask 1047556
  %v168 = vsel %vm167, %v166, %v164
  %169 = vrot.lane.b32.xlu0 %v168, 64
  %v170 = vpop.permute.xlu0 %169
  %vm171 = vcmask 785920
  %s172 = scalar_lea.vmem %s1, 40
  %173 = vst.msk [vmem:[%s172] sm:$0xff] %vm171, %v170
  %s174 = scalar_lea.vmem %s0, 66
  %v175 = vld [vmem:[%s174] ss:$8 sm:$0xf]
  %s176 = scalar_lea.vmem %s0, 66
  %v177 = vld [vmem:[%s176] ss:$8 sm:$0xf0]
  %vm178 = vcmask 1047556
  %v179 = vsel %vm178, %v177, %v175
  %180 = vrot.lane.b32.xlu0 %v179, 64
  %v181 = vpop.permute.xlu0 %180
  %vm182 = vcmask 785920
  %s183 = scalar_lea.vmem %s1, 16
  %184 = vst.msk [vmem:[%s183] sm:$0xff] %vm182, %v181
  %s185 = scalar_lea.vmem %s0, 194
  %v186 = vld [vmem:[%s185] ss:$8 sm:$0xf]
  %s187 = scalar_lea.vmem %s0, 194
  %v188 = vld [vmem:[%s187] ss:$8 sm:$0xf0]
  %vm189 = vcmask 1047556
  %v190 = vsel %vm189, %v188, %v186
  %191 = vrot.lane.b32.xlu0 %v190, 64
  %v192 = vpop.permute.xlu0 %191
  %vm193 = vcmask 785920
  %s194 = scalar_lea.vmem %s1, 48
  %195 = vst.msk [vmem:[%s194] sm:$0xff] %vm193, %v192
  %s196 = scalar_lea.vmem %s0, 70
  %v197 = vld [vmem:[%s196] ss:$8 sm:$0xf]
  %s198 = scalar_lea.vmem %s0, 70
  %v199 = vld [vmem:[%s198] ss:$8 sm:$0xf0]
  %vm200 = vcmask 1047556
  %v201 = vsel %vm200, %v199, %v197
  %202 = vrot.lane.b32.xlu0 %v201, 64
  %v203 = vpop.permute.xlu0 %202
  %vm204 = vcmask 785920
  %s205 = scalar_lea.vmem %s1, 24
  %206 = vst.msk [vmem:[%s205] sm:$0xff] %vm204, %v203
  %s207 = scalar_lea.vmem %s0, 198
  %v208 = vld [vmem:[%s207] ss:$8 sm:$0xf]
  %s209 = scalar_lea.vmem %s0, 198
  %v210 = vld [vmem:[%s209] ss:$8 sm:$0xf0]
  %vm211 = vcmask 1047556
  %v212 = vsel %vm211, %v210, %v208
  %213 = vrot.lane.b32.xlu0 %v212, 64
  %v214 = vpop.permute.xlu0 %213
  %vm215 = vcmask 785920
  %s216 = scalar_lea.vmem %s1, 56
  %217 = vst.msk [vmem:[%s216] sm:$0xff] %vm215, %v214
  %s218 = scalar_lea.vmem %s0, 1
  %v219 = vld [vmem:[%s218] ss:$8 sm:$0xf]
  %s220 = scalar_lea.vmem %s0, 1
  %v221 = vld [vmem:[%s220] ss:$8 sm:$0xf0]
  %vm222 = vcmask 1047556
  %v223 = vsel %vm222, %v221, %v219
  %224 = vrot.lane.b32.xlu0 %v223, 32
  %v225 = vpop.permute.xlu0 %224
  %vm226 = vcmask 523520
  %227 = vst.msk [vmem:[%s1] sm:$0xff] %vm226, %v225
  %s228 = scalar_lea.vmem %s0, 129
  %v229 = vld [vmem:[%s228] ss:$8 sm:$0xf]
  %s230 = scalar_lea.vmem %s0, 129
  %v231 = vld [vmem:[%s230] ss:$8 sm:$0xf0]
  %vm232 = vcmask 1047556
  %v233 = vsel %vm232, %v231, %v229
  %234 = vrot.lane.b32.xlu0 %v233, 32
  %v235 = vpop.permute.xlu0 %234
  %vm236 = vcmask 523520
  %s237 = scalar_lea.vmem %s1, 32
  %238 = vst.msk [vmem:[%s237] sm:$0xff] %vm236, %v235
  %s239 = scalar_lea.vmem %s0, 5
  %v240 = vld [vmem:[%s239] ss:$8 sm:$0xf]
  %s241 = scalar_lea.vmem %s0, 5
  %v242 = vld [vmem:[%s241] ss:$8 sm:$0xf0]
  %vm243 = vcmask 1047556
  %v244 = vsel %vm243, %v242, %v240
  %245 = vrot.lane.b32.xlu0 %v244, 32
  %v246 = vpop.permute.xlu0 %245
  %vm247 = vcmask 523520
  %s248 = scalar_lea.vmem %s1, 8
  %249 = vst.msk [vmem:[%s248] sm:$0xff] %vm247, %v246
  %s250 = scalar_lea.vmem %s0, 133
  %v251 = vld [vmem:[%s250] ss:$8 sm:$0xf]
  %s252 = scalar_lea.vmem %s0, 133
  %v253 = vld [vmem:[%s252] ss:$8 sm:$0xf0]
  %vm254 = vcmask 1047556
  %v255 = vsel %vm254, %v253, %v251
  %256 = vrot.lane.b32.xlu0 %v255, 32
  %v257 = vpop.permute.xlu0 %256
  %vm258 = vcmask 523520
  %s259 = scalar_lea.vmem %s1, 40
  %260 = vst.msk [vmem:[%s259] sm:$0xff] %vm258, %v257
  %s261 = scalar_lea.vmem %s0, 65
  %v262 = vld [vmem:[%s261] ss:$8 sm:$0xf]
  %s263 = scalar_lea.vmem %s0, 65
  %v264 = vld [vmem:[%s263] ss:$8 sm:$0xf0]
  %vm265 = vcmask 1047556
  %v266 = vsel %vm265, %v264, %v262
  %267 = vrot.lane.b32.xlu0 %v266, 32
  %v268 = vpop.permute.xlu0 %267
  %vm269 = vcmask 523520
  %s270 = scalar_lea.vmem %s1, 16
  %271 = vst.msk [vmem:[%s270] sm:$0xff] %vm269, %v268
  %s272 = scalar_lea.vmem %s0, 193
  %v273 = vld [vmem:[%s272] ss:$8 sm:$0xf]
  %s274 = scalar_lea.vmem %s0, 193
  %v275 = vld [vmem:[%s274] ss:$8 sm:$0xf0]
  %vm276 = vcmask 1047556
  %v277 = vsel %vm276, %v275, %v273
  %278 = vrot.lane.b32.xlu0 %v277, 32
  %v279 = vpop.permute.xlu0 %278
  %vm280 = vcmask 523520
  %s281 = scalar_lea.vmem %s1, 48
  %282 = vst.msk [vmem:[%s281] sm:$0xff] %vm280, %v279
  %s283 = scalar_lea.vmem %s0, 69
  %v284 = vld [vmem:[%s283] ss:$8 sm:$0xf]
  %s285 = scalar_lea.vmem %s0, 69
  %v286 = vld [vmem:[%s285] ss:$8 sm:$0xf0]
  %vm287 = vcmask 1047556
  %v288 = vsel %vm287, %v286, %v284
  %289 = vrot.lane.b32.xlu0 %v288, 32
  %v290 = vpop.permute.xlu0 %289
  %vm291 = vcmask 523520
  %s292 = scalar_lea.vmem %s1, 24
  %293 = vst.msk [vmem:[%s292] sm:$0xff] %vm291, %v290
  %s294 = scalar_lea.vmem %s0, 197
  %v295 = vld [vmem:[%s294] ss:$8 sm:$0xf]
  %s296 = scalar_lea.vmem %s0, 197
  %v297 = vld [vmem:[%s296] ss:$8 sm:$0xf0]
  %vm298 = vcmask 1047556
  %v299 = vsel %vm298, %v297, %v295
  %300 = vrot.lane.b32.xlu0 %v299, 32
  %v301 = vpop.permute.xlu0 %300
  %vm302 = vcmask 523520
  %s303 = scalar_lea.vmem %s1, 56
  %304 = vst.msk [vmem:[%s303] sm:$0xff] %vm302, %v301

// kernel: tile.14
$region0: #{tile.14}
  %s0 = inlined_call_operand.vmem [shape: f32[14,16,16], index: 0, kind: input, shape index: {}]
  %s1 = inlined_call_operand.vmem [shape: f32[224,16], index: 1, kind: output, shape index: {}]
  %v2 = vld [vmem:[%s0] ss:$8 sm:$0xf]
  %v3 = vld [vmem:[%s0] ss:$8 sm:$0xf0]
  %vm4 = vcmask 1047556
  %v5 = vsel %vm4, %v3, %v2
  %vm6 = vcmask 130048
  %7 = vst.msk [vmem:[%s1] ss:$8 sm:$0x3] %vm6, %v5
  %s8 = scalar_lea.vmem %s1, 4294967281
  %9 = vst.msk [vmem:[%s8] ss:$8 sm:$0xc] %vm6, %v5
  %s10 = scalar_lea.vmem %s1, 4294967266
  %11 = vst.msk [vmem:[%s10] ss:$8 sm:$0x30] %vm6, %v5
  %s12 = scalar_lea.vmem %s1, 4294967251
  %13 = vst.msk [vmem:[%s12] ss:$8 sm:$0xc0] %vm6, %v5
  %s14 = scalar_lea.vmem %s0, 64
  %v15 = vld [vmem:[%s14] ss:$8 sm:$0xf]
  %s16 = scalar_lea.vmem %s0, 64
  %v17 = vld [vmem:[%s16] ss:$8 sm:$0xf0]
  %vm18 = vcmask 1047556
  %v19 = vsel %vm18, %v17, %v15
  %vm20 = vcmask 130048
  %s21 = scalar_lea.vmem %s1, 4
  %22 = vst.msk [vmem:[%s21] ss:$8 sm:$0x3] %vm20, %v19
  %s23 = scalar_lea.vmem %s1, 4294967285
  %24 = vst.msk [vmem:[%s23] ss:$8 sm:$0xc] %vm20, %v19
  %s25 = scalar_lea.vmem %s1, 4294967270
  %26 = vst.msk [vmem:[%s25] ss:$8 sm:$0x30] %vm20, %v19
  %s27 = scalar_lea.vmem %s1, 4294967255
  %28 = vst.msk [vmem:[%s27] ss:$8 sm:$0xc0] %vm20, %v19
  %s29 = scalar_lea.vmem %s0, 128
  %v30 = vld [vmem:[%s29] ss:$8 sm:$0xf]
  %s31 = scalar_lea.vmem %s0, 128
  %v32 = vld [vmem:[%s31] ss:$8 sm:$0xf0]
  %vm33 = vcmask 1047556
  %v34 = vsel %vm33, %v32, %v30
  %vm35 = vcmask 130048
  %s36 = scalar_lea.vmem %s1, 16
  %37 = vst.msk [vmem:[%s36] ss:$8 sm:$0x3] %vm35, %v34
  %s38 = scalar_lea.vmem %s1, 1
  %39 = vst.msk [vmem:[%s38] ss:$8 sm:$0xc] %vm35, %v34
  %s40 = scalar_lea.vmem %s1, 4294967282
  %41 = vst.msk [vmem:[%s40] ss:$8 sm:$0x30] %vm35, %v34
  %s42 = scalar_lea.vmem %s1, 4294967267
  %43 = vst.msk [vmem:[%s42] ss:$8 sm:$0xc0] %vm35, %v34
  %s44 = scalar_lea.vmem %s0, 192
  %v45 = vld [vmem:[%s44] ss:$8 sm:$0xf]
  %s46 = scalar_lea.vmem %s0, 192
  %v47 = vld [vmem:[%s46] ss:$8 sm:$0xf0]
  %vm48 = vcmask 1047556
  %v49 = vsel %vm48, %v47, %v45
  %vm50 = vcmask 130048
  %s51 = scalar_lea.vmem %s1, 20
  %52 = vst.msk [vmem:[%s51] ss:$8 sm:$0x3] %vm50, %v49
  %s53 = scalar_lea.vmem %s1, 5
  %54 = vst.msk [vmem:[%s53] ss:$8 sm:$0xc] %vm50, %v49
  %s55 = scalar_lea.vmem %s1, 4294967286
  %56 = vst.msk [vmem:[%s55] ss:$8 sm:$0x30] %vm50, %v49
  %s57 = scalar_lea.vmem %s1, 4294967271
  %58 = vst.msk [vmem:[%s57] ss:$8 sm:$0xc0] %vm50, %v49
  %s59 = scalar_lea.vmem %s0, 7
  %s60 = smov 3
  %v61 = vld [vmem:[%s59] ss:$16 sm:%s60]
  %s62 = scalar_lea.vmem %s0, 7
  %s63 = smov 12
  %v64 = vld [vmem:[%s62] ss:$16 sm:%s63]
  %vm65 = vcmask 1043458
  %v66 = vsel %vm65, %v64, %v61
  %s67 = scalar_lea.vmem %s0, 7
  %s68 = smov 48
  %v69 = vld [vmem:[%s67] ss:$16 sm:%s68]
  %vm70 = vcmask 1045508
  %v71 = vsel %vm70, %v69, %v66
  %s72 = scalar_lea.vmem %s0, 7
  %s73 = smov 192
  %v74 = vld [vmem:[%s72] ss:$16 sm:%s73]
  %vm75 = vcmask 1047558
  %v76 = vsel %vm75, %v74, %v71
  %77 = vrot.lane.b32.xlu0 %v76, 112
  %v78 = vpop.permute.xlu0 %77
  %vm79 = vcmask 1048448
  %80 = vst.msk [vmem:[%s1] sm:$0xff] %vm79, %v78
  %s81 = scalar_lea.vmem %s0, 135
  %s82 = smov 3
  %v83 = vld [vmem:[%s81] ss:$16 sm:%s82]
  %s84 = scalar_lea.vmem %s0, 135
  %s85 = smov 12
  %v86 = vld [vmem:[%s84] ss:$16 sm:%s85]
  %vm87 = vcmask 1043458
  %v88 = vsel %vm87, %v86, %v83
  %s89 = scalar_lea.vmem %s0, 135
  %s90 = smov 48
  %v91 = vld [vmem:[%s89] ss:$16 sm:%s90]
  %vm92 = vcmask 1045508
  %v93 = vsel %vm92, %v91, %v88
  %s94 = scalar_lea.vmem %s0, 135
  %s95 = smov 192
  %v96 = vld [vmem:[%s94] ss:$16 sm:%s95]
  %vm97 = vcmask 1047558
  %v98 = vsel %vm97, %v96, %v93
  %99 = vrot.lane.b32.xlu0 %v98, 112
  %v100 = vpop.permute.xlu0 %99
  %vm101 = vcmask 1048448
  %s102 = scalar_lea.vmem %s1, 16
  %103 = vst.msk [vmem:[%s102] sm:$0xff] %vm101, %v100
  %s104 = scalar_lea.vmem %s0, 6
  %s105 = smov 3
  %v106 = vld [vmem:[%s104] ss:$16 sm:%s105]
  %s107 = scalar_lea.vmem %s0, 6
  %s108 = smov 12
  %v109 = vld [vmem:[%s107] ss:$16 sm:%s108]
  %vm110 = vcmask 1043458
  %v111 = vsel %vm110, %v109, %v106
  %s112 = scalar_lea.vmem %s0, 6
  %s113 = smov 48
  %v114 = vld [vmem:[%s112] ss:$16 sm:%s113]
  %vm115 = vcmask 1045508
  %v116 = vsel %vm115, %v114, %v111
  %s117 = scalar_lea.vmem %s0, 6
  %s118 = smov 192
  %v119 = vld [vmem:[%s117] ss:$16 sm:%s118]
  %vm120 = vcmask 1047558
  %v121 = vsel %vm120, %v119, %v116
  %122 = vrot.lane.b32.xlu0 %v121, 96
  %v123 = vpop.permute.xlu0 %122
  %vm124 = vcmask 917248
  %125 = vst.msk [vmem:[%s1] sm:$0xff] %vm124, %v123
  %s126 = scalar_lea.vmem %s0, 134
  %s127 = smov 3
  %v128 = vld [vmem:[%s126] ss:$16 sm:%s127]
  %s129 = scalar_lea.vmem %s0, 134
  %s130 = smov 12
  %v131 = vld [vmem:[%s129] ss:$16 sm:%s130]
  %vm132 = vcmask 1043458
  %v133 = vsel %vm132, %v131, %v128
  %s134 = scalar_lea.vmem %s0, 134
  %s135 = smov 48
  %v136 = vld [vmem:[%s134] ss:$16 sm:%s135]
  %vm137 = vcmask 1045508
  %v138 = vsel %vm137, %v136, %v133
  %s139 = scalar_lea.vmem %s0, 134
  %s140 = smov 192
  %v141 = vld [vmem:[%s139] ss:$16 sm:%s140]
  %vm142 = vcmask 1047558
  %v143 = vsel %vm142, %v141, %v138
  %144 = vrot.lane.b32.xlu0 %v143, 96
  %v145 = vpop.permute.xlu0 %144
  %vm146 = vcmask 917248
  %s147 = scalar_lea.vmem %s1, 16
  %148 = vst.msk [vmem:[%s147] sm:$0xff] %vm146, %v145
  %s149 = scalar_lea.vmem %s0, 5
  %s150 = smov 3
  %v151 = vld [vmem:[%s149] ss:$16 sm:%s150]
  %s152 = scalar_lea.vmem %s0, 5
  %s153 = smov 12
  %v154 = vld [vmem:[%s152] ss:$16 sm:%s153]
  %vm155 = vcmask 1043458
  %v156 = vsel %vm155, %v154, %v151
  %s157 = scalar_lea.vmem %s0, 5
  %s158 = smov 48
  %v159 = vld [vmem:[%s157] ss:$16 sm:%s158]
  %vm160 = vcmask 1045508
  %v161 = vsel %vm160, %v159, %v156
  %s162 = scalar_lea.vmem %s0, 5
  %s163 = smov 192
  %v164 = vld [vmem:[%s162] ss:$16 sm:%s163]
  %vm165 = vcmask 1047558
  %v166 = vsel %vm165, %v164, %v161
  %167 = vrot.lane.b32.xlu0 %v166, 80
  %v168 = vpop.permute.xlu0 %167
  %vm169 = vcmask 786048
  %170 = vst.msk [vmem:[%s1] sm:$0xff] %vm169, %v168
  %s171 = scalar_lea.vmem %s0, 13
  %s172 = smov 3
  %v173 = vld [vmem:[%s171] ss:$16 sm:%s172]
  %s174 = scalar_lea.vmem %s0, 13
  %s175 = smov 12
  %v176 = vld [vmem:[%s174] ss:$16 sm:%s175]
  %vm177 = vcmask 1043458
  %v178 = vsel %vm177, %v176, %v173
  %s179 = scalar_lea.vmem %s0, 13
  %s180 = smov 48
  %v181 = vld [vmem:[%s179] ss:$16 sm:%s180]
  %vm182 = vcmask 1045508
  %v183 = vsel %vm182, %v181, %v178
  %s184 = scalar_lea.vmem %s0, 13
  %s185 = smov 192
  %v186 = vld [vmem:[%s184] ss:$16 sm:%s185]
  %vm187 = vcmask 1047558
  %v188 = vsel %vm187, %v186, %v183
  %189 = vrot.lane.b32.xlu0 %v188, 80
  %v190 = vpop.permute.xlu0 %189
  %vm191 = vcmask 786048
  %s192 = scalar_lea.vmem %s1, 8
  %193 = vst.msk [vmem:[%s192] sm:$0xff] %vm191, %v190
  %s194 = scalar_lea.vmem %s0, 133
  %s195 = smov 3
  %v196 = vld [vmem:[%s194] ss:$16 sm:%s195]
  %s197 = scalar_lea.vmem %s0, 133
  %s198 = smov 12
  %v199 = vld [vmem:[%s197] ss:$16 sm:%s198]
  %vm200 = vcmask 1043458
  %v201 = vsel %vm200, %v199, %v196
  %s202 = scalar_lea.vmem %s0, 133
  %s203 = smov 48
  %v204 = vld [vmem:[%s202] ss:$16 sm:%s203]
  %vm205 = vcmask 1045508
  %v206 = vsel %vm205, %v204, %v201
  %s207 = scalar_lea.vmem %s0, 133
  %s208 = smov 192
  %v209 = vld [vmem:[%s207] ss:$16 sm:%s208]
  %vm210 = vcmask 1047558
  %v211 = vsel %vm210, %v209, %v206
  %212 = vrot.lane.b32.xlu0 %v211, 80
  %v213 = vpop.permute.xlu0 %212
  %vm214 = vcmask 786048
  %s215 = scalar_lea.vmem %s1, 16
  %216 = vst.msk [vmem:[%s215] sm:$0xff] %vm214, %v213
  %s217 = scalar_lea.vmem %s0, 141
  %s218 = smov 3
  %v219 = vld [vmem:[%s217] ss:$16 sm:%s218]
  %s220 = scalar_lea.vmem %s0, 141
  %s221 = smov 12
  %v222 = vld [vmem:[%s220] ss:$16 sm:%s221]
  %vm223 = vcmask 1043458
  %v224 = vsel %vm223, %v222, %v219
  %s225 = scalar_lea.vmem %s0, 141
  %s226 = smov 48
  %v227 = vld [vmem:[%s225] ss:$16 sm:%s226]
  %vm228 = vcmask 1045508
  %v229 = vsel %vm228, %v227, %v224
  %s230 = scalar_lea.vmem %s0, 141
  %s231 = smov 192
  %v232 = vld [vmem:[%s230] ss:$16 sm:%s231]
  %vm233 = vcmask 1047558
  %v234 = vsel %vm233, %v232, %v229
  %235 = vrot.lane.b32.xlu0 %v234, 80
  %v236 = vpop.permute.xlu0 %235
  %vm237 = vcmask 786048
  %s238 = scalar_lea.vmem %s1, 24
  %239 = vst.msk [vmem:[%s238] sm:$0xff] %vm237, %v236
  %s240 = scalar_lea.vmem %s0, 4
  %s241 = smov 3
  %v242 = vld [vmem:[%s240] ss:$16 sm:%s241]
  %s243 = scalar_lea.vmem %s0, 4
  %s244 = smov 12
  %v245 = vld [vmem:[%s243] ss:$16 sm:%s244]
  %vm246 = vcmask 1043458
  %v247 = vsel %vm246, %v245, %v242
  %s248 = scalar_lea.vmem %s0, 4
  %s249 = smov 48
  %v250 = vld [vmem:[%s248] ss:$16 sm:%s249]
  %vm251 = vcmask 1045508
  %v252 = vsel %vm251, %v250, %v247
  %s253 = scalar_lea.vmem %s0, 4
  %s254 = smov 192
  %v255 = vld [vmem:[%s253] ss:$16 sm:%s254]
  %vm256 = vcmask 1047558
  %v257 = vsel %vm256, %v255, %v252
  %258 = vrot.lane.b32.xlu0 %v257, 64
  %v259 = vpop.permute.xlu0 %258
  %vm260 = vcmask 654848
  %261 = vst.msk [vmem:[%s1] sm:$0xff] %vm260, %v259
  %s262 = scalar_lea.vmem %s0, 12
  %s263 = smov 3
  %v264 = vld [vmem:[%s262] ss:$16 sm:%s263]
  %s265 = scalar_lea.vmem %s0, 12
  %s266 = smov 12
  %v267 = vld [vmem:[%s265] ss:$16 sm:%s266]
  %vm268 = vcmask 1043458
  %v269 = vsel %vm268, %v267, %v264
  %s270 = scalar_lea.vmem %s0, 12
  %s271 = smov 48
  %v272 = vld [vmem:[%s270] ss:$16 sm:%s271]
  %vm273 = vcmask 1045508
  %v274 = vsel %vm273, %v272, %v269
  %s275 = scalar_lea.vmem %s0, 12
  %s276 = smov 192
  %v277 = vld [vmem:[%s275] ss:$16 sm:%s276]
  %vm278 = vcmask 1047558
  %v279 = vsel %vm278, %v277, %v274
  %280 = vrot.lane.b32.xlu0 %v279, 64
  %v281 = vpop.permute.xlu0 %280
  %vm282 = vcmask 654848
  %s283 = scalar_lea.vmem %s1, 8
  %284 = vst.msk [vmem:[%s283] sm:$0xff] %vm282, %v281
  %s285 = scalar_lea.vmem %s0, 132
  %s286 = smov 3
  %v287 = vld [vmem:[%s285] ss:$16 sm:%s286]
  %s288 = scalar_lea.vmem %s0, 132
  %s289 = smov 12
  %v290 = vld [vmem:[%s288] ss:$16 sm:%s289]
  %vm291 = vcmask 1043458
  %v292 = vsel %vm291, %v290, %v287
  %s293 = scalar_lea.vmem %s0, 132
  %s294 = smov 48
  %v295 = vld [vmem:[%s293] ss:$16 sm:%s294]
  %vm296 = vcmask 1045508
  %v297 = vsel %vm296, %v295, %v292
  %s298 = scalar_lea.vmem %s0, 132
  %s299 = smov 192
  %v300 = vld [vmem:[%s298] ss:$16 sm:%s299]
  %vm301 = vcmask 1047558
  %v302 = vsel %vm301, %v300, %v297
  %303 = vrot.lane.b32.xlu0 %v302, 64
  %v304 = vpop.permute.xlu0 %303
  %vm305 = vcmask 654848
  %s306 = scalar_lea.vmem %s1, 16
  %307 = vst.msk [vmem:[%s306] sm:$0xff] %vm305, %v304
  %s308 = scalar_lea.vmem %s0, 140
  %s309 = smov 3
  %v310 = vld [vmem:[%s308] ss:$16 sm:%s309]
  %s311 = scalar_lea.vmem %s0, 140
  %s312 = smov 12
  %v313 = vld [vmem:[%s311] ss:$16 sm:%s312]
  %vm314 = vcmask 1043458
  %v315 = vsel %vm314, %v313, %v310
  %s316 = scalar_lea.vmem %s0, 140
  %s317 = smov 48
  %v318 = vld [vmem:[%s316] ss:$16 sm:%s317]
  %vm319 = vcmask 1045508
  %v320 = vsel %vm319, %v318, %v315
  %s321 = scalar_lea.vmem %s0, 140
  %s322 = smov 192
  %v323 = vld [vmem:[%s321] ss:$16 sm:%s322]
  %vm324 = vcmask 1047558
  %v325 = vsel %vm324, %v323, %v320
  %326 = vrot.lane.b32.xlu0 %v325, 64
  %v327 = vpop.permute.xlu0 %326
  %vm328 = vcmask 654848
  %s329 = scalar_lea.vmem %s1, 24
  %330 = vst.msk [vmem:[%s329] sm:$0xff] %vm328, %v327
  %s331 = scalar_lea.vmem %s0, 3
  %s332 = smov 3
  %v333 = vld [vmem:[%s331] ss:$16 sm:%s332]
  %s334 = scalar_lea.vmem %s0, 3
  %s335 = smov 12
  %v336 = vld [vmem:[%s334] ss:$16 sm:%s335]
  %vm337 = vcmask 1043458
  %v338 = vsel %vm337, %v336, %v333
  %s339 = scalar_lea.vmem %s0, 3
  %s340 = smov 48
  %v341 = vld [vmem:[%s339] ss:$16 sm:%s340]
  %vm342 = vcmask 1045508
  %v343 = vsel %vm342, %v341, %v338
  %s344 = scalar_lea.vmem %s0, 3
  %s345 = smov 192
  %v346 = vld [vmem:[%s344] ss:$16 sm:%s345]
  %vm347 = vcmask 1047558
  %v348 = vsel %vm347, %v346, %v343
  %349 = vrot.lane.b32.xlu0 %v348, 48
  %v350 = vpop.permute.xlu0 %349
  %vm351 = vcmask 523648
  %352 = vst.msk [vmem:[%s1] sm:$0xff] %vm351, %v350
  %s353 = scalar_lea.vmem %s0, 11
  %s354 = smov 3
  %v355 = vld [vmem:[%s353] ss:$16 sm:%s354]
  %s356 = scalar_lea.vmem %s0, 11
  %s357 = smov 12
  %v358 = vld [vmem:[%s356] ss:$16 sm:%s357]
  %vm359 = vcmask 1043458
  %v360 = vsel %vm359, %v358, %v355
  %s361 = scalar_lea.vmem %s0, 11
  %s362 = smov 48
  %v363 = vld [vmem:[%s361] ss:$16 sm:%s362]
  %vm364 = vcmask 1045508
  %v365 = vsel %vm364, %v363, %v360
  %s366 = scalar_lea.vmem %s0, 11
  %s367 = smov 192
  %v368 = vld [vmem:[%s366] ss:$16 sm:%s367]
  %vm369 = vcmask 1047558
  %v370 = vsel %vm369, %v368, %v365
  %371 = vrot.lane.b32.xlu0 %v370, 48
  %v372 = vpop.permute.xlu0 %371
  %vm373 = vcmask 523648
  %s374 = scalar_lea.vmem %s1, 8
  %375 = vst.msk [vmem:[%s374] sm:$0xff] %vm373, %v372
  %s376 = scalar_lea.vmem %s0, 131
  %s377 = smov 3
  %v378 = vld [vmem:[%s376] ss:$16 sm:%s377]
  %s379 = scalar_lea.vmem %s0, 131
  %s380 = smov 12
  %v381 = vld [vmem:[%s379] ss:$16 sm:%s380]
  %vm382 = vcmask 1043458
  %v383 = vsel %vm382, %v381, %v378
  %s384 = scalar_lea.vmem %s0, 131
  %s385 = smov 48
  %v386 = vld [vmem:[%s384] ss:$16 sm:%s385]
  %vm387 = vcmask 1045508
  %v388 = vsel %vm387, %v386, %v383
  %s389 = scalar_lea.vmem %s0, 131
  %s390 = smov 192
  %v391 = vld [vmem:[%s389] ss:$16 sm:%s390]
  %vm392 = vcmask 1047558
  %v393 = vsel %vm392, %v391, %v388
  %394 = vrot.lane.b32.xlu0 %v393, 48
  %v395 = vpop.permute.xlu0 %394
  %vm396 = vcmask 523648
  %s397 = scalar_lea.vmem %s1, 16
  %398 = vst.msk [vmem:[%s397] sm:$0xff] %vm396, %v395
  %s399 = scalar_lea.vmem %s0, 139
  %s400 = smov 3
  %v401 = vld [vmem:[%s399] ss:$16 sm:%s400]
  %s402 = scalar_lea.vmem %s0, 139
  %s403 = smov 12
  %v404 = vld [vmem:[%s402] ss:$16 sm:%s403]
  %vm405 = vcmask 1043458
  %v406 = vsel %vm405, %v404, %v401
  %s407 = scalar_lea.vmem %s0, 139
  %s408 = smov 48
  %v409 = vld [vmem:[%s407] ss:$16 sm:%s408]
  %vm410 = vcmask 1045508
  %v411 = vsel %vm410, %v409, %v406
  %s412 = scalar_lea.vmem %s0, 139
  %s413 = smov 192
  %v414 = vld [vmem:[%s412] ss:$16 sm:%s413]
  %vm415 = vcmask 1047558
  %v416 = vsel %vm415, %v414, %v411
  %417 = vrot.lane.b32.xlu0 %v416, 48
  %v418 = vpop.permute.xlu0 %417
  %vm419 = vcmask 523648
  %s420 = scalar_lea.vmem %s1, 24
  %421 = vst.msk [vmem:[%s420] sm:$0xff] %vm419, %v418
  %s422 = scalar_lea.vmem %s0, 2
  %s423 = smov 3
  %v424 = vld [vmem:[%s422] ss:$16 sm:%s423]
  %s425 = scalar_lea.vmem %s0, 2
  %s426 = smov 12
  %v427 = vld [vmem:[%s425] ss:$16 sm:%s426]
  %vm428 = vcmask 1043458
  %v429 = vsel %vm428, %v427, %v424
  %s430 = scalar_lea.vmem %s0, 2
  %s431 = smov 48
  %v432 = vld [vmem:[%s430] ss:$16 sm:%s431]
  %vm433 = vcmask 1045508
  %v434 = vsel %vm433, %v432, %v429
  %s435 = scalar_lea.vmem %s0, 2
  %s436 = smov 192
  %v437 = vld [vmem:[%s435] ss:$16 sm:%s436]
  %vm438 = vcmask 1047558
  %v439 = vsel %vm438, %v437, %v434
  %440 = vrot.lane.b32.xlu0 %v439, 32
  %v441 = vpop.permute.xlu0 %440
  %vm442 = vcmask 392448
  %443 = vst.msk [vmem:[%s1] sm:$0xff] %vm442, %v441
  %s444 = scalar_lea.vmem %s0, 10
  %s445 = smov 3
  %v446 = vld [vmem:[%s444] ss:$16 sm:%s445]
  %s447 = scalar_lea.vmem %s0, 10
  %s448 = smov 12
  %v449 = vld [vmem:[%s447] ss:$16 sm:%s448]
  %vm450 = vcmask 1043458
  %v451 = vsel %vm450, %v449, %v446
  %s452 = scalar_lea.vmem %s0, 10
  %s453 = smov 48
  %v454 = vld [vmem:[%s452] ss:$16 sm:%s453]
  %vm455 = vcmask 1045508
  %v456 = vsel %vm455, %v454, %v451
  %s457 = scalar_lea.vmem %s0, 10
  %s458 = smov 192
  %v459 = vld [vmem:[%s457] ss:$16 sm:%s458]
  %vm460 = vcmask 1047558
  %v461 = vsel %vm460, %v459, %v456
  %462 = vrot.lane.b32.xlu0 %v461, 32
  %v463 = vpop.permute.xlu0 %462
  %vm464 = vcmask 392448
  %s465 = scalar_lea.vmem %s1, 8
  %466 = vst.msk [vmem:[%s465] sm:$0xff] %vm464, %v463
  %s467 = scalar_lea.vmem %s0, 130
  %s468 = smov 3
  %v469 = vld [vmem:[%s467] ss:$16 sm:%s468]
  %s470 = scalar_lea.vmem %s0, 130
  %s471 = smov 12
  %v472 = vld [vmem:[%s470] ss:$16 sm:%s471]
  %vm473 = vcmask 1043458
  %v474 = vsel %vm473, %v472, %v469
  %s475 = scalar_lea.vmem %s0, 130
  %s476 = smov 48
  %v477 = vld [vmem:[%s475] ss:$16 sm:%s476]
  %vm478 = vcmask 1045508
  %v479 = vsel %vm478, %v477, %v474
  %s480 = scalar_lea.vmem %s0, 130
  %s481 = smov 192
  %v482 = vld [vmem:[%s480] ss:$16 sm:%s481]
  %vm483 = vcmask 1047558
  %v484 = vsel %vm483, %v482, %v479
  %485 = vrot.lane.b32.xlu0 %v484, 32
  %v486 = vpop.permute.xlu0 %485
  %vm487 = vcmask 392448
  %s488 = scalar_lea.vmem %s1, 16
  %489 = vst.msk [vmem:[%s488] sm:$0xff] %vm487, %v486
  %s490 = scalar_lea.vmem %s0, 138
  %s491 = smov 3
  %v492 = vld [vmem:[%s490] ss:$16 sm:%s491]
  %s493 = scalar_lea.vmem %s0, 138
  %s494 = smov 12
  %v495 = vld [vmem:[%s493] ss:$16 sm:%s494]
  %vm496 = vcmask 1043458
  %v497 = vsel %vm496, %v495, %v492
  %s498 = scalar_lea.vmem %s0, 138
  %s499 = smov 48
  %v500 = vld [vmem:[%s498] ss:$16 sm:%s499]
  %vm501 = vcmask 1045508
  %v502 = vsel %vm501, %v500, %v497
  %s503 = scalar_lea.vmem %s0, 138
  %s504 = smov 192
  %v505 = vld [vmem:[%s503] ss:$16 sm:%s504]
  %vm506 = vcmask 1047558
  %v507 = vsel %vm506, %v505, %v502
  %508 = vrot.lane.b32.xlu0 %v507, 32
  %v509 = vpop.permute.xlu0 %508
  %vm510 = vcmask 392448
  %s511 = scalar_lea.vmem %s1, 24
  %512 = vst.msk [vmem:[%s511] sm:$0xff] %vm510, %v509
  %s513 = scalar_lea.vmem %s0, 1
  %s514 = smov 3
  %v515 = vld [vmem:[%s513] ss:$16 sm:%s514]
  %s516 = scalar_lea.vmem %s0, 1
  %s517 = smov 12
  %v518 = vld [vmem:[%s516] ss:$16 sm:%s517]
  %vm519 = vcmask 1043458
  %v520 = vsel %vm519, %v518, %v515
  %s521 = scalar_lea.vmem %s0, 1
  %s522 = smov 48
  %v523 = vld [vmem:[%s521] ss:$16 sm:%s522]
  %vm524 = vcmask 1045508
  %v525 = vsel %vm524, %v523, %v520
  %s526 = scalar_lea.vmem %s0, 1
  %s527 = smov 192
  %v528 = vld [vmem:[%s526] ss:$16 sm:%s527]
  %vm529 = vcmask 1047558
  %v530 = vsel %vm529, %v528, %v525
  %531 = vrot.lane.b32.xlu0 %v530, 16
  %v532 = vpop.permute.xlu0 %531
  %vm533 = vcmask 261248
  %534 = vst.msk [vmem:[%s1] sm:$0xff] %vm533, %v532
  %s535 = scalar_lea.vmem %s0, 9
  %s536 = smov 3
  %v537 = vld [vmem:[%s535] ss:$16 sm:%s536]
  %s538 = scalar_lea.vmem %s0, 9
  %s539 = smov 12
  %v540 = vld [vmem:[%s538] ss:$16 sm:%s539]
  %vm541 = vcmask 1043458
  %v542 = vsel %vm541, %v540, %v537
  %s543 = scalar_lea.vmem %s0, 9
  %s544 = smov 48
  %v545 = vld [vmem:[%s543] ss:$16 sm:%s544]
  %vm546 = vcmask 1045508
  %v547 = vsel %vm546, %v545, %v542
  %s548 = scalar_lea.vmem %s0, 9
  %s549 = smov 192
  %v550 = vld [vmem:[%s548] ss:$16 sm:%s549]
  %vm551 = vcmask 1047558
  %v552 = vsel %vm551, %v550, %v547
  %553 = vrot.lane.b32.xlu0 %v552, 16
  %v554 = vpop.permute.xlu0 %553
  %vm555 = vcmask 261248
  %s556 = scalar_lea.vmem %s1, 8
  %557 = vst.msk [vmem:[%s556] sm:$0xff] %vm555, %v554
  %s558 = scalar_lea.vmem %s0, 129
  %s559 = smov 3
  %v560 = vld [vmem:[%s558] ss:$16 sm:%s559]
  %s561 = scalar_lea.vmem %s0, 129
  %s562 = smov 12
  %v563 = vld [vmem:[%s561] ss:$16 sm:%s562]
  %vm564 = vcmask 1043458
  %v565 = vsel %vm564, %v563, %v560
  %s566 = scalar_lea.vmem %s0, 129
  %s567 = smov 48
  %v568 = vld [vmem:[%s566] ss:$16 sm:%s567]
  %vm569 = vcmask 1045508
  %v570 = vsel %vm569, %v568, %v565
  %s571 = scalar_lea.vmem %s0, 129
  %s572 = smov 192
  %v573 = vld [vmem:[%s571] ss:$16 sm:%s572]
  %vm574 = vcmask 1047558
  %v575 = vsel %vm574, %v573, %v570
  %576 = vrot.lane.b32.xlu0 %v575, 16
  %v577 = vpop.permute.xlu0 %576
  %vm578 = vcmask 261248
  %s579 = scalar_lea.vmem %s1, 16
  %580 = vst.msk [vmem:[%s579] sm:$0xff] %vm578, %v577
  %s581 = scalar_lea.vmem %s0, 137
  %s582 = smov 3
  %v583 = vld [vmem:[%s581] ss:$16 sm:%s582]
  %s584 = scalar_lea.vmem %s0, 137
  %s585 = smov 12
  %v586 = vld [vmem:[%s584] ss:$16 sm:%s585]
  %vm587 = vcmask 1043458
  %v588 = vsel %vm587, %v586, %v583
  %s589 = scalar_lea.vmem %s0, 137
  %s590 = smov 48
  %v591 = vld [vmem:[%s589] ss:$16 sm:%s590]
  %vm592 = vcmask 1045508
  %v593 = vsel %vm592, %v591, %v588
  %s594 = scalar_lea.vmem %s0, 137
  %s595 = smov 192
  %v596 = vld [vmem:[%s594] ss:$16 sm:%s595]
  %vm597 = vcmask 1047558
  %v598 = vsel %vm597, %v596, %v593
  %599 = vrot.lane.b32.xlu0 %v598, 16
  %v600 = vpop.permute.xlu0 %599
  %vm601 = vcmask 261248
  %s602 = scalar_lea.vmem %s1, 24
  %603 = vst.msk [vmem:[%s602] sm:$0xff] %vm601, %v600

// kernel: _net_forward.1
$region0: #{_net_forward.1}
  #allocation0 [shape = 'u32[]', space=smem, size = 0x4, offset = 0x4, fixed_abs, tag = 'smem constant byte address 0x4 - core index']
  #allocation1 [shape = 'u32[144,128]{1,0:T(1,128)}', space=vmem, size = 0x12000, scoped, tag = 'internal scratch']
  #allocation2 [shape = 'f32[2,2,9,224]{3,2,1,0:T(8,128)}', space=vmem, size = 0x10000, scoped, tag = 'scratch operand']
  %s0 = inlined_call_operand.vmem [shape: f32[2,5,2,7,32], index: 0, kind: input, shape index: {}]
  %s1 = inlined_call_operand.vmem [shape: f32[5,32,224], index: 1, kind: input, shape index: {}]
  %s2 = inlined_call_operand.vmem [shape: f32[1,16], index: 2, kind: input, shape index: {}]
  %s3 = inlined_call_operand.vmem [shape: f32[1,16], index: 3, kind: input, shape index: {}]
  %s4 = inlined_call_operand.vmem [shape: f32[5,224,224], index: 4, kind: input, shape index: {}]
  %s5 = inlined_call_operand.vmem [shape: f32[1,32], index: 5, kind: input, shape index: {}]
  %s6 = inlined_call_operand.vmem [shape: f32[1,32], index: 6, kind: input, shape index: {}]
  %s7 = inlined_call_operand.vmem [shape: f32[224,16], index: 7, kind: input, shape index: {}]
  %s8 = inlined_call_operand.vmem [shape: f32[16,224], index: 8, kind: input, shape index: {}]
  %s9 = inlined_call_operand.vmem [shape: f32[224,32], index: 9, kind: input, shape index: {}]
  %s10 = inlined_call_operand.vmem [shape: f32[32,224], index: 10, kind: input, shape index: {}]
  %s11 = inlined_call_operand.vmem [shape: f32[32,10], index: 11, kind: input, shape index: {}]
  %s12 = inlined_call_operand.vmem [shape: f32[1,10], index: 12, kind: input, shape index: {}]
  %s13 = inlined_call_operand.hbm [shape: f32[2,10], index: 13, kind: output, shape index: {}]
  %s14 = sld [smem:[#allocation0]]
  $region62: #{_net_forward.1} parent=0
    _
  %s16 = ssub.s32 1, %s14
  %s17 = scalar_select 0, %s16, %s14
  $region1: #{_net_forward.1} parent=0
    #allocation3 [shape = 'u8[1024]{0}', space=vmem, size = 0x400, scoped, tag = 'output window, operand 0, single buffered']
    #allocation4 [shape = 's32[1]{0}', space=sflag, size = 0x4, scoped, tag = 'scoped memory for _net_forward.1']
    %18 = vsyncpa [#allocation4], 0
    // Predicated region
    $region2: #{_net_forward.1} parent=1 // pred_check
      _
    $region3: #{_net_forward.1} parent=1 // pred_check_branch
      %20 = sbr.rel (0) target = $region5
    $region4: #{_net_forward.1} parent=1 // pred_region
      _
    $region5: #{_net_forward.1} parent=1 // pred_fallthru
      _
    // Predicated region
    $region6: #{_net_forward.1} parent=1 // pred_check
      _
    $region7: #{_net_forward.1} parent=1 // pred_check_branch
      %22 = sbr.rel (0) target = $region9
    $region8: #{_net_forward.1} parent=1 // pred_region
      _
    $region9: #{_net_forward.1} parent=1 // pred_fallthru
      _
    // Predicated region
    $region10: #{_net_forward.1} parent=1 // pred_check
      _
    $region11: #{_net_forward.1} parent=1 // pred_check_branch
      %24 = sbr.rel (0) target = $region13
    $region12: #{_net_forward.1} parent=1 // pred_region
      _
    $region13: #{_net_forward.1} parent=1 // pred_fallthru
      _
    // Predicated region
    $region14: #{_net_forward.1} parent=1 // pred_check
      _
    $region15: #{_net_forward.1} parent=1 // pred_check_branch
      %26 = sbr.rel (0) target = $region17
    $region16: #{_net_forward.1} parent=1 // pred_region
      _
    $region17: #{_net_forward.1} parent=1 // pred_fallthru
      _
    // Predicated region
    $region18: #{_net_forward.1} parent=1 // pred_check
      _
    $region19: #{_net_forward.1} parent=1 // pred_check_branch
      %28 = sbr.rel (0) target = $region21
    $region20: #{_net_forward.1} parent=1 // pred_region
      _
    $region21: #{_net_forward.1} parent=1 // pred_fallthru
      _
    // Predicated region
    $region22: #{_net_forward.1} parent=1 // pred_check
      _
    $region23: #{_net_forward.1} parent=1 // pred_check_branch
      %30 = sbr.rel (0) target = $region25
    $region24: #{_net_forward.1} parent=1 // pred_region
      _
    $region25: #{_net_forward.1} parent=1 // pred_fallthru
      _
    // Predicated region
    $region26: #{_net_forward.1} parent=1 // pred_check
      _
    $region27: #{_net_forward.1} parent=1 // pred_check_branch
      %32 = sbr.rel (0) target = $region29
    $region28: #{_net_forward.1} parent=1 // pred_region
      _
    $region29: #{_net_forward.1} parent=1 // pred_fallthru
      _
    // Predicated region
    $region30: #{_net_forward.1} parent=1 // pred_check
      _
    $region31: #{_net_forward.1} parent=1 // pred_check_branch
      %34 = sbr.rel (0) target = $region33
    $region32: #{_net_forward.1} parent=1 // pred_region
      _
    $region33: #{_net_forward.1} parent=1 // pred_fallthru
      _
    // Predicated region
    $region34: #{_net_forward.1} parent=1 // pred_check
      _
    $region35: #{_net_forward.1} parent=1 // pred_check_branch
      %36 = sbr.rel (0) target = $region37
    $region36: #{_net_forward.1} parent=1 // pred_region
      _
    $region37: #{_net_forward.1} parent=1 // pred_fallthru
      _
    // Predicated region
    $region38: #{_net_forward.1} parent=1 // pred_check
      _
    $region39: #{_net_forward.1} parent=1 // pred_check_branch
      %38 = sbr.rel (0) target = $region41
    $region40: #{_net_forward.1} parent=1 // pred_region
      _
    $region41: #{_net_forward.1} parent=1 // pred_fallthru
      _
    // Predicated region
    $region42: #{_net_forward.1} parent=1 // pred_check
      _
    $region43: #{_net_forward.1} parent=1 // pred_check_branch
      %40 = sbr.rel (0) target = $region45
    $region44: #{_net_forward.1} parent=1 // pred_region
      _
    $region45: #{_net_forward.1} parent=1 // pred_fallthru
      _
    // Predicated region
    $region46: #{_net_forward.1} parent=1 // pred_check
      _
    $region47: #{_net_forward.1} parent=1 // pred_check_branch
      %42 = sbr.rel (0) target = $region49
    $region48: #{_net_forward.1} parent=1 // pred_region
      _
    $region49: #{_net_forward.1} parent=1 // pred_fallthru
      _
    // Predicated region
    $region50: #{_net_forward.1} parent=1 // pred_check
      _
    $region51: #{_net_forward.1} parent=1 // pred_check_branch
      %44 = sbr.rel (0) target = $region53
    $region52: #{_net_forward.1} parent=1 // pred_region
      _
    $region53: #{_net_forward.1} parent=1 // pred_fallthru
      _
    %v45 = vld [vmem:[%s0] sm:$0x7f]
    %v46 = vld [vmem:[%s1] sm:$0xff]
    %v47 = vld [vmem:[%s1 + $0x8] sm:$0xff]
    %v48 = vld [vmem:[%s1 + $0x10] sm:$0xff]
    %v49 = vld [vmem:[%s1 + $0x18] sm:$0xff]
    %v50 = vld [vmem:[%s1 + $0x20] sm:$0xff]
    %v51 = vld [vmem:[%s1 + $0x28] sm:$0xff]
    %v52 = vld [vmem:[%s1 + $0x30] sm:$0xff]
    %v53 = vld [vmem:[%s1 + $0x38] sm:$0xff]
    %s54 = scalar_lea.vmem %s0, 16
    %v55 = vld [vmem:[%s54] sm:$0x7f]
    %s56 = scalar_lea.vmem %s1, 64
    %v57 = vld [vmem:[%s56] sm:$0xff]
    %v58 = vld [vmem:[%s56 + $0x8] sm:$0xff]
    %v59 = vld [vmem:[%s56 + $0x10] sm:$0xff]
    %v60 = vld [vmem:[%s56 + $0x18] sm:$0xff]
    %v61 = vld [vmem:[%s56 + $0x20] sm:$0xff]
    %v62 = vld [vmem:[%s56 + $0x28] sm:$0xff]
    %v63 = vld [vmem:[%s56 + $0x30] sm:$0xff]
    %v64 = vld [vmem:[%s56 + $0x38] sm:$0xff]
    %vm65 = vcmask 261120
    %v67 = vsel %vm65, %v55, 0
    %69 = vmatprep.subr.mxu0 %v58
    %70 = vmatpush1.msra.mxu0 %v57
    %71 = vmatprep.subr.mxu0 %v60
    %72 = vmatpush1.msra.mxu0 %v59
    %73 = vmatprep.subr.mxu0 %v62
    %74 = vmatpush1.msra.mxu0 %v61
    %75 = vmatprep.subr.mxu0 %v64
    %76 = vmatpush1.msra.mxu0 %v63
    %77 = vmatprep.subr.mxu0 0.0
    %78 = vmatpush1.msra.mxu0 0.0
    %79 = vmatprep.subr.mxu0 0.0
    %80 = vmatpush1.msra.mxu0 0.0
    %81 = vmatprep.subr.mxu0 0.0
    %82 = vmatpush1.msra.mxu0 0.0
    %83 = vmatprep.subr.mxu0 0.0
    %84 = vmatpush1.msra.mxu0 0.0
    %85 = vmatprep.subr.mxu0 0.0
    %86 = vmatpush1.msra.mxu0 0.0
    %87 = vmatprep.subr.mxu0 0.0
    %88 = vmatpush1.msra.mxu0 0.0
    %89 = vmatprep.subr.mxu0 0.0
    %90 = vmatpush1.msra.mxu0 0.0
    %91 = vmatprep.subr.mxu0 0.0
    %92 = vmatpush1.msra.mxu0 0.0
    %93 = vmatprep.subr.mxu0 0.0
    %94 = vmatpush1.msra.mxu0 0.0
    %95 = vmatprep.subr.mxu0 0.0
    %96 = vmatpush1.msra.mxu0 0.0
    %97 = vmatprep.subr.mxu0 0.0
    %98 = vmatpush1.msra.mxu0 0.0
    %99 = vmatprep.subr.mxu0 0.0
    %100 = vmatpush1.msra.mxu0 0.0
    %101 = vmatprep.subr.mxu0 0.0
    %102 = vmatpush1.msra.mxu0 0.0
    %103 = vmatprep.subr.mxu0 0.0
    %104 = vmatpush1.msra.mxu0 0.0
    %105 = vmatprep.subr.mxu0 0.0
    %106 = vmatpush1.msra.mxu0 0.0
    %107 = vmatprep.subr.mxu0 0.0
    %108 = vmatpush1.msra.mxu0 0.0
    %109 = vmatprep.subr.mxu0 0.0
    %110 = vmatpush1.msra.mxu0 0.0
    %111 = vmatprep.subr.mxu0 0.0
    %112 = vmatpush1.msra.mxu0 0.0
    %113 = vmatprep.subr.mxu0 0.0
    %114 = vmatpush1.msra.mxu0 0.0
    %115 = vmatprep.subr.mxu0 0.0
    %116 = vmatpush1.msra.mxu0 0.0
    %117 = vmatprep.subr.mxu0 0.0
    %118 = vmatpush1.msra.mxu0 0.0
    %119 = vmatprep.subr.mxu0 0.0
    %120 = vmatpush1.msra.mxu0 0.0
    %121 = vmatprep.subr.mxu0 0.0
    %122 = vmatpush1.msra.mxu0 0.0
    %123 = vmatprep.subr.mxu0 0.0
    %124 = vmatpush1.msra.mxu0 0.0
    %125 = vmatprep.subr.mxu0 0.0
    %126 = vmatpush1.msra.mxu0 0.0
    %127 = vmatprep.subr.mxu0 0.0
    %128 = vmatpush1.msra.mxu0 0.0
    %129 = vmatprep.subr.mxu0 0.0
    %130 = vmatpush1.msra.mxu0 0.0
    %131 = vmatprep.subr.mxu0 0.0
    %132 = vmatpush1.msra.mxu0 0.0
    %133 = vmatprep.mubr.f32.mxu0 0.0
    %134 = vmatmul.mubr.f32.gmra.mrb[0].mxu0 %v67
    %v135 = vpop.f32.mrb[0].mxu0
    %v136 = vadd.f32 0.0, %v135
    %v137 = vpop.f32.mrb[0].mxu0
    %v138 = vadd.f32 0.0, %v137
    %139 = vdwg.mxu0
    %v141 = vsel %vm65, %v45, 0
    %143 = vmatprep.subr.mxu0 %v47
    %144 = vmatpush1.msra.mxu0 %v46
    %145 = vmatprep.subr.mxu0 %v49
    %146 = vmatpush1.msra.mxu0 %v48
    %147 = vmatprep.subr.mxu0 %v51
    %148 = vmatpush1.msra.mxu0 %v50
    %149 = vmatprep.subr.mxu0 %v53
    %150 = vmatpush1.msra.mxu0 %v52
    %151 = vmatprep.subr.mxu0 0.0
    %152 = vmatpush1.msra.mxu0 0.0
    %153 = vmatprep.subr.mxu0 0.0
    %154 = vmatpush1.msra.mxu0 0.0
    %155 = vmatprep.subr.mxu0 0.0
    %156 = vmatpush1.msra.mxu0 0.0
    %157 = vmatprep.subr.mxu0 0.0
    %158 = vmatpush1.msra.mxu0 0.0
    %159 = vmatprep.subr.mxu0 0.0
    %160 = vmatpush1.msra.mxu0 0.0
    %161 = vmatprep.subr.mxu0 0.0
    %162 = vmatpush1.msra.mxu0 0.0
    %163 = vmatprep.subr.mxu0 0.0
    %164 = vmatpush1.msra.mxu0 0.0
    %165 = vmatprep.subr.mxu0 0.0
    %166 = vmatpush1.msra.mxu0 0.0
    %167 = vmatprep.subr.mxu0 0.0
    %168 = vmatpush1.msra.mxu0 0.0
    %169 = vmatprep.subr.mxu0 0.0
    %170 = vmatpush1.msra.mxu0 0.0
    %171 = vmatprep.subr.mxu0 0.0
    %172 = vmatpush1.msra.mxu0 0.0
    %173 = vmatprep.subr.mxu0 0.0
    %174 = vmatpush1.msra.mxu0 0.0
    %175 = vmatprep.subr.mxu0 0.0
    %176 = vmatpush1.msra.mxu0 0.0
    %177 = vmatprep.subr.mxu0 0.0
    %178 = vmatpush1.msra.mxu0 0.0
    %179 = vmatprep.subr.mxu0 0.0
    %180 = vmatpush1.msra.mxu0 0.0
    %181 = vmatprep.subr.mxu0 0.0
    %182 = vmatpush1.msra.mxu0 0.0
    %183 = vmatprep.subr.mxu0 0.0
    %184 = vmatpush1.msra.mxu0 0.0
    %185 = vmatprep.subr.mxu0 0.0
    %186 = vmatpush1.msra.mxu0 0.0
    %187 = vmatprep.subr.mxu0 0.0
    %188 = vmatpush1.msra.mxu0 0.0
    %189 = vmatprep.subr.mxu0 0.0
    %190 = vmatpush1.msra.mxu0 0.0
    %191 = vmatprep.subr.mxu0 0.0
    %192 = vmatpush1.msra.mxu0 0.0
    %193 = vmatprep.subr.mxu0 0.0
    %194 = vmatpush1.msra.mxu0 0.0
    %195 = vmatprep.subr.mxu0 0.0
    %196 = vmatpush1.msra.mxu0 0.0
    %197 = vmatprep.subr.mxu0 0.0
    %198 = vmatpush1.msra.mxu0 0.0
    %199 = vmatprep.subr.mxu0 0.0
    %200 = vmatpush1.msra.mxu0 0.0
    %201 = vmatprep.subr.mxu0 0.0
    %202 = vmatpush1.msra.mxu0 0.0
    %203 = vmatprep.subr.mxu0 0.0
    %204 = vmatpush1.msra.mxu0 0.0
    %205 = vmatprep.subr.mxu0 0.0
    %206 = vmatpush1.msra.mxu0 0.0
    %207 = vmatprep.mubr.f32.mxu0 0.0
    %208 = vmatmul.mubr.f32.gmra.mrb[0].mxu0 %v141
    %v209 = vpop.f32.mrb[0].mxu0
    %v210 = vadd.f32 %v136, %v209
    %v211 = vpop.f32.mrb[0].mxu0
    %v212 = vadd.f32 %v138, %v211
    %213 = vdwg.mxu0
    %s214 = scalar_lea.vmem %s0, 32
    %v215 = vld [vmem:[%s214] sm:$0x7f]
    %s216 = scalar_lea.vmem %s1, 128
    %v217 = vld [vmem:[%s216] sm:$0xff]
    %v218 = vld [vmem:[%s216 + $0x8] sm:$0xff]
    %v219 = vld [vmem:[%s216 + $0x10] sm:$0xff]
    %v220 = vld [vmem:[%s216 + $0x18] sm:$0xff]
    %v221 = vld [vmem:[%s216 + $0x20] sm:$0xff]
    %v222 = vld [vmem:[%s216 + $0x28] sm:$0xff]
    %v223 = vld [vmem:[%s216 + $0x30] sm:$0xff]
    %v224 = vld [vmem:[%s216 + $0x38] sm:$0xff]
    %v226 = vsel %vm65, %v215, 0
    %228 = vmatprep.subr.mxu0 %v218
    %229 = vmatpush1.msra.mxu0 %v217
    %230 = vmatprep.subr.mxu0 %v220
    %231 = vmatpush1.msra.mxu0 %v219
    %232 = vmatprep.subr.mxu0 %v222
    %233 = vmatpush1.msra.mxu0 %v221
    %234 = vmatprep.subr.mxu0 %v224
    %235 = vmatpush1.msra.mxu0 %v223
    %236 = vmatprep.subr.mxu0 0.0
    %237 = vmatpush1.msra.mxu0 0.0
    %238 = vmatprep.subr.mxu0 0.0
    %239 = vmatpush1.msra.mxu0 0.0
    %240 = vmatprep.subr.mxu0 0.0
    %241 = vmatpush1.msra.mxu0 0.0
    %242 = vmatprep.subr.mxu0 0.0
    %243 = vmatpush1.msra.mxu0 0.0
    %244 = vmatprep.subr.mxu0 0.0
    %245 = vmatpush1.msra.mxu0 0.0
    %246 = vmatprep.subr.mxu0 0.0
    %247 = vmatpush1.msra.mxu0 0.0
    %248 = vmatprep.subr.mxu0 0.0
    %249 = vmatpush1.msra.mxu0 0.0
    %250 = vmatprep.subr.mxu0 0.0
    %251 = vmatpush1.msra.mxu0 0.0
    %252 = vmatprep.subr.mxu0 0.0
    %253 = vmatpush1.msra.mxu0 0.0
    %254 = vmatprep.subr.mxu0 0.0
    %255 = vmatpush1.msra.mxu0 0.0
    %256 = vmatprep.subr.mxu0 0.0
    %257 = vmatpush1.msra.mxu0 0.0
    %258 = vmatprep.subr.mxu0 0.0
    %259 = vmatpush1.msra.mxu0 0.0
    %260 = vmatprep.subr.mxu0 0.0
    %261 = vmatpush1.msra.mxu0 0.0
    %262 = vmatprep.subr.mxu0 0.0
    %263 = vmatpush1.msra.mxu0 0.0
    %264 = vmatprep.subr.mxu0 0.0
    %265 = vmatpush1.msra.mxu0 0.0
    %266 = vmatprep.subr.mxu0 0.0
    %267 = vmatpush1.msra.mxu0 0.0
    %268 = vmatprep.subr.mxu0 0.0
    %269 = vmatpush1.msra.mxu0 0.0
    %270 = vmatprep.subr.mxu0 0.0
    %271 = vmatpush1.msra.mxu0 0.0
    %272 = vmatprep.subr.mxu0 0.0
    %273 = vmatpush1.msra.mxu0 0.0
    %274 = vmatprep.subr.mxu0 0.0
    %275 = vmatpush1.msra.mxu0 0.0
    %276 = vmatprep.subr.mxu0 0.0
    %277 = vmatpush1.msra.mxu0 0.0
    %278 = vmatprep.subr.mxu0 0.0
    %279 = vmatpush1.msra.mxu0 0.0
    %280 = vmatprep.subr.mxu0 0.0
    %281 = vmatpush1.msra.mxu0 0.0
    %282 = vmatprep.subr.mxu0 0.0
    %283 = vmatpush1.msra.mxu0 0.0
    %284 = vmatprep.subr.mxu0 0.0
    %285 = vmatpush1.msra.mxu0 0.0
    %286 = vmatprep.subr.mxu0 0.0
    %287 = vmatpush1.msra.mxu0 0.0
    %288 = vmatprep.subr.mxu0 0.0
    %289 = vmatpush1.msra.mxu0 0.0
    %290 = vmatprep.subr.mxu0 0.0
    %291 = vmatpush1.msra.mxu0 0.0
    %292 = vmatprep.mubr.f32.mxu0 0.0
    %293 = vmatmul.mubr.f32.gmra.mrb[0].mxu0 %v226
    %v294 = vpop.f32.mrb[0].mxu0
    %v295 = vadd.f32 0.0, %v294
    %v296 = vpop.f32.mrb[0].mxu0
    %v297 = vadd.f32 0.0, %v296
    %298 = vdwg.mxu0
    %v299 = vadd.f32 %v210, %v295
    %v300 = vadd.f32 %v212, %v297
    %s301 = scalar_lea.vmem %s0, 48
    %v302 = vld [vmem:[%s301] sm:$0x7f]
    %s303 = scalar_lea.vmem %s1, 192
    %v304 = vld [vmem:[%s303] sm:$0xff]
    %v305 = vld [vmem:[%s303 + $0x8] sm:$0xff]
    %v306 = vld [vmem:[%s303 + $0x10] sm:$0xff]
    %v307 = vld [vmem:[%s303 + $0x18] sm:$0xff]
    %v308 = vld [vmem:[%s303 + $0x20] sm:$0xff]
    %v309 = vld [vmem:[%s303 + $0x28] sm:$0xff]
    %v310 = vld [vmem:[%s303 + $0x30] sm:$0xff]
    %v311 = vld [vmem:[%s303 + $0x38] sm:$0xff]
    %v313 = vsel %vm65, %v302, 0
    %315 = vmatprep.subr.mxu0 %v305
    %316 = vmatpush1.msra.mxu0 %v304
    %317 = vmatprep.subr.mxu0 %v307
    %318 = vmatpush1.msra.mxu0 %v306
    %319 = vmatprep.subr.mxu0 %v309
    %320 = vmatpush1.msra.mxu0 %v308
    %321 = vmatprep.subr.mxu0 %v311
    %322 = vmatpush1.msra.mxu0 %v310
    %323 = vmatprep.subr.mxu0 0.0
    %324 = vmatpush1.msra.mxu0 0.0
    %325 = vmatprep.subr.mxu0 0.0
    %326 = vmatpush1.msra.mxu0 0.0
    %327 = vmatprep.subr.mxu0 0.0
    %328 = vmatpush1.msra.mxu0 0.0
    %329 = vmatprep.subr.mxu0 0.0
    %330 = vmatpush1.msra.mxu0 0.0
    %331 = vmatprep.subr.mxu0 0.0
    %332 = vmatpush1.msra.mxu0 0.0
    %333 = vmatprep.subr.mxu0 0.0
    %334 = vmatpush1.msra.mxu0 0.0
    %335 = vmatprep.subr.mxu0 0.0
    %336 = vmatpush1.msra.mxu0 0.0
    %337 = vmatprep.subr.mxu0 0.0
    %338 = vmatpush1.msra.mxu0 0.0
    %339 = vmatprep.subr.mxu0 0.0
    %340 = vmatpush1.msra.mxu0 0.0
    %341 = vmatprep.subr.mxu0 0.0
    %342 = vmatpush1.msra.mxu0 0.0
    %343 = vmatprep.subr.mxu0 0.0
    %344 = vmatpush1.msra.mxu0 0.0
    %345 = vmatprep.subr.mxu0 0.0
    %346 = vmatpush1.msra.mxu0 0.0
    %347 = vmatprep.subr.mxu0 0.0
    %348 = vmatpush1.msra.mxu0 0.0
    %349 = vmatprep.subr.mxu0 0.0
    %350 = vmatpush1.msra.mxu0 0.0
    %351 = vmatprep.subr.mxu0 0.0
    %352 = vmatpush1.msra.mxu0 0.0
    %353 = vmatprep.subr.mxu0 0.0
    %354 = vmatpush1.msra.mxu0 0.0
    %355 = vmatprep.subr.mxu0 0.0
    %356 = vmatpush1.msra.mxu0 0.0
    %357 = vmatprep.subr.mxu0 0.0
    %358 = vmatpush1.msra.mxu0 0.0
    %359 = vmatprep.subr.mxu0 0.0
    %360 = vmatpush1.msra.mxu0 0.0
    %361 = vmatprep.subr.mxu0 0.0
    %362 = vmatpush1.msra.mxu0 0.0
    %363 = vmatprep.subr.mxu0 0.0
    %364 = vmatpush1.msra.mxu0 0.0
    %365 = vmatprep.subr.mxu0 0.0
    %366 = vmatpush1.msra.mxu0 0.0
    %367 = vmatprep.subr.mxu0 0.0
    %368 = vmatpush1.msra.mxu0 0.0
    %369 = vmatprep.subr.mxu0 0.0
    %370 = vmatpush1.msra.mxu0 0.0
    %371 = vmatprep.subr.mxu0 0.0
    %372 = vmatpush1.msra.mxu0 0.0
    %373 = vmatprep.subr.mxu0 0.0
    %374 = vmatpush1.msra.mxu0 0.0
    %375 = vmatprep.subr.mxu0 0.0
    %376 = vmatpush1.msra.mxu0 0.0
    %377 = vmatprep.subr.mxu0 0.0
    %378 = vmatpush1.msra.mxu0 0.0
    %379 = vmatprep.mubr.f32.mxu0 0.0
    %380 = vmatmul.mubr.f32.gmra.mrb[0].mxu0 %v313
    %v381 = vpop.f32.mrb[0].mxu0
    %v382 = vadd.f32 0.0, %v381
    %v383 = vpop.f32.mrb[0].mxu0
    %v384 = vadd.f32 0.0, %v383
    %385 = vdwg.mxu0
    %v386 = vadd.f32 %v299, %v382
    %v387 = vadd.f32 %v300, %v384
    %s388 = scalar_lea.vmem %s0, 64
    %v389 = vld [vmem:[%s388] sm:$0x7f]
    %s390 = scalar_lea.vmem %s1, 256
    %v391 = vld [vmem:[%s390] sm:$0xff]
    %v392 = vld [vmem:[%s390 + $0x8] sm:$0xff]
    %v393 = vld [vmem:[%s390 + $0x10] sm:$0xff]
    %v394 = vld [vmem:[%s390 + $0x18] sm:$0xff]
    %v395 = vld [vmem:[%s390 + $0x20] sm:$0xff]
    %v396 = vld [vmem:[%s390 + $0x28] sm:$0xff]
    %v397 = vld [vmem:[%s390 + $0x30] sm:$0xff]
    %v398 = vld [vmem:[%s390 + $0x38] sm:$0xff]
    %v400 = vsel %vm65, %v389, 0
    %402 = vmatprep.subr.mxu0 %v392
    %403 = vmatpush1.msra.mxu0 %v391
    %404 = vmatprep.subr.mxu0 %v394
    %405 = vmatpush1.msra.mxu0 %v393
    %406 = vmatprep.subr.mxu0 %v396
    %407 = vmatpush1.msra.mxu0 %v395
    %408 = vmatprep.subr.mxu0 %v398
    %409 = vmatpush1.msra.mxu0 %v397
    %410 = vmatprep.subr.mxu0 0.0
    %411 = vmatpush1.msra.mxu0 0.0
    %412 = vmatprep.subr.mxu0 0.0
    %413 = vmatpush1.msra.mxu0 0.0
    %414 = vmatprep.subr.mxu0 0.0
    %415 = vmatpush1.msra.mxu0 0.0
    %416 = vmatprep.subr.mxu0 0.0
    %417 = vmatpush1.msra.mxu0 0.0
    %418 = vmatprep.subr.mxu0 0.0
    %419 = vmatpush1.msra.mxu0 0.0
    %420 = vmatprep.subr.mxu0 0.0
    %421 = vmatpush1.msra.mxu0 0.0
    %422 = vmatprep.subr.mxu0 0.0
    %423 = vmatpush1.msra.mxu0 0.0
    %424 = vmatprep.subr.mxu0 0.0
    %425 = vmatpush1.msra.mxu0 0.0
    %426 = vmatprep.subr.mxu0 0.0
    %427 = vmatpush1.msra.mxu0 0.0
    %428 = vmatprep.subr.mxu0 0.0
    %429 = vmatpush1.msra.mxu0 0.0
    %430 = vmatprep.subr.mxu0 0.0
    %431 = vmatpush1.msra.mxu0 0.0
    %432 = vmatprep.subr.mxu0 0.0
    %433 = vmatpush1.msra.mxu0 0.0
    %434 = vmatprep.subr.mxu0 0.0
    %435 = vmatpush1.msra.mxu0 0.0
    %436 = vmatprep.subr.mxu0 0.0
    %437 = vmatpush1.msra.mxu0 0.0
    %438 = vmatprep.subr.mxu0 0.0
    %439 = vmatpush1.msra.mxu0 0.0
    %440 = vmatprep.subr.mxu0 0.0
    %441 = vmatpush1.msra.mxu0 0.0
    %442 = vmatprep.subr.mxu0 0.0
    %443 = vmatpush1.msra.mxu0 0.0
    %444 = vmatprep.subr.mxu0 0.0
    %445 = vmatpush1.msra.mxu0 0.0
    %446 = vmatprep.subr.mxu0 0.0
    %447 = vmatpush1.msra.mxu0 0.0
    %448 = vmatprep.subr.mxu0 0.0
    %449 = vmatpush1.msra.mxu0 0.0
    %450 = vmatprep.subr.mxu0 0.0
    %451 = vmatpush1.msra.mxu0 0.0
    %452 = vmatprep.subr.mxu0 0.0
    %453 = vmatpush1.msra.mxu0 0.0
    %454 = vmatprep.subr.mxu0 0.0
    %455 = vmatpush1.msra.mxu0 0.0
    %456 = vmatprep.subr.mxu0 0.0
    %457 = vmatpush1.msra.mxu0 0.0
    %458 = vmatprep.subr.mxu0 0.0
    %459 = vmatpush1.msra.mxu0 0.0
    %460 = vmatprep.subr.mxu0 0.0
    %461 = vmatpush1.msra.mxu0 0.0
    %462 = vmatprep.subr.mxu0 0.0
    %463 = vmatpush1.msra.mxu0 0.0
    %464 = vmatprep.subr.mxu0 0.0
    %465 = vmatpush1.msra.mxu0 0.0
    %466 = vmatprep.mubr.f32.mxu0 0.0
    %467 = vmatmul.mubr.f32.gmra.mrb[0].mxu0 %v400
    %v468 = vpop.f32.mrb[0].mxu0
    %v469 = vadd.f32 0.0, %v468
    %v470 = vpop.f32.mrb[0].mxu0
    %v471 = vadd.f32 0.0, %v470
    %472 = vdwg.mxu0
    %v473 = vadd.f32 %v386, %v469
    %v474 = vadd.f32 %v387, %v471
    %vm475 = vcmask 1046528
    %v476 = vsel %vm475, %v473, 0.0
    %v477 = vrot.slane %v476, 4
    %v478 = vadd.f32 %v476, %v477
    %v479 = vrot.slane %v478, 2
    %v480 = vadd.f32 %v478, %v479
    %v481 = vrot.slane %v480, 1
    %v482 = vadd.f32 %v480, %v481
    %vm483 = vcmask 784384
    %v484 = vsel %vm483, %v474, 0.0
    %v485 = vrot.slane %v484, 4
    %v486 = vadd.f32 %v484, %v485
    %v487 = vrot.slane %v486, 2
    %v488 = vadd.f32 %v486, %v487
    %v489 = vrot.slane %v488, 1
    %v490 = vadd.f32 %v488, %v489
    %v491 = vadd.f32 %v482, 0.0
    %v492 = vadd.f32 %v490, 0.0
    %v493 = vmul.f32 %v473, %v473
    %v494 = vmul.f32 %v474, %v474
    %v495 = vsel %vm475, %v493, 0.0
    %v496 = vrot.slane %v495, 4
    %v497 = vadd.f32 %v495, %v496
    %v498 = vrot.slane %v497, 2
    %v499 = vadd.f32 %v497, %v498
    %v500 = vrot.slane %v499, 1
    %v501 = vadd.f32 %v499, %v500
    %v502 = vsel %vm483, %v494, 0.0
    %v503 = vrot.slane %v502, 4
    %v504 = vadd.f32 %v502, %v503
    %v505 = vrot.slane %v504, 2
    %v506 = vadd.f32 %v504, %v505
    %v507 = vrot.slane %v506, 1
    %v508 = vadd.f32 %v506, %v507
    %v509 = vadd.f32 %v501, 0.0
    %v510 = vadd.f32 %v508, 0.0
    %s511 = scalar_lea.vmem %s0, 8
    %v512 = vld [vmem:[%s511] sm:$0x7f]
    %s513 = scalar_lea.vmem %s0, 24
    %v514 = vld [vmem:[%s513] sm:$0x7f]
    %v516 = vsel %vm65, %v514, 0
    %518 = vmatprep.subr.mxu0 %v58
    %519 = vmatpush1.msra.mxu0 %v57
    %520 = vmatprep.subr.mxu0 %v60
    %521 = vmatpush1.msra.mxu0 %v59
    %522 = vmatprep.subr.mxu0 %v62
    %523 = vmatpush1.msra.mxu0 %v61
    %524 = vmatprep.subr.mxu0 %v64
    %525 = vmatpush1.msra.mxu0 %v63
    %526 = vmatprep.subr.mxu0 0.0
    %527 = vmatpush1.msra.mxu0 0.0
    %528 = vmatprep.subr.mxu0 0.0
    %529 = vmatpush1.msra.mxu0 0.0
    %530 = vmatprep.subr.mxu0 0.0
    %531 = vmatpush1.msra.mxu0 0.0
    %532 = vmatprep.subr.mxu0 0.0
    %533 = vmatpush1.msra.mxu0 0.0
    %534 = vmatprep.subr.mxu0 0.0
    %535 = vmatpush1.msra.mxu0 0.0
    %536 = vmatprep.subr.mxu0 0.0
    %537 = vmatpush1.msra.mxu0 0.0
    %538 = vmatprep.subr.mxu0 0.0
    %539 = vmatpush1.msra.mxu0 0.0
    %540 = vmatprep.subr.mxu0 0.0
    %541 = vmatpush1.msra.mxu0 0.0
    %542 = vmatprep.subr.mxu0 0.0
    %543 = vmatpush1.msra.mxu0 0.0
    %544 = vmatprep.subr.mxu0 0.0
    %545 = vmatpush1.msra.mxu0 0.0
    %546 = vmatprep.subr.mxu0 0.0
    %547 = vmatpush1.msra.mxu0 0.0
    %548 = vmatprep.subr.mxu0 0.0
    %549 = vmatpush1.msra.mxu0 0.0
    %550 = vmatprep.subr.mxu0 0.0
    %551 = vmatpush1.msra.mxu0 0.0
    %552 = vmatprep.subr.mxu0 0.0
    %553 = vmatpush1.msra.mxu0 0.0
    %554 = vmatprep.subr.mxu0 0.0
    %555 = vmatpush1.msra.mxu0 0.0
    %556 = vmatprep.subr.mxu0 0.0
    %557 = vmatpush1.msra.mxu0 0.0
    %558 = vmatprep.subr.mxu0 0.0
    %559 = vmatpush1.msra.mxu0 0.0
    %560 = vmatprep.subr.mxu0 0.0
    %561 = vmatpush1.msra.mxu0 0.0
    %562 = vmatprep.subr.mxu0 0.0
    %563 = vmatpush1.msra.mxu0 0.0
    %564 = vmatprep.subr.mxu0 0.0
    %565 = vmatpush1.msra.mxu0 0.0
    %566 = vmatprep.subr.mxu0 0.0
    %567 = vmatpush1.msra.mxu0 0.0
    %568 = vmatprep.subr.mxu0 0.0
    %569 = vmatpush1.msra.mxu0 0.0
    %570 = vmatprep.subr.mxu0 0.0
    %571 = vmatpush1.msra.mxu0 0.0
    %572 = vmatprep.subr.mxu0 0.0
    %573 = vmatpush1.msra.mxu0 0.0
    %574 = vmatprep.subr.mxu0 0.0
    %575 = vmatpush1.msra.mxu0 0.0
    %576 = vmatprep.subr.mxu0 0.0
    %577 = vmatpush1.msra.mxu0 0.0
    %578 = vmatprep.subr.mxu0 0.0
    %579 = vmatpush1.msra.mxu0 0.0
    %580 = vmatprep.subr.mxu0 0.0
    %581 = vmatpush1.msra.mxu0 0.0
    %582 = vmatprep.mubr.f32.mxu0 0.0
    %583 = vmatmul.mubr.f32.gmra.mrb[0].mxu0 %v516
    %v584 = vpop.f32.mrb[0].mxu0
    %v585 = vadd.f32 0.0, %v584
    %v586 = vpop.f32.mrb[0].mxu0
    %v587 = vadd.f32 0.0, %v586
    %588 = vdwg.mxu0
    %v590 = vsel %vm65, %v512, 0
    %592 = vmatprep.subr.mxu0 %v47
    %593 = vmatpush1.msra.mxu0 %v46
    %594 = vmatprep.subr.mxu0 %v49
    %595 = vmatpush1.msra.mxu0 %v48
    %596 = vmatprep.subr.mxu0 %v51
    %597 = vmatpush1.msra.mxu0 %v50
    %598 = vmatprep.subr.mxu0 %v53
    %599 = vmatpush1.msra.mxu0 %v52
    %600 = vmatprep.subr.mxu0 0.0
    %601 = vmatpush1.msra.mxu0 0.0
    %602 = vmatprep.subr.mxu0 0.0
    %603 = vmatpush1.msra.mxu0 0.0
    %604 = vmatprep.subr.mxu0 0.0
    %605 = vmatpush1.msra.mxu0 0.0
    %606 = vmatprep.subr.mxu0 0.0
    %607 = vmatpush1.msra.mxu0 0.0
    %608 = vmatprep.subr.mxu0 0.0
    %609 = vmatpush1.msra.mxu0 0.0
    %610 = vmatprep.subr.mxu0 0.0
    %611 = vmatpush1.msra.mxu0 0.0
    %612 = vmatprep.subr.mxu0 0.0
    %613 = vmatpush1.msra.mxu0 0.0
    %614 = vmatprep.subr.mxu0 0.0
    %615 = vmatpush1.msra.mxu0 0.0
    %616 = vmatprep.subr.mxu0 0.0
    %617 = vmatpush1.msra.mxu0 0.0
    %618 = vmatprep.subr.mxu0 0.0
    %619 = vmatpush1.msra.mxu0 0.0
    %620 = vmatprep.subr.mxu0 0.0
    %621 = vmatpush1.msra.mxu0 0.0
    %622 = vmatprep.subr.mxu0 0.0
    %623 = vmatpush1.msra.mxu0 0.0
    %624 = vmatprep.subr.mxu0 0.0
    %625 = vmatpush1.msra.mxu0 0.0
    %626 = vmatprep.subr.mxu0 0.0
    %627 = vmatpush1.msra.mxu0 0.0
    %628 = vmatprep.subr.mxu0 0.0
    %629 = vmatpush1.msra.mxu0 0.0
    %630 = vmatprep.subr.mxu0 0.0
    %631 = vmatpush1.msra.mxu0 0.0
    %632 = vmatprep.subr.mxu0 0.0
    %633 = vmatpush1.msra.mxu0 0.0
    %634 = vmatprep.subr.mxu0 0.0
    %635 = vmatpush1.msra.mxu0 0.0
    %636 = vmatprep.subr.mxu0 0.0
    %637 = vmatpush1.msra.mxu0 0.0
    %638 = vmatprep.subr.mxu0 0.0
    %639 = vmatpush1.msra.mxu0 0.0
    %640 = vmatprep.subr.mxu0 0.0
    %641 = vmatpush1.msra.mxu0 0.0
    %642 = vmatprep.subr.mxu0 0.0
    %643 = vmatpush1.msra.mxu0 0.0
    %644 = vmatprep.subr.mxu0 0.0
    %645 = vmatpush1.msra.mxu0 0.0
    %646 = vmatprep.subr.mxu0 0.0
    %647 = vmatpush1.msra.mxu0 0.0
    %648 = vmatprep.subr.mxu0 0.0
    %649 = vmatpush1.msra.mxu0 0.0
    %650 = vmatprep.subr.mxu0 0.0
    %651 = vmatpush1.msra.mxu0 0.0
    %652 = vmatprep.subr.mxu0 0.0
    %653 = vmatpush1.msra.mxu0 0.0
    %654 = vmatprep.subr.mxu0 0.0
    %655 = vmatpush1.msra.mxu0 0.0
    %656 = vmatprep.mubr.f32.mxu0 0.0
    %657 = vmatmul.mubr.f32.gmra.mrb[0].mxu0 %v590
    %v658 = vpop.f32.mrb[0].mxu0
    %v659 = vadd.f32 %v585, %v658
    %v660 = vpop.f32.mrb[0].mxu0
    %v661 = vadd.f32 %v587, %v660
    %662 = vdwg.mxu0
    %s663 = scalar_lea.vmem %s0, 40
    %v664 = vld [vmem:[%s663] sm:$0x7f]
    %v666 = vsel %vm65, %v664, 0
    %668 = vmatprep.subr.mxu0 %v218
    %669 = vmatpush1.msra.mxu0 %v217
    %670 = vmatprep.subr.mxu0 %v220
    %671 = vmatpush1.msra.mxu0 %v219
    %672 = vmatprep.subr.mxu0 %v222
    %673 = vmatpush1.msra.mxu0 %v221
    %674 = vmatprep.subr.mxu0 %v224
    %675 = vmatpush1.msra.mxu0 %v223
    %676 = vmatprep.subr.mxu0 0.0
    %677 = vmatpush1.msra.mxu0 0.0
    %678 = vmatprep.subr.mxu0 0.0
    %679 = vmatpush1.msra.mxu0 0.0
    %680 = vmatprep.subr.mxu0 0.0
    %681 = vmatpush1.msra.mxu0 0.0
    %682 = vmatprep.subr.mxu0 0.0
    %683 = vmatpush1.msra.mxu0 0.0
    %684 = vmatprep.subr.mxu0 0.0
    %685 = vmatpush1.msra.mxu0 0.0
    %686 = vmatprep.subr.mxu0 0.0
    %687 = vmatpush1.msra.mxu0 0.0
    %688 = vmatprep.subr.mxu0 0.0
    %689 = vmatpush1.msra.mxu0 0.0
    %690 = vmatprep.subr.mxu0 0.0
    %691 = vmatpush1.msra.mxu0 0.0
    %692 = vmatprep.subr.mxu0 0.0
    %693 = vmatpush1.msra.mxu0 0.0
    %694 = vmatprep.subr.mxu0 0.0
    %695 = vmatpush1.msra.mxu0 0.0
    %696 = vmatprep.subr.mxu0 0.0
    %697 = vmatpush1.msra.mxu0 0.0
    %698 = vmatprep.subr.mxu0 0.0
    %699 = vmatpush1.msra.mxu0 0.0
    %700 = vmatprep.subr.mxu0 0.0
    %701 = vmatpush1.msra.mxu0 0.0
    %702 = vmatprep.subr.mxu0 0.0
    %703 = vmatpush1.msra.mxu0 0.0
    %704 = vmatprep.subr.mxu0 0.0
    %705 = vmatpush1.msra.mxu0 0.0
    %706 = vmatprep.subr.mxu0 0.0
    %707 = vmatpush1.msra.mxu0 0.0
    %708 = vmatprep.subr.mxu0 0.0
    %709 = vmatpush1.msra.mxu0 0.0
    %710 = vmatprep.subr.mxu0 0.0
    %711 = vmatpush1.msra.mxu0 0.0
    %712 = vmatprep.subr.mxu0 0.0
    %713 = vmatpush1.msra.mxu0 0.0
    %714 = vmatprep.subr.mxu0 0.0
    %715 = vmatpush1.msra.mxu0 0.0
    %716 = vmatprep.subr.mxu0 0.0
    %717 = vmatpush1.msra.mxu0 0.0
    %718 = vmatprep.subr.mxu0 0.0
    %719 = vmatpush1.msra.mxu0 0.0
    %720 = vmatprep.subr.mxu0 0.0
    %721 = vmatpush1.msra.mxu0 0.0
    %722 = vmatprep.subr.mxu0 0.0
    %723 = vmatpush1.msra.mxu0 0.0
    %724 = vmatprep.subr.mxu0 0.0
    %725 = vmatpush1.msra.mxu0 0.0
    %726 = vmatprep.subr.mxu0 0.0
    %727 = vmatpush1.msra.mxu0 0.0
    %728 = vmatprep.subr.mxu0 0.0
    %729 = vmatpush1.msra.mxu0 0.0
    %730 = vmatprep.subr.mxu0 0.0
    %731 = vmatpush1.msra.mxu0 0.0
    %732 = vmatprep.mubr.f32.mxu0 0.0
    %733 = vmatmul.mubr.f32.gmra.mrb[0].mxu0 %v666
    %v734 = vpop.f32.mrb[0].mxu0
    %v735 = vadd.f32 0.0, %v734
    %v736 = vpop.f32.mrb[0].mxu0
    %v737 = vadd.f32 0.0, %v736
    %738 = vdwg.mxu0
    %v739 = vadd.f32 %v659, %v735
    %v740 = vadd.f32 %v661, %v737
    %s741 = scalar_lea.vmem %s0, 56
    %v742 = vld [vmem:[%s741] sm:$0x7f]
    %v744 = vsel %vm65, %v742, 0
    %746 = vmatprep.subr.mxu0 %v305
    %747 = vmatpush1.msra.mxu0 %v304
    %748 = vmatprep.subr.mxu0 %v307
    %749 = vmatpush1.msra.mxu0 %v306
    %750 = vmatprep.subr.mxu0 %v309
    %751 = vmatpush1.msra.mxu0 %v308
    %752 = vmatprep.subr.mxu0 %v311
    %753 = vmatpush1.msra.mxu0 %v310
    %754 = vmatprep.subr.mxu0 0.0
    %755 = vmatpush1.msra.mxu0 0.0
    %756 = vmatprep.subr.mxu0 0.0
    %757 = vmatpush1.msra.mxu0 0.0
    %758 = vmatprep.subr.mxu0 0.0
    %759 = vmatpush1.msra.mxu0 0.0
    %760 = vmatprep.subr.mxu0 0.0
    %761 = vmatpush1.msra.mxu0 0.0
    %762 = vmatprep.subr.mxu0 0.0
    %763 = vmatpush1.msra.mxu0 0.0
    %764 = vmatprep.subr.mxu0 0.0
    %765 = vmatpush1.msra.mxu0 0.0
    %766 = vmatprep.subr.mxu0 0.0
    %767 = vmatpush1.msra.mxu0 0.0
    %768 = vmatprep.subr.mxu0 0.0
    %769 = vmatpush1.msra.mxu0 0.0
    %770 = vmatprep.subr.mxu0 0.0
    %771 = vmatpush1.msra.mxu0 0.0
    %772 = vmatprep.subr.mxu0 0.0
    %773 = vmatpush1.msra.mxu0 0.0
    %774 = vmatprep.subr.mxu0 0.0
    %775 = vmatpush1.msra.mxu0 0.0
    %776 = vmatprep.subr.mxu0 0.0
    %777 = vmatpush1.msra.mxu0 0.0
    %778 = vmatprep.subr.mxu0 0.0
    %779 = vmatpush1.msra.mxu0 0.0
    %780 = vmatprep.subr.mxu0 0.0
    %781 = vmatpush1.msra.mxu0 0.0
    %782 = vmatprep.subr.mxu0 0.0
    %783 = vmatpush1.msra.mxu0 0.0
    %784 = vmatprep.subr.mxu0 0.0
    %785 = vmatpush1.msra.mxu0 0.0
    %786 = vmatprep.subr.mxu0 0.0
    %787 = vmatpush1.msra.mxu0 0.0
    %788 = vmatprep.subr.mxu0 0.0
    %789 = vmatpush1.msra.mxu0 0.0
    %790 = vmatprep.subr.mxu0 0.0
    %791 = vmatpush1.msra.mxu0 0.0
    %792 = vmatprep.subr.mxu0 0.0
    %793 = vmatpush1.msra.mxu0 0.0
    %794 = vmatprep.subr.mxu0 0.0
    %795 = vmatpush1.msra.mxu0 0.0
    %796 = vmatprep.subr.mxu0 0.0
    %797 = vmatpush1.msra.mxu0 0.0
    %798 = vmatprep.subr.mxu0 0.0
    %799 = vmatpush1.msra.mxu0 0.0
    %800 = vmatprep.subr.mxu0 0.0
    %801 = vmatpush1.msra.mxu0 0.0
    %802 = vmatprep.subr.mxu0 0.0
    %803 = vmatpush1.msra.mxu0 0.0
    %804 = vmatprep.subr.mxu0 0.0
    %805 = vmatpush1.msra.mxu0 0.0
    %806 = vmatprep.subr.mxu0 0.0
    %807 = vmatpush1.msra.mxu0 0.0
    %808 = vmatprep.subr.mxu0 0.0
    %809 = vmatpush1.msra.mxu0 0.0
    %810 = vmatprep.mubr.f32.mxu0 0.0
    %811 = vmatmul.mubr.f32.gmra.mrb[0].mxu0 %v744
    %v812 = vpop.f32.mrb[0].mxu0
    %v813 = vadd.f32 0.0, %v812
    %v814 = vpop.f32.mrb[0].mxu0
    %v815 = vadd.f32 0.0, %v814
    %816 = vdwg.mxu0
    %v817 = vadd.f32 %v739, %v813
    %v818 = vadd.f32 %v740, %v815
    %s819 = scalar_lea.vmem %s0, 72
    %v820 = vld [vmem:[%s819] sm:$0x7f]
    %v822 = vsel %vm65, %v820, 0
    %824 = vmatprep.subr.mxu0 %v392
    %825 = vmatpush1.msra.mxu0 %v391
    %826 = vmatprep.subr.mxu0 %v394
    %827 = vmatpush1.msra.mxu0 %v393
    %828 = vmatprep.subr.mxu0 %v396
    %829 = vmatpush1.msra.mxu0 %v395
    %830 = vmatprep.subr.mxu0 %v398
    %831 = vmatpush1.msra.mxu0 %v397
    %832 = vmatprep.subr.mxu0 0.0
    %833 = vmatpush1.msra.mxu0 0.0
    %834 = vmatprep.subr.mxu0 0.0
    %835 = vmatpush1.msra.mxu0 0.0
    %836 = vmatprep.subr.mxu0 0.0
    %837 = vmatpush1.msra.mxu0 0.0
    %838 = vmatprep.subr.mxu0 0.0
    %839 = vmatpush1.msra.mxu0 0.0
    %840 = vmatprep.subr.mxu0 0.0
    %841 = vmatpush1.msra.mxu0 0.0
    %842 = vmatprep.subr.mxu0 0.0
    %843 = vmatpush1.msra.mxu0 0.0
    %844 = vmatprep.subr.mxu0 0.0
    %845 = vmatpush1.msra.mxu0 0.0
    %846 = vmatprep.subr.mxu0 0.0
    %847 = vmatpush1.msra.mxu0 0.0
    %848 = vmatprep.subr.mxu0 0.0
    %849 = vmatpush1.msra.mxu0 0.0
    %850 = vmatprep.subr.mxu0 0.0
    %851 = vmatpush1.msra.mxu0 0.0
    %852 = vmatprep.subr.mxu0 0.0
    %853 = vmatpush1.msra.mxu0 0.0
    %854 = vmatprep.subr.mxu0 0.0
    %855 = vmatpush1.msra.mxu0 0.0
    %856 = vmatprep.subr.mxu0 0.0
    %857 = vmatpush1.msra.mxu0 0.0
    %858 = vmatprep.subr.mxu0 0.0
    %859 = vmatpush1.msra.mxu0 0.0
    %860 = vmatprep.subr.mxu0 0.0
    %861 = vmatpush1.msra.mxu0 0.0
    %862 = vmatprep.subr.mxu0 0.0
    %863 = vmatpush1.msra.mxu0 0.0
    %864 = vmatprep.subr.mxu0 0.0
    %865 = vmatpush1.msra.mxu0 0.0
    %866 = vmatprep.subr.mxu0 0.0
    %867 = vmatpush1.msra.mxu0 0.0
    %868 = vmatprep.subr.mxu0 0.0
    %869 = vmatpush1.msra.mxu0 0.0
    %870 = vmatprep.subr.mxu0 0.0
    %871 = vmatpush1.msra.mxu0 0.0
    %872 = vmatprep.subr.mxu0 0.0
    %873 = vmatpush1.msra.mxu0 0.0
    %874 = vmatprep.subr.mxu0 0.0
    %875 = vmatpush1.msra.mxu0 0.0
    %876 = vmatprep.subr.mxu0 0.0
    %877 = vmatpush1.msra.mxu0 0.0
    %878 = vmatprep.subr.mxu0 0.0
    %879 = vmatpush1.msra.mxu0 0.0
    %880 = vmatprep.subr.mxu0 0.0
    %881 = vmatpush1.msra.mxu0 0.0
    %882 = vmatprep.subr.mxu0 0.0
    %883 = vmatpush1.msra.mxu0 0.0
    %884 = vmatprep.subr.mxu0 0.0
    %885 = vmatpush1.msra.mxu0 0.0
    %886 = vmatprep.subr.mxu0 0.0
    %887 = vmatpush1.msra.mxu0 0.0
    %888 = vmatprep.mubr.f32.mxu0 0.0
    %889 = vmatmul.mubr.f32.gmra.mrb[0].mxu0 %v822
    %v890 = vpop.f32.mrb[0].mxu0
    %v891 = vadd.f32 0.0, %v890
    %v892 = vpop.f32.mrb[0].mxu0
    %v893 = vadd.f32 0.0, %v892
    %894 = vdwg.mxu0
    %v895 = vadd.f32 %v817, %v891
    %v896 = vadd.f32 %v818, %v893
    %v897 = vsel %vm475, %v895, 0.0
    %v898 = vrot.slane %v897, 4
    %v899 = vadd.f32 %v897, %v898
    %v900 = vrot.slane %v899, 2
    %v901 = vadd.f32 %v899, %v900
    %v902 = vrot.slane %v901, 1
    %v903 = vadd.f32 %v901, %v902
    %v904 = vsel %vm483, %v896, 0.0
    %v905 = vrot.slane %v904, 4
    %v906 = vadd.f32 %v904, %v905
    %v907 = vrot.slane %v906, 2
    %v908 = vadd.f32 %v906, %v907
    %v909 = vrot.slane %v908, 1
    %v910 = vadd.f32 %v908, %v909
    %v911 = vadd.f32 %v491, %v903
    %v912 = vadd.f32 %v492, %v910
    %v913 = vmul.f32 %v895, %v895
    %v914 = vmul.f32 %v896, %v896
    %v915 = vsel %vm475, %v913, 0.0
    %v916 = vrot.slane %v915, 4
    %v917 = vadd.f32 %v915, %v916
    %v918 = vrot.slane %v917, 2
    %v919 = vadd.f32 %v917, %v918
    %v920 = vrot.slane %v919, 1
    %v921 = vadd.f32 %v919, %v920
    %v922 = vsel %vm483, %v914, 0.0
    %v923 = vrot.slane %v922, 4
    %v924 = vadd.f32 %v922, %v923
    %v925 = vrot.slane %v924, 2
    %v926 = vadd.f32 %v924, %v925
    %v927 = vrot.slane %v926, 1
    %v928 = vadd.f32 %v926, %v927
    %v929 = vadd.f32 %v509, %v921
    %v930 = vadd.f32 %v510, %v928
    %s931 = scalar_lea.vmem %s0, 80
    %v932 = vld [vmem:[%s931] sm:$0x7f]
    %s933 = scalar_lea.vmem %s0, 96
    %v934 = vld [vmem:[%s933] sm:$0x7f]
    %v936 = vsel %vm65, %v934, 0
    %938 = vmatprep.subr.mxu0 %v58
    %939 = vmatpush1.msra.mxu0 %v57
    %940 = vmatprep.subr.mxu0 %v60
    %941 = vmatpush1.msra.mxu0 %v59
    %942 = vmatprep.subr.mxu0 %v62
    %943 = vmatpush1.msra.mxu0 %v61
    %944 = vmatprep.subr.mxu0 %v64
    %945 = vmatpush1.msra.mxu0 %v63
    %946 = vmatprep.subr.mxu0 0.0
    %947 = vmatpush1.msra.mxu0 0.0
    %948 = vmatprep.subr.mxu0 0.0
    %949 = vmatpush1.msra.mxu0 0.0
    %950 = vmatprep.subr.mxu0 0.0
    %951 = vmatpush1.msra.mxu0 0.0
    %952 = vmatprep.subr.mxu0 0.0
    %953 = vmatpush1.msra.mxu0 0.0
    %954 = vmatprep.subr.mxu0 0.0
    %955 = vmatpush1.msra.mxu0 0.0
    %956 = vmatprep.subr.mxu0 0.0
    %957 = vmatpush1.msra.mxu0 0.0
    %958 = vmatprep.subr.mxu0 0.0
    %959 = vmatpush1.msra.mxu0 0.0
    %960 = vmatprep.subr.mxu0 0.0
    %961 = vmatpush1.msra.mxu0 0.0
    %962 = vmatprep.subr.mxu0 0.0
    %963 = vmatpush1.msra.mxu0 0.0
    %964 = vmatprep.subr.mxu0 0.0
    %965 = vmatpush1.msra.mxu0 0.0
    %966 = vmatprep.subr.mxu0 0.0
    %967 = vmatpush1.msra.mxu0 0.0
    %968 = vmatprep.subr.mxu0 0.0
    %969 = vmatpush1.msra.mxu0 0.0
    %970 = vmatprep.subr.mxu0 0.0
    %971 = vmatpush1.msra.mxu0 0.0
    %972 = vmatprep.subr.mxu0 0.0
    %973 = vmatpush1.msra.mxu0 0.0
    %974 = vmatprep.subr.mxu0 0.0
    %975 = vmatpush1.msra.mxu0 0.0
    %976 = vmatprep.subr.mxu0 0.0
    %977 = vmatpush1.msra.mxu0 0.0
    %978 = vmatprep.subr.mxu0 0.0
    %979 = vmatpush1.msra.mxu0 0.0
    %980 = vmatprep.subr.mxu0 0.0
    %981 = vmatpush1.msra.mxu0 0.0
    %982 = vmatprep.subr.mxu0 0.0
    %983 = vmatpush1.msra.mxu0 0.0
    %984 = vmatprep.subr.mxu0 0.0
    %985 = vmatpush1.msra.mxu0 0.0
    %986 = vmatprep.subr.mxu0 0.0
    %987 = vmatpush1.msra.mxu0 0.0
    %988 = vmatprep.subr.mxu0 0.0
    %989 = vmatpush1.msra.mxu0 0.0
    %990 = vmatprep.subr.mxu0 0.0
    %991 = vmatpush1.msra.mxu0 0.0
    %992 = vmatprep.subr.mxu0 0.0
    %993 = vmatpush1.msra.mxu0 0.0
    %994 = vmatprep.subr.mxu0 0.0
    %995 = vmatpush1.msra.mxu0 0.0
    %996 = vmatprep.subr.mxu0 0.0
    %997 = vmatpush1.msra.mxu0 0.0
    %998 = vmatprep.subr.mxu0 0.0
    %999 = vmatpush1.msra.mxu0 0.0
    %1000 = vmatprep.subr.mxu0 0.0
    %1001 = vmatpush1.msra.mxu0 0.0
    %1002 = vmatprep.mubr.f32.mxu0 0.0
    %1003 = vmatmul.mubr.f32.gmra.mrb[0].mxu0 %v936
    %v1004 = vpop.f32.mrb[0].mxu0
    %v1005 = vadd.f32 0.0, %v1004
    %v1006 = vpop.f32.mrb[0].mxu0
    %v1007 = vadd.f32 0.0, %v1006
    %1008 = vdwg.mxu0
    %v1010 = vsel %vm65, %v932, 0
    %1012 = vmatprep.subr.mxu0 %v47
    %1013 = vmatpush1.msra.mxu0 %v46
    %1014 = vmatprep.subr.mxu0 %v49
    %1015 = vmatpush1.msra.mxu0 %v48
    %1016 = vmatprep.subr.mxu0 %v51
    %1017 = vmatpush1.msra.mxu0 %v50
    %1018 = vmatprep.subr.mxu0 %v53
    %1019 = vmatpush1.msra.mxu0 %v52
    %1020 = vmatprep.subr.mxu0 0.0
    %1021 = vmatpush1.msra.mxu0 0.0
    %1022 = vmatprep.subr.mxu0 0.0
    %1023 = vmatpush1.msra.mxu0 0.0
    %1024 = vmatprep.subr.mxu0 0.0
    %1025 = vmatpush1.msra.mxu0 0.0
    %1026 = vmatprep.subr.mxu0 0.0
    %1027 = vmatpush1.msra.mxu0 0.0
    %1028 = vmatprep.subr.mxu0 0.0
    %1029 = vmatpush1.msra.mxu0 0.0
    %1030 = vmatprep.subr.mxu0 0.0
    %1031 = vmatpush1.msra.mxu0 0.0
    %1032 = vmatprep.subr.mxu0 0.0
    %1033 = vmatpush1.msra.mxu0 0.0
    %1034 = vmatprep.subr.mxu0 0.0
    %1035 = vmatpush1.msra.mxu0 0.0
    %1036 = vmatprep.subr.mxu0 0.0
    %1037 = vmatpush1.msra.mxu0 0.0
    %1038 = vmatprep.subr.mxu0 0.0
    %1039 = vmatpush1.msra.mxu0 0.0
    %1040 = vmatprep.subr.mxu0 0.0
    %1041 = vmatpush1.msra.mxu0 0.0
    %1042 = vmatprep.subr.mxu0 0.0
    %1043 = vmatpush1.msra.mxu0 0.0
    %1044 = vmatprep.subr.mxu0 0.0
    %1045 = vmatpush1.msra.mxu0 0.0
    %1046 = vmatprep.subr.mxu0 0.0
    %1047 = vmatpush1.msra.mxu0 0.0
    %1048 = vmatprep.subr.mxu0 0.0
    %1049 = vmatpush1.msra.mxu0 0.0
    %1050 = vmatprep.subr.mxu0 0.0
    %1051 = vmatpush1.msra.mxu0 0.0
    %1052 = vmatprep.subr.mxu0 0.0
    %1053 = vmatpush1.msra.mxu0 0.0
    %1054 = vmatprep.subr.mxu0 0.0
    %1055 = vmatpush1.msra.mxu0 0.0
    %1056 = vmatprep.subr.mxu0 0.0
    %1057 = vmatpush1.msra.mxu0 0.0
    %1058 = vmatprep.subr.mxu0 0.0
    %1059 = vmatpush1.msra.mxu0 0.0
    %1060 = vmatprep.subr.mxu0 0.0
    %1061 = vmatpush1.msra.mxu0 0.0
    %1062 = vmatprep.subr.mxu0 0.0
    %1063 = vmatpush1.msra.mxu0 0.0
    %1064 = vmatprep.subr.mxu0 0.0
    %1065 = vmatpush1.msra.mxu0 0.0
    %1066 = vmatprep.subr.mxu0 0.0
    %1067 = vmatpush1.msra.mxu0 0.0
    %1068 = vmatprep.subr.mxu0 0.0
    %1069 = vmatpush1.msra.mxu0 0.0
    %1070 = vmatprep.subr.mxu0 0.0
    %1071 = vmatpush1.msra.mxu0 0.0
    %1072 = vmatprep.subr.mxu0 0.0
    %1073 = vmatpush1.msra.mxu0 0.0
    %1074 = vmatprep.subr.mxu0 0.0
    %1075 = vmatpush1.msra.mxu0 0.0
    %1076 = vmatprep.mubr.f32.mxu0 0.0
    %1077 = vmatmul.mubr.f32.gmra.mrb[0].mxu0 %v1010
    %v1078 = vpop.f32.mrb[0].mxu0
    %v1079 = vadd.f32 %v1005, %v1078
    %v1080 = vpop.f32.mrb[0].mxu0
    %v1081 = vadd.f32 %v1007, %v1080
    %1082 = vdwg.mxu0
    %s1083 = scalar_lea.vmem %s0, 112
    %v1084 = vld [vmem:[%s1083] sm:$0x7f]
    %v1086 = vsel %vm65, %v1084, 0
    %1088 = vmatprep.subr.mxu0 %v218
    %1089 = vmatpush1.msra.mxu0 %v217
    %1090 = vmatprep.subr.mxu0 %v220
    %1091 = vmatpush1.msra.mxu0 %v219
    %1092 = vmatprep.subr.mxu0 %v222
    %1093 = vmatpush1.msra.mxu0 %v221
    %1094 = vmatprep.subr.mxu0 %v224
    %1095 = vmatpush1.msra.mxu0 %v223
    %1096 = vmatprep.subr.mxu0 0.0
    %1097 = vmatpush1.msra.mxu0 0.0
    %1098 = vmatprep.subr.mxu0 0.0
    %1099 = vmatpush1.msra.mxu0 0.0
    %1100 = vmatprep.subr.mxu0 0.0
    %1101 = vmatpush1.msra.mxu0 0.0
    %1102 = vmatprep.subr.mxu0 0.0
    %1103 = vmatpush1.msra.mxu0 0.0
    %1104 = vmatprep.subr.mxu0 0.0
    %1105 = vmatpush1.msra.mxu0 0.0
    %1106 = vmatprep.subr.mxu0 0.0
    %1107 = vmatpush1.msra.mxu0 0.0
    %1108 = vmatprep.subr.mxu0 0.0
    %1109 = vmatpush1.msra.mxu0 0.0
    %1110 = vmatprep.subr.mxu0 0.0
    %1111 = vmatpush1.msra.mxu0 0.0
    %1112 = vmatprep.subr.mxu0 0.0
    %1113 = vmatpush1.msra.mxu0 0.0
    %1114 = vmatprep.subr.mxu0 0.0
    %1115 = vmatpush1.msra.mxu0 0.0
    %1116 = vmatprep.subr.mxu0 0.0
    %1117 = vmatpush1.msra.mxu0 0.0
    %1118 = vmatprep.subr.mxu0 0.0
    %1119 = vmatpush1.msra.mxu0 0.0
    %1120 = vmatprep.subr.mxu0 0.0
    %1121 = vmatpush1.msra.mxu0 0.0
    %1122 = vmatprep.subr.mxu0 0.0
    %1123 = vmatpush1.msra.mxu0 0.0
    %1124 = vmatprep.subr.mxu0 0.0
    %1125 = vmatpush1.msra.mxu0 0.0
    %1126 = vmatprep.subr.mxu0 0.0
    %1127 = vmatpush1.msra.mxu0 0.0
    %1128 = vmatprep.subr.mxu0 0.0
    %1129 = vmatpush1.msra.mxu0 0.0
    %1130 = vmatprep.subr.mxu0 0.0
    %1131 = vmatpush1.msra.mxu0 0.0
    %1132 = vmatprep.subr.mxu0 0.0
    %1133 = vmatpush1.msra.mxu0 0.0
    %1134 = vmatprep.subr.mxu0 0.0
    %1135 = vmatpush1.msra.mxu0 0.0
    %1136 = vmatprep.subr.mxu0 0.0
    %1137 = vmatpush1.msra.mxu0 0.0
    %1138 = vmatprep.subr.mxu0 0.0
    %1139 = vmatpush1.msra.mxu0 0.0
    %1140 = vmatprep.subr.mxu0 0.0
    %1141 = vmatpush1.msra.mxu0 0.0
    %1142 = vmatprep.subr.mxu0 0.0
    %1143 = vmatpush1.msra.mxu0 0.0
    %1144 = vmatprep.subr.mxu0 0.0
    %1145 = vmatpush1.msra.mxu0 0.0
    %1146 = vmatprep.subr.mxu0 0.0
    %1147 = vmatpush1.msra.mxu0 0.0
    %1148 = vmatprep.subr.mxu0 0.0
    %1149 = vmatpush1.msra.mxu0 0.0
    %1150 = vmatprep.subr.mxu0 0.0
    %1151 = vmatpush1.msra.mxu0 0.0
    %1152 = vmatprep.mubr.f32.mxu0 0.0
    %1153 = vmatmul.mubr.f32.gmra.mrb[0].mxu0 %v1086
    %v1154 = vpop.f32.mrb[0].mxu0
    %v1155 = vadd.f32 0.0, %v1154
    %v1156 = vpop.f32.mrb[0].mxu0
    %v1157 = vadd.f32 0.0, %v1156
    %1158 = vdwg.mxu0
    %v1159 = vadd.f32 %v1079, %v1155
    %v1160 = vadd.f32 %v1081, %v1157
    %s1161 = scalar_lea.vmem %s0, 128
    %v1162 = vld [vmem:[%s1161] sm:$0x7f]
    %v1164 = vsel %vm65, %v1162, 0
    %1166 = vmatprep.subr.mxu0 %v305
    %1167 = vmatpush1.msra.mxu0 %v304
    %1168 = vmatprep.subr.mxu0 %v307
    %1169 = vmatpush1.msra.mxu0 %v306
    %1170 = vmatprep.subr.mxu0 %v309
    %1171 = vmatpush1.msra.mxu0 %v308
    %1172 = vmatprep.subr.mxu0 %v311
    %1173 = vmatpush1.msra.mxu0 %v310
    %1174 = vmatprep.subr.mxu0 0.0
    %1175 = vmatpush1.msra.mxu0 0.0
    %1176 = vmatprep.subr.mxu0 0.0
    %1177 = vmatpush1.msra.mxu0 0.0
    %1178 = vmatprep.subr.mxu0 0.0
    %1179 = vmatpush1.msra.mxu0 0.0
    %1180 = vmatprep.subr.mxu0 0.0
    %1181 = vmatpush1.msra.mxu0 0.0
    %1182 = vmatprep.subr.mxu0 0.0
    %1183 = vmatpush1.msra.mxu0 0.0
    %1184 = vmatprep.subr.mxu0 0.0
    %1185 = vmatpush1.msra.mxu0 0.0
    %1186 = vmatprep.subr.mxu0 0.0
    %1187 = vmatpush1.msra.mxu0 0.0
    %1188 = vmatprep.subr.mxu0 0.0
    %1189 = vmatpush1.msra.mxu0 0.0
    %1190 = vmatprep.subr.mxu0 0.0
    %1191 = vmatpush1.msra.mxu0 0.0
    %1192 = vmatprep.subr.mxu0 0.0
    %1193 = vmatpush1.msra.mxu0 0.0
    %1194 = vmatprep.subr.mxu0 0.0
    %1195 = vmatpush1.msra.mxu0 0.0
    %1196 = vmatprep.subr.mxu0 0.0
    %1197 = vmatpush1.msra.mxu0 0.0
    %1198 = vmatprep.subr.mxu0 0.0
    %1199 = vmatpush1.msra.mxu0 0.0
    %1200 = vmatprep.subr.mxu0 0.0
    %1201 = vmatpush1.msra.mxu0 0.0
    %1202 = vmatprep.subr.mxu0 0.0
    %1203 = vmatpush1.msra.mxu0 0.0
    %1204 = vmatprep.subr.mxu0 0.0
    %1205 = vmatpush1.msra.mxu0 0.0
    %1206 = vmatprep.subr.mxu0 0.0
    %1207 = vmatpush1.msra.mxu0 0.0
    %1208 = vmatprep.subr.mxu0 0.0
    %1209 = vmatpush1.msra.mxu0 0.0
    %1210 = vmatprep.subr.mxu0 0.0
    %1211 = vmatpush1.msra.mxu0 0.0
    %1212 = vmatprep.subr.mxu0 0.0
    %1213 = vmatpush1.msra.mxu0 0.0
    %1214 = vmatprep.subr.mxu0 0.0
    %1215 = vmatpush1.msra.mxu0 0.0
    %1216 = vmatprep.subr.mxu0 0.0
    %1217 = vmatpush1.msra.mxu0 0.0
    %1218 = vmatprep.subr.mxu0 0.0
    %1219 = vmatpush1.msra.mxu0 0.0
    %1220 = vmatprep.subr.mxu0 0.0
    %1221 = vmatpush1.msra.mxu0 0.0
    %1222 = vmatprep.subr.mxu0 0.0
    %1223 = vmatpush1.msra.mxu0 0.0
    %1224 = vmatprep.subr.mxu0 0.0
    %1225 = vmatpush1.msra.mxu0 0.0
    %1226 = vmatprep.subr.mxu0 0.0
    %1227 = vmatpush1.msra.mxu0 0.0
    %1228 = vmatprep.subr.mxu0 0.0
    %1229 = vmatpush1.msra.mxu0 0.0
    %1230 = vmatprep.mubr.f32.mxu0 0.0
    %1231 = vmatmul.mubr.f32.gmra.mrb[0].mxu0 %v1164
    %v1232 = vpop.f32.mrb[0].mxu0
    %v1233 = vadd.f32 0.0, %v1232
    %v1234 = vpop.f32.mrb[0].mxu0
    %v1235 = vadd.f32 0.0, %v1234
    %1236 = vdwg.mxu0
    %v1237 = vadd.f32 %v1159, %v1233
    %v1238 = vadd.f32 %v1160, %v1235
    %s1239 = scalar_lea.vmem %s0, 144
    %v1240 = vld [vmem:[%s1239] sm:$0x7f]
    %v1242 = vsel %vm65, %v1240, 0
    %1244 = vmatprep.subr.mxu0 %v392
    %1245 = vmatpush1.msra.mxu0 %v391
    %1246 = vmatprep.subr.mxu0 %v394
    %1247 = vmatpush1.msra.mxu0 %v393
    %1248 = vmatprep.subr.mxu0 %v396
    %1249 = vmatpush1.msra.mxu0 %v395
    %1250 = vmatprep.subr.mxu0 %v398
    %1251 = vmatpush1.msra.mxu0 %v397
    %1252 = vmatprep.subr.mxu0 0.0
    %1253 = vmatpush1.msra.mxu0 0.0
    %1254 = vmatprep.subr.mxu0 0.0
    %1255 = vmatpush1.msra.mxu0 0.0
    %1256 = vmatprep.subr.mxu0 0.0
    %1257 = vmatpush1.msra.mxu0 0.0
    %1258 = vmatprep.subr.mxu0 0.0
    %1259 = vmatpush1.msra.mxu0 0.0
    %1260 = vmatprep.subr.mxu0 0.0
    %1261 = vmatpush1.msra.mxu0 0.0
    %1262 = vmatprep.subr.mxu0 0.0
    %1263 = vmatpush1.msra.mxu0 0.0
    %1264 = vmatprep.subr.mxu0 0.0
    %1265 = vmatpush1.msra.mxu0 0.0
    %1266 = vmatprep.subr.mxu0 0.0
    %1267 = vmatpush1.msra.mxu0 0.0
    %1268 = vmatprep.subr.mxu0 0.0
    %1269 = vmatpush1.msra.mxu0 0.0
    %1270 = vmatprep.subr.mxu0 0.0
    %1271 = vmatpush1.msra.mxu0 0.0
    %1272 = vmatprep.subr.mxu0 0.0
    %1273 = vmatpush1.msra.mxu0 0.0
    %1274 = vmatprep.subr.mxu0 0.0
    %1275 = vmatpush1.msra.mxu0 0.0
    %1276 = vmatprep.subr.mxu0 0.0
    %1277 = vmatpush1.msra.mxu0 0.0
    %1278 = vmatprep.subr.mxu0 0.0
    %1279 = vmatpush1.msra.mxu0 0.0
    %1280 = vmatprep.subr.mxu0 0.0
    %1281 = vmatpush1.msra.mxu0 0.0
    %1282 = vmatprep.subr.mxu0 0.0
    %1283 = vmatpush1.msra.mxu0 0.0
    %1284 = vmatprep.subr.mxu0 0.0
    %1285 = vmatpush1.msra.mxu0 0.0
    %1286 = vmatprep.subr.mxu0 0.0
    %1287 = vmatpush1.msra.mxu0 0.0
    %1288 = vmatprep.subr.mxu0 0.0
    %1289 = vmatpush1.msra.mxu0 0.0
    %1290 = vmatprep.subr.mxu0 0.0
    %1291 = vmatpush1.msra.mxu0 0.0
    %1292 = vmatprep.subr.mxu0 0.0
    %1293 = vmatpush1.msra.mxu0 0.0
    %1294 = vmatprep.subr.mxu0 0.0
    %1295 = vmatpush1.msra.mxu0 0.0
    %1296 = vmatprep.subr.mxu0 0.0
    %1297 = vmatpush1.msra.mxu0 0.0
    %1298 = vmatprep.subr.mxu0 0.0
    %1299 = vmatpush1.msra.mxu0 0.0
    %1300 = vmatprep.subr.mxu0 0.0
    %1301 = vmatpush1.msra.mxu0 0.0
    %1302 = vmatprep.subr.mxu0 0.0
    %1303 = vmatpush1.msra.mxu0 0.0
    %1304 = vmatprep.subr.mxu0 0.0
    %1305 = vmatpush1.msra.mxu0 0.0
    %1306 = vmatprep.subr.mxu0 0.0
    %1307 = vmatpush1.msra.mxu0 0.0
    %1308 = vmatprep.mubr.f32.mxu0 0.0
    %1309 = vmatmul.mubr.f32.gmra.mrb[0].mxu0 %v1242
    %v1310 = vpop.f32.mrb[0].mxu0
    %v1311 = vadd.f32 0.0, %v1310
    %v1312 = vpop.f32.mrb[0].mxu0
    %v1313 = vadd.f32 0.0, %v1312
    %1314 = vdwg.mxu0
    %v1315 = vadd.f32 %v1237, %v1311
    %v1316 = vadd.f32 %v1238, %v1313
    %v1317 = vsel %vm475, %v1315, 0.0
    %v1318 = vrot.slane %v1317, 4
    %v1319 = vadd.f32 %v1317, %v1318
    %v1320 = vrot.slane %v1319, 2
    %v1321 = vadd.f32 %v1319, %v1320
    %v1322 = vrot.slane %v1321, 1
    %v1323 = vadd.f32 %v1321, %v1322
    %v1324 = vsel %vm483, %v1316, 0.0
    %v1325 = vrot.slane %v1324, 4
    %v1326 = vadd.f32 %v1324, %v1325
    %v1327 = vrot.slane %v1326, 2
    %v1328 = vadd.f32 %v1326, %v1327
    %v1329 = vrot.slane %v1328, 1
    %v1330 = vadd.f32 %v1328, %v1329
    %v1331 = vadd.f32 %v911, %v1323
    %v1332 = vadd.f32 %v912, %v1330
    %v1333 = vmul.f32 %v1315, %v1315
    %v1334 = vmul.f32 %v1316, %v1316
    %v1335 = vsel %vm475, %v1333, 0.0
    %v1336 = vrot.slane %v1335, 4
    %v1337 = vadd.f32 %v1335, %v1336
    %v1338 = vrot.slane %v1337, 2
    %v1339 = vadd.f32 %v1337, %v1338
    %v1340 = vrot.slane %v1339, 1
    %v1341 = vadd.f32 %v1339, %v1340
    %v1342 = vsel %vm483, %v1334, 0.0
    %v1343 = vrot.slane %v1342, 4
    %v1344 = vadd.f32 %v1342, %v1343
    %v1345 = vrot.slane %v1344, 2
    %v1346 = vadd.f32 %v1344, %v1345
    %v1347 = vrot.slane %v1346, 1
    %v1348 = vadd.f32 %v1346, %v1347
    %v1349 = vadd.f32 %v929, %v1341
    %v1350 = vadd.f32 %v930, %v1348
    %s1351 = scalar_lea.vmem %s0, 88
    %v1352 = vld [vmem:[%s1351] sm:$0x7f]
    %s1353 = scalar_lea.vmem %s0, 104
    %v1354 = vld [vmem:[%s1353] sm:$0x7f]
    %v1356 = vsel %vm65, %v1354, 0
    %1358 = vmatprep.subr.mxu0 %v58
    %1359 = vmatpush1.msra.mxu0 %v57
    %1360 = vmatprep.subr.mxu0 %v60
    %1361 = vmatpush1.msra.mxu0 %v59
    %1362 = vmatprep.subr.mxu0 %v62
    %1363 = vmatpush1.msra.mxu0 %v61
    %1364 = vmatprep.subr.mxu0 %v64
    %1365 = vmatpush1.msra.mxu0 %v63
    %1366 = vmatprep.subr.mxu0 0.0
    %1367 = vmatpush1.msra.mxu0 0.0
    %1368 = vmatprep.subr.mxu0 0.0
    %1369 = vmatpush1.msra.mxu0 0.0
    %1370 = vmatprep.subr.mxu0 0.0
    %1371 = vmatpush1.msra.mxu0 0.0
    %1372 = vmatprep.subr.mxu0 0.0
    %1373 = vmatpush1.msra.mxu0 0.0
    %1374 = vmatprep.subr.mxu0 0.0
    %1375 = vmatpush1.msra.mxu0 0.0
    %1376 = vmatprep.subr.mxu0 0.0
    %1377 = vmatpush1.msra.mxu0 0.0
    %1378 = vmatprep.subr.mxu0 0.0
    %1379 = vmatpush1.msra.mxu0 0.0
    %1380 = vmatprep.subr.mxu0 0.0
    %1381 = vmatpush1.msra.mxu0 0.0
    %1382 = vmatprep.subr.mxu0 0.0
    %1383 = vmatpush1.msra.mxu0 0.0
    %1384 = vmatprep.subr.mxu0 0.0
    %1385 = vmatpush1.msra.mxu0 0.0
    %1386 = vmatprep.subr.mxu0 0.0
    %1387 = vmatpush1.msra.mxu0 0.0
    %1388 = vmatprep.subr.mxu0 0.0
    %1389 = vmatpush1.msra.mxu0 0.0
    %1390 = vmatprep.subr.mxu0 0.0
    %1391 = vmatpush1.msra.mxu0 0.0
    %1392 = vmatprep.subr.mxu0 0.0
    %1393 = vmatpush1.msra.mxu0 0.0
    %1394 = vmatprep.subr.mxu0 0.0
    %1395 = vmatpush1.msra.mxu0 0.0
    %1396 = vmatprep.subr.mxu0 0.0
    %1397 = vmatpush1.msra.mxu0 0.0
    %1398 = vmatprep.subr.mxu0 0.0
    %1399 = vmatpush1.msra.mxu0 0.0
    %1400 = vmatprep.subr.mxu0 0.0
    %1401 = vmatpush1.msra.mxu0 0.0
    %1402 = vmatprep.subr.mxu0 0.0
    %1403 = vmatpush1.msra.mxu0 0.0
    %1404 = vmatprep.subr.mxu0 0.0
    %1405 = vmatpush1.msra.mxu0 0.0
    %1406 = vmatprep.subr.mxu0 0.0
    %1407 = vmatpush1.msra.mxu0 0.0
    %1408 = vmatprep.subr.mxu0 0.0
    %1409 = vmatpush1.msra.mxu0 0.0
    %1410 = vmatprep.subr.mxu0 0.0
    %1411 = vmatpush1.msra.mxu0 0.0
    %1412 = vmatprep.subr.mxu0 0.0
    %1413 = vmatpush1.msra.mxu0 0.0
    %1414 = vmatprep.subr.mxu0 0.0
    %1415 = vmatpush1.msra.mxu0 0.0
    %1416 = vmatprep.subr.mxu0 0.0
    %1417 = vmatpush1.msra.mxu0 0.0
    %1418 = vmatprep.subr.mxu0 0.0
    %1419 = vmatpush1.msra.mxu0 0.0
    %1420 = vmatprep.subr.mxu0 0.0
    %1421 = vmatpush1.msra.mxu0 0.0
    %1422 = vmatprep.mubr.f32.mxu0 0.0
    %1423 = vmatmul.mubr.f32.gmra.mrb[0].mxu0 %v1356
    %v1424 = vpop.f32.mrb[0].mxu0
    %v1425 = vadd.f32 0.0, %v1424
    %v1426 = vpop.f32.mrb[0].mxu0
    %v1427 = vadd.f32 0.0, %v1426
    %1428 = vdwg.mxu0
    %v1430 = vsel %vm65, %v1352, 0
    %1432 = vmatprep.subr.mxu0 %v47
    %1433 = vmatpush1.msra.mxu0 %v46
    %1434 = vmatprep.subr.mxu0 %v49
    %1435 = vmatpush1.msra.mxu0 %v48
    %1436 = vmatprep.subr.mxu0 %v51
    %1437 = vmatpush1.msra.mxu0 %v50
    %1438 = vmatprep.subr.mxu0 %v53
    %1439 = vmatpush1.msra.mxu0 %v52
    %1440 = vmatprep.subr.mxu0 0.0
    %1441 = vmatpush1.msra.mxu0 0.0
    %1442 = vmatprep.subr.mxu0 0.0
    %1443 = vmatpush1.msra.mxu0 0.0
    %1444 = vmatprep.subr.mxu0 0.0
    %1445 = vmatpush1.msra.mxu0 0.0
    %1446 = vmatprep.subr.mxu0 0.0
    %1447 = vmatpush1.msra.mxu0 0.0
    %1448 = vmatprep.subr.mxu0 0.0
    %1449 = vmatpush1.msra.mxu0 0.0
    %1450 = vmatprep.subr.mxu0 0.0
    %1451 = vmatpush1.msra.mxu0 0.0
    %1452 = vmatprep.subr.mxu0 0.0
    %1453 = vmatpush1.msra.mxu0 0.0
    %1454 = vmatprep.subr.mxu0 0.0
    %1455 = vmatpush1.msra.mxu0 0.0
    %1456 = vmatprep.subr.mxu0 0.0
    %1457 = vmatpush1.msra.mxu0 0.0
    %1458 = vmatprep.subr.mxu0 0.0
    %1459 = vmatpush1.msra.mxu0 0.0
    %1460 = vmatprep.subr.mxu0 0.0
    %1461 = vmatpush1.msra.mxu0 0.0
    %1462 = vmatprep.subr.mxu0 0.0
    %1463 = vmatpush1.msra.mxu0 0.0
    %1464 = vmatprep.subr.mxu0 0.0
    %1465 = vmatpush1.msra.mxu0 0.0
    %1466 = vmatprep.subr.mxu0 0.0
    %1467 = vmatpush1.msra.mxu0 0.0
    %1468 = vmatprep.subr.mxu0 0.0
    %1469 = vmatpush1.msra.mxu0 0.0
    %1470 = vmatprep.subr.mxu0 0.0
    %1471 = vmatpush1.msra.mxu0 0.0
    %1472 = vmatprep.subr.mxu0 0.0
    %1473 = vmatpush1.msra.mxu0 0.0
    %1474 = vmatprep.subr.mxu0 0.0
    %1475 = vmatpush1.msra.mxu0 0.0
    %1476 = vmatprep.subr.mxu0 0.0
    %1477 = vmatpush1.msra.mxu0 0.0
    %1478 = vmatprep.subr.mxu0 0.0
    %1479 = vmatpush1.msra.mxu0 0.0
    %1480 = vmatprep.subr.mxu0 0.0
    %1481 = vmatpush1.msra.mxu0 0.0
    %1482 = vmatprep.subr.mxu0 0.0
    %1483 = vmatpush1.msra.mxu0 0.0
    %1484 = vmatprep.subr.mxu0 0.0
    %1485 = vmatpush1.msra.mxu0 0.0
    %1486 = vmatprep.subr.mxu0 0.0
    %1487 = vmatpush1.msra.mxu0 0.0
    %1488 = vmatprep.subr.mxu0 0.0
    %1489 = vmatpush1.msra.mxu0 0.0
    %1490 = vmatprep.subr.mxu0 0.0
    %1491 = vmatpush1.msra.mxu0 0.0
    %1492 = vmatprep.subr.mxu0 0.0
    %1493 = vmatpush1.msra.mxu0 0.0
    %1494 = vmatprep.subr.mxu0 0.0
    %1495 = vmatpush1.msra.mxu0 0.0
    %1496 = vmatprep.mubr.f32.mxu0 0.0
    %1497 = vmatmul.mubr.f32.gmra.mrb[0].mxu0 %v1430
    %v1498 = vpop.f32.mrb[0].mxu0
    %v1499 = vadd.f32 %v1425, %v1498
    %v1500 = vpop.f32.mrb[0].mxu0
    %v1501 = vadd.f32 %v1427, %v1500
    %1502 = vdwg.mxu0
    %s1503 = scalar_lea.vmem %s0, 120
    %v1504 = vld [vmem:[%s1503] sm:$0x7f]
    %v1506 = vsel %vm65, %v1504, 0
    %1508 = vmatprep.subr.mxu0 %v218
    %1509 = vmatpush1.msra.mxu0 %v217
    %1510 = vmatprep.subr.mxu0 %v220
    %1511 = vmatpush1.msra.mxu0 %v219
    %1512 = vmatprep.subr.mxu0 %v222
    %1513 = vmatpush1.msra.mxu0 %v221
    %1514 = vmatprep.subr.mxu0 %v224
    %1515 = vmatpush1.msra.mxu0 %v223
    %1516 = vmatprep.subr.mxu0 0.0
    %1517 = vmatpush1.msra.mxu0 0.0
    %1518 = vmatprep.subr.mxu0 0.0
    %1519 = vmatpush1.msra.mxu0 0.0
    %1520 = vmatprep.subr.mxu0 0.0
    %1521 = vmatpush1.msra.mxu0 0.0
    %1522 = vmatprep.subr.mxu0 0.0
    %1523 = vmatpush1.msra.mxu0 0.0
    %1524 = vmatprep.subr.mxu0 0.0
    %1525 = vmatpush1.msra.mxu0 0.0
    %1526 = vmatprep.subr.mxu0 0.0
    %1527 = vmatpush1.msra.mxu0 0.0
    %1528 = vmatprep.subr.mxu0 0.0
    %1529 = vmatpush1.msra.mxu0 0.0
    %1530 = vmatprep.subr.mxu0 0.0
    %1531 = vmatpush1.msra.mxu0 0.0
    %1532 = vmatprep.subr.mxu0 0.0
    %1533 = vmatpush1.msra.mxu0 0.0
    %1534 = vmatprep.subr.mxu0 0.0
    %1535 = vmatpush1.msra.mxu0 0.0
    %1536 = vmatprep.subr.mxu0 0.0
    %1537 = vmatpush1.msra.mxu0 0.0
    %1538 = vmatprep.subr.mxu0 0.0
    %1539 = vmatpush1.msra.mxu0 0.0
    %1540 = vmatprep.subr.mxu0 0.0
    %1541 = vmatpush1.msra.mxu0 0.0
    %1542 = vmatprep.subr.mxu0 0.0
    %1543 = vmatpush1.msra.mxu0 0.0
    %1544 = vmatprep.subr.mxu0 0.0
    %1545 = vmatpush1.msra.mxu0 0.0
    %1546 = vmatprep.subr.mxu0 0.0
    %1547 = vmatpush1.msra.mxu0 0.0
    %1548 = vmatprep.subr.mxu0 0.0
    %1549 = vmatpush1.msra.mxu0 0.0
    %1550 = vmatprep.subr.mxu0 0.0
    %1551 = vmatpush1.msra.mxu0 0.0
    %1552 = vmatprep.subr.mxu0 0.0
    %1553 = vmatpush1.msra.mxu0 0.0
    %1554 = vmatprep.subr.mxu0 0.0
    %1555 = vmatpush1.msra.mxu0 0.0
    %1556 = vmatprep.subr.mxu0 0.0
    %1557 = vmatpush1.msra.mxu0 0.0
    %1558 = vmatprep.subr.mxu0 0.0
    %1559 = vmatpush1.msra.mxu0 0.0
    %1560 = vmatprep.subr.mxu0 0.0
    %1561 = vmatpush1.msra.mxu0 0.0
    %1562 = vmatprep.subr.mxu0 0.0
    %1563 = vmatpush1.msra.mxu0 0.0
    %1564 = vmatprep.subr.mxu0 0.0
    %1565 = vmatpush1.msra.mxu0 0.0
    %1566 = vmatprep.subr.mxu0 0.0
    %1567 = vmatpush1.msra.mxu0 0.0
    %1568 = vmatprep.subr.mxu0 0.0
    %1569 = vmatpush1.msra.mxu0 0.0
    %1570 = vmatprep.subr.mxu0 0.0
    %1571 = vmatpush1.msra.mxu0 0.0
    %1572 = vmatprep.mubr.f32.mxu0 0.0
    %1573 = vmatmul.mubr.f32.gmra.mrb[0].mxu0 %v1506
    %v1574 = vpop.f32.mrb[0].mxu0
    %v1575 = vadd.f32 0.0, %v1574
    %v1576 = vpop.f32.mrb[0].mxu0
    %v1577 = vadd.f32 0.0, %v1576
    %1578 = vdwg.mxu0
    %v1579 = vadd.f32 %v1499, %v1575
    %v1580 = vadd.f32 %v1501, %v1577
    %s1581 = scalar_lea.vmem %s0, 136
    %v1582 = vld [vmem:[%s1581] sm:$0x7f]
    %v1584 = vsel %vm65, %v1582, 0
    %1586 = vmatprep.subr.mxu0 %v305
    %1587 = vmatpush1.msra.mxu0 %v304
    %1588 = vmatprep.subr.mxu0 %v307
    %1589 = vmatpush1.msra.mxu0 %v306
    %1590 = vmatprep.subr.mxu0 %v309
    %1591 = vmatpush1.msra.mxu0 %v308
    %1592 = vmatprep.subr.mxu0 %v311
    %1593 = vmatpush1.msra.mxu0 %v310
    %1594 = vmatprep.subr.mxu0 0.0
    %1595 = vmatpush1.msra.mxu0 0.0
    %1596 = vmatprep.subr.mxu0 0.0
    %1597 = vmatpush1.msra.mxu0 0.0
    %1598 = vmatprep.subr.mxu0 0.0
    %1599 = vmatpush1.msra.mxu0 0.0
    %1600 = vmatprep.subr.mxu0 0.0
    %1601 = vmatpush1.msra.mxu0 0.0
    %1602 = vmatprep.subr.mxu0 0.0
    %1603 = vmatpush1.msra.mxu0 0.0
    %1604 = vmatprep.subr.mxu0 0.0
    %1605 = vmatpush1.msra.mxu0 0.0
    %1606 = vmatprep.subr.mxu0 0.0
    %1607 = vmatpush1.msra.mxu0 0.0
    %1608 = vmatprep.subr.mxu0 0.0
    %1609 = vmatpush1.msra.mxu0 0.0
    %1610 = vmatprep.subr.mxu0 0.0
    %1611 = vmatpush1.msra.mxu0 0.0
    %1612 = vmatprep.subr.mxu0 0.0
    %1613 = vmatpush1.msra.mxu0 0.0
    %1614 = vmatprep.subr.mxu0 0.0
    %1615 = vmatpush1.msra.mxu0 0.0
    %1616 = vmatprep.subr.mxu0 0.0
    %1617 = vmatpush1.msra.mxu0 0.0
    %1618 = vmatprep.subr.mxu0 0.0
    %1619 = vmatpush1.msra.mxu0 0.0
    %1620 = vmatprep.subr.mxu0 0.0
    %1621 = vmatpush1.msra.mxu0 0.0
    %1622 = vmatprep.subr.mxu0 0.0
    %1623 = vmatpush1.msra.mxu0 0.0
    %1624 = vmatprep.subr.mxu0 0.0
    %1625 = vmatpush1.msra.mxu0 0.0
    %1626 = vmatprep.subr.mxu0 0.0
    %1627 = vmatpush1.msra.mxu0 0.0
    %1628 = vmatprep.subr.mxu0 0.0
    %1629 = vmatpush1.msra.mxu0 0.0
    %1630 = vmatprep.subr.mxu0 0.0
    %1631 = vmatpush1.msra.mxu0 0.0
    %1632 = vmatprep.subr.mxu0 0.0
    %1633 = vmatpush1.msra.mxu0 0.0
    %1634 = vmatprep.subr.mxu0 0.0
    %1635 = vmatpush1.msra.mxu0 0.0
    %1636 = vmatprep.subr.mxu0 0.0
    %1637 = vmatpush1.msra.mxu0 0.0
    %1638 = vmatprep.subr.mxu0 0.0
    %1639 = vmatpush1.msra.mxu0 0.0
    %1640 = vmatprep.subr.mxu0 0.0
    %1641 = vmatpush1.msra.mxu0 0.0
    %1642 = vmatprep.subr.mxu0 0.0
    %1643 = vmatpush1.msra.mxu0 0.0
    %1644 = vmatprep.subr.mxu0 0.0
    %1645 = vmatpush1.msra.mxu0 0.0
    %1646 = vmatprep.subr.mxu0 0.0
    %1647 = vmatpush1.msra.mxu0 0.0
    %1648 = vmatprep.subr.mxu0 0.0
    %1649 = vmatpush1.msra.mxu0 0.0
    %1650 = vmatprep.mubr.f32.mxu0 0.0
    %1651 = vmatmul.mubr.f32.gmra.mrb[0].mxu0 %v1584
    %v1652 = vpop.f32.mrb[0].mxu0
    %v1653 = vadd.f32 0.0, %v1652
    %v1654 = vpop.f32.mrb[0].mxu0
    %v1655 = vadd.f32 0.0, %v1654
    %1656 = vdwg.mxu0
    %v1657 = vadd.f32 %v1579, %v1653
    %v1658 = vadd.f32 %v1580, %v1655
    %s1659 = scalar_lea.vmem %s0, 152
    %v1660 = vld [vmem:[%s1659] sm:$0x7f]
    %v1662 = vsel %vm65, %v1660, 0
    %1664 = vmatprep.subr.mxu0 %v392
    %1665 = vmatpush1.msra.mxu0 %v391
    %1666 = vmatprep.subr.mxu0 %v394
    %1667 = vmatpush1.msra.mxu0 %v393
    %1668 = vmatprep.subr.mxu0 %v396
    %1669 = vmatpush1.msra.mxu0 %v395
    %1670 = vmatprep.subr.mxu0 %v398
    %1671 = vmatpush1.msra.mxu0 %v397
    %1672 = vmatprep.subr.mxu0 0.0
    %1673 = vmatpush1.msra.mxu0 0.0
    %1674 = vmatprep.subr.mxu0 0.0
    %1675 = vmatpush1.msra.mxu0 0.0
    %1676 = vmatprep.subr.mxu0 0.0
    %1677 = vmatpush1.msra.mxu0 0.0
    %1678 = vmatprep.subr.mxu0 0.0
    %1679 = vmatpush1.msra.mxu0 0.0
    %1680 = vmatprep.subr.mxu0 0.0
    %1681 = vmatpush1.msra.mxu0 0.0
    %1682 = vmatprep.subr.mxu0 0.0
    %1683 = vmatpush1.msra.mxu0 0.0
    %1684 = vmatprep.subr.mxu0 0.0
    %1685 = vmatpush1.msra.mxu0 0.0
    %1686 = vmatprep.subr.mxu0 0.0
    %1687 = vmatpush1.msra.mxu0 0.0
    %1688 = vmatprep.subr.mxu0 0.0
    %1689 = vmatpush1.msra.mxu0 0.0
    %1690 = vmatprep.subr.mxu0 0.0
    %1691 = vmatpush1.msra.mxu0 0.0
    %1692 = vmatprep.subr.mxu0 0.0
    %1693 = vmatpush1.msra.mxu0 0.0
    %1694 = vmatprep.subr.mxu0 0.0
    %1695 = vmatpush1.msra.mxu0 0.0
    %1696 = vmatprep.subr.mxu0 0.0
    %1697 = vmatpush1.msra.mxu0 0.0
    %1698 = vmatprep.subr.mxu0 0.0
    %1699 = vmatpush1.msra.mxu0 0.0
    %1700 = vmatprep.subr.mxu0 0.0
    %1701 = vmatpush1.msra.mxu0 0.0
    %1702 = vmatprep.subr.mxu0 0.0
    %1703 = vmatpush1.msra.mxu0 0.0
    %1704 = vmatprep.subr.mxu0 0.0
    %1705 = vmatpush1.msra.mxu0 0.0
    %1706 = vmatprep.subr.mxu0 0.0
    %1707 = vmatpush1.msra.mxu0 0.0
    %1708 = vmatprep.subr.mxu0 0.0
    %1709 = vmatpush1.msra.mxu0 0.0
    %1710 = vmatprep.subr.mxu0 0.0
    %1711 = vmatpush1.msra.mxu0 0.0
    %1712 = vmatprep.subr.mxu0 0.0
    %1713 = vmatpush1.msra.mxu0 0.0
    %1714 = vmatprep.subr.mxu0 0.0
    %1715 = vmatpush1.msra.mxu0 0.0
    %1716 = vmatprep.subr.mxu0 0.0
    %1717 = vmatpush1.msra.mxu0 0.0
    %1718 = vmatprep.subr.mxu0 0.0
    %1719 = vmatpush1.msra.mxu0 0.0
    %1720 = vmatprep.subr.mxu0 0.0
    %1721 = vmatpush1.msra.mxu0 0.0
    %1722 = vmatprep.subr.mxu0 0.0
    %1723 = vmatpush1.msra.mxu0 0.0
    %1724 = vmatprep.subr.mxu0 0.0
    %1725 = vmatpush1.msra.mxu0 0.0
    %1726 = vmatprep.subr.mxu0 0.0
    %1727 = vmatpush1.msra.mxu0 0.0
    %1728 = vmatprep.mubr.f32.mxu0 0.0
    %1729 = vmatmul.mubr.f32.gmra.mrb[0].mxu0 %v1662
    %v1730 = vpop.f32.mrb[0].mxu0
    %v1731 = vadd.f32 0.0, %v1730
    %v1732 = vpop.f32.mrb[0].mxu0
    %v1733 = vadd.f32 0.0, %v1732
    %1734 = vdwg.mxu0
    %v1735 = vadd.f32 %v1657, %v1731
    %v1736 = vadd.f32 %v1658, %v1733
    %v1737 = vsel %vm475, %v1735, 0.0
    %v1738 = vrot.slane %v1737, 4
    %v1739 = vadd.f32 %v1737, %v1738
    %v1740 = vrot.slane %v1739, 2
    %v1741 = vadd.f32 %v1739, %v1740
    %v1742 = vrot.slane %v1741, 1
    %v1743 = vadd.f32 %v1741, %v1742
    %v1744 = vsel %vm483, %v1736, 0.0
    %v1745 = vrot.slane %v1744, 4
    %v1746 = vadd.f32 %v1744, %v1745
    %v1747 = vrot.slane %v1746, 2
    %v1748 = vadd.f32 %v1746, %v1747
    %v1749 = vrot.slane %v1748, 1
    %v1750 = vadd.f32 %v1748, %v1749
    %v1751 = vadd.f32 %v1331, %v1743
    %v1752 = vadd.f32 %v1332, %v1750
    %v1753 = vmul.f32 %v1735, %v1735
    %v1754 = vmul.f32 %v1736, %v1736
    %v1755 = vsel %vm475, %v1753, 0.0
    %v1756 = vrot.slane %v1755, 4
    %v1757 = vadd.f32 %v1755, %v1756
    %v1758 = vrot.slane %v1757, 2
    %v1759 = vadd.f32 %v1757, %v1758
    %v1760 = vrot.slane %v1759, 1
    %v1761 = vadd.f32 %v1759, %v1760
    %v1762 = vsel %vm483, %v1754, 0.0
    %v1763 = vrot.slane %v1762, 4
    %v1764 = vadd.f32 %v1762, %v1763
    %v1765 = vrot.slane %v1764, 2
    %v1766 = vadd.f32 %v1764, %v1765
    %v1767 = vrot.slane %v1766, 1
    %v1768 = vadd.f32 %v1766, %v1767
    %v1769 = vadd.f32 %v1349, %v1761
    %v1770 = vadd.f32 %v1350, %v1768
    %v1771 = vld [vmem:[%s7] sm:$0xff]
    %v1772 = vld [vmem:[%s7 + $0x8] sm:$0xff]
    %v1773 = vld [vmem:[%s7 + $0x10] sm:$0xff]
    %v1774 = vld [vmem:[%s7 + $0x18] sm:$0xff]
    %v1775 = vld [vmem:[%s7 + $0x20] sm:$0xff]
    %v1776 = vld [vmem:[%s7 + $0x28] sm:$0xff]
    %v1777 = vld [vmem:[%s7 + $0x30] sm:$0xff]
    %v1778 = vld [vmem:[%s7 + $0x38] sm:$0xff]
    %v1779 = vld [vmem:[%s7 + $0x40] sm:$0xff]
    %v1780 = vld [vmem:[%s7 + $0x48] sm:$0xff]
    %v1781 = vld [vmem:[%s7 + $0x50] sm:$0xff]
    %v1782 = vld [vmem:[%s7 + $0x58] sm:$0xff]
    %v1783 = vld [vmem:[%s7 + $0x60] sm:$0xff]
    %v1784 = vld [vmem:[%s7 + $0x68] sm:$0xff]
    %v1785 = vld [vmem:[%s7 + $0x70] sm:$0xff]
    %v1786 = vld [vmem:[%s7 + $0x78] sm:$0xff]
    %v1787 = vld [vmem:[%s7 + $0x80] sm:$0xff]
    %v1788 = vld [vmem:[%s7 + $0x88] sm:$0xff]
    %v1789 = vld [vmem:[%s7 + $0x90] sm:$0xff]
    %v1790 = vld [vmem:[%s7 + $0x98] sm:$0xff]
    %v1791 = vld [vmem:[%s7 + $0xa0] sm:$0xff]
    %v1792 = vld [vmem:[%s7 + $0xa8] sm:$0xff]
    %v1793 = vld [vmem:[%s7 + $0xb0] sm:$0xff]
    %v1794 = vld [vmem:[%s7 + $0xb8] sm:$0xff]
    %v1795 = vld [vmem:[%s7 + $0xc0] sm:$0xff]
    %v1796 = vld [vmem:[%s7 + $0xc8] sm:$0xff]
    %v1797 = vld [vmem:[%s7 + $0xd0] sm:$0xff]
    %v1798 = vld [vmem:[%s7 + $0xd8] sm:$0xff]
    %vm1799 = vcmask 785408
    %v1801 = vsel %vm1799, %v1752, 0
    %1803 = vmatprep.subr.mxu0 0.0
    %1804 = vmatpush1.msra.mxu0 %v1771
    %1805 = vmatprep.subr.mxu0 0.0
    %1806 = vmatpush1.msra.mxu0 %v1772
    %1807 = vmatprep.subr.mxu0 0.0
    %1808 = vmatpush1.msra.mxu0 %v1773
    %1809 = vmatprep.subr.mxu0 0.0
    %1810 = vmatpush1.msra.mxu0 %v1774
    %1811 = vmatprep.subr.mxu0 0.0
    %1812 = vmatpush1.msra.mxu0 %v1775
    %1813 = vmatprep.subr.mxu0 0.0
    %1814 = vmatpush1.msra.mxu0 %v1776
    %1815 = vmatprep.subr.mxu0 0.0
    %1816 = vmatpush1.msra.mxu0 %v1777
    %1817 = vmatprep.subr.mxu0 0.0
    %1818 = vmatpush1.msra.mxu0 %v1778
    %1819 = vmatprep.subr.mxu0 0.0
    %1820 = vmatpush1.msra.mxu0 %v1779
    %1821 = vmatprep.subr.mxu0 0.0
    %1822 = vmatpush1.msra.mxu0 %v1780
    %1823 = vmatprep.subr.mxu0 0.0
    %1824 = vmatpush1.msra.mxu0 %v1781
    %1825 = vmatprep.subr.mxu0 0.0
    %1826 = vmatpush1.msra.mxu0 %v1782
    %1827 = vmatprep.subr.mxu0 0.0
    %1828 = vmatpush1.msra.mxu0 %v1783
    %1829 = vmatprep.subr.mxu0 0.0
    %1830 = vmatpush1.msra.mxu0 %v1784
    %1831 = vmatprep.subr.mxu0 0.0
    %1832 = vmatpush1.msra.mxu0 %v1785
    %1833 = vmatprep.subr.mxu0 0.0
    %1834 = vmatpush1.msra.mxu0 %v1786
    %1835 = vmatprep.subr.mxu0 0.0
    %1836 = vmatpush1.msra.mxu0 %v1787
    %1837 = vmatprep.subr.mxu0 0.0
    %1838 = vmatpush1.msra.mxu0 %v1788
    %1839 = vmatprep.subr.mxu0 0.0
    %1840 = vmatpush1.msra.mxu0 %v1789
    %1841 = vmatprep.subr.mxu0 0.0
    %1842 = vmatpush1.msra.mxu0 %v1790
    %1843 = vmatprep.subr.mxu0 0.0
    %1844 = vmatpush1.msra.mxu0 %v1791
    %1845 = vmatprep.subr.mxu0 0.0
    %1846 = vmatpush1.msra.mxu0 %v1792
    %1847 = vmatprep.subr.mxu0 0.0
    %1848 = vmatpush1.msra.mxu0 %v1793
    %1849 = vmatprep.subr.mxu0 0.0
    %1850 = vmatpush1.msra.mxu0 %v1794
    %1851 = vmatprep.subr.mxu0 0.0
    %1852 = vmatpush1.msra.mxu0 %v1795
    %1853 = vmatprep.subr.mxu0 0.0
    %1854 = vmatpush1.msra.mxu0 %v1796
    %1855 = vmatprep.subr.mxu0 0.0
    %1856 = vmatpush1.msra.mxu0 %v1797
    %1857 = vmatprep.subr.mxu0 0.0
    %1858 = vmatpush1.msra.mxu0 %v1798
    %1859 = vmatprep.subr.mxu0 0.0
    %1860 = vmatpush1.msra.mxu0 0.0
    %1861 = vmatprep.subr.mxu0 0.0
    %1862 = vmatpush1.msra.mxu0 0.0
    %1863 = vmatprep.subr.mxu0 0.0
    %1864 = vmatpush1.msra.mxu0 0.0
    %1865 = vmatprep.subr.mxu0 0.0
    %1866 = vmatpush1.msra.mxu0 0.0
    %1867 = vmatprep.mubr.f32.mxu0 %v1801
    %1868 = vmatmul.mubr.f32.gmra.mrb[0].mxu0 %v1751
    %v1869 = vpop.f32.mrb[0].mxu0
    %v1870 = vadd.f32 0.0, %v1869
    %v1871 = vpop.f32.mrb[0].mxu0
    %1872 = vdwg.mxu0
    %v1874 = vsel %vm1799, %v1770, 0
    %1876 = vmatprep.subr.mxu0 0.0
    %1877 = vmatpush1.msra.mxu0 %v1771
    %1878 = vmatprep.subr.mxu0 0.0
    %1879 = vmatpush1.msra.mxu0 %v1772
    %1880 = vmatprep.subr.mxu0 0.0
    %1881 = vmatpush1.msra.mxu0 %v1773
    %1882 = vmatprep.subr.mxu0 0.0
    %1883 = vmatpush1.msra.mxu0 %v1774
    %1884 = vmatprep.subr.mxu0 0.0
    %1885 = vmatpush1.msra.mxu0 %v1775
    %1886 = vmatprep.subr.mxu0 0.0
    %1887 = vmatpush1.msra.mxu0 %v1776
    %1888 = vmatprep.subr.mxu0 0.0
    %1889 = vmatpush1.msra.mxu0 %v1777
    %1890 = vmatprep.subr.mxu0 0.0
    %1891 = vmatpush1.msra.mxu0 %v1778
    %1892 = vmatprep.subr.mxu0 0.0
    %1893 = vmatpush1.msra.mxu0 %v1779
    %1894 = vmatprep.subr.mxu0 0.0
    %1895 = vmatpush1.msra.mxu0 %v1780
    %1896 = vmatprep.subr.mxu0 0.0
    %1897 = vmatpush1.msra.mxu0 %v1781
    %1898 = vmatprep.subr.mxu0 0.0
    %1899 = vmatpush1.msra.mxu0 %v1782
    %1900 = vmatprep.subr.mxu0 0.0
    %1901 = vmatpush1.msra.mxu0 %v1783
    %1902 = vmatprep.subr.mxu0 0.0
    %1903 = vmatpush1.msra.mxu0 %v1784
    %1904 = vmatprep.subr.mxu0 0.0
    %1905 = vmatpush1.msra.mxu0 %v1785
    %1906 = vmatprep.subr.mxu0 0.0
    %1907 = vmatpush1.msra.mxu0 %v1786
    %1908 = vmatprep.subr.mxu0 0.0
    %1909 = vmatpush1.msra.mxu0 %v1787
    %1910 = vmatprep.subr.mxu0 0.0
    %1911 = vmatpush1.msra.mxu0 %v1788
    %1912 = vmatprep.subr.mxu0 0.0
    %1913 = vmatpush1.msra.mxu0 %v1789
    %1914 = vmatprep.subr.mxu0 0.0
    %1915 = vmatpush1.msra.mxu0 %v1790
    %1916 = vmatprep.subr.mxu0 0.0
    %1917 = vmatpush1.msra.mxu0 %v1791
    %1918 = vmatprep.subr.mxu0 0.0
    %1919 = vmatpush1.msra.mxu0 %v1792
    %1920 = vmatprep.subr.mxu0 0.0
    %1921 = vmatpush1.msra.mxu0 %v1793
    %1922 = vmatprep.subr.mxu0 0.0
    %1923 = vmatpush1.msra.mxu0 %v1794
    %1924 = vmatprep.subr.mxu0 0.0
    %1925 = vmatpush1.msra.mxu0 %v1795
    %1926 = vmatprep.subr.mxu0 0.0
    %1927 = vmatpush1.msra.mxu0 %v1796
    %1928 = vmatprep.subr.mxu0 0.0
    %1929 = vmatpush1.msra.mxu0 %v1797
    %1930 = vmatprep.subr.mxu0 0.0
    %1931 = vmatpush1.msra.mxu0 %v1798
    %1932 = vmatprep.subr.mxu0 0.0
    %1933 = vmatpush1.msra.mxu0 0.0
    %1934 = vmatprep.subr.mxu0 0.0
    %1935 = vmatpush1.msra.mxu0 0.0
    %1936 = vmatprep.subr.mxu0 0.0
    %1937 = vmatpush1.msra.mxu0 0.0
    %1938 = vmatprep.subr.mxu0 0.0
    %1939 = vmatpush1.msra.mxu0 0.0
    %1940 = vmatprep.mubr.f32.mxu0 %v1874
    %1941 = vmatmul.mubr.f32.gmra.mrb[0].mxu0 %v1769
    %v1942 = vpop.f32.mrb[0].mxu0
    %v1943 = vadd.f32 0.0, %v1942
    %v1944 = vpop.f32.mrb[0].mxu0
    %1945 = vdwg.mxu0
    %v1946 = vrcp.pop 392.0
    %v1947 = vmul.f32 %v1870, %v1946
    %v1948 = vmul.f32 %v1943, %v1946
    %v1949 = vmul.f32 %v1947, %v1947
    %v1950 = vsub.f32 %v1948, %v1949
    %v1951 = vmax.f32 %v1950, 0.0
    %v1952 = vld [vmem:[%s2] sm:$0x1]
    %v1953 = vadd.f32 %v1951, 1e-05
    %v1954 = vrsqrt.pop %v1953
    %v1955 = vmul.f32 %v1952, %v1954
    %v1956 = vld [vmem:[%s3] sm:$0x1]
    %v1957 = vmul.f32 %v1947, %v1955
    %v1958 = vsub.f32 %v1956, %v1957
    %v1959 = vld [vmem:[%s8] sm:$0xff]
    %v1960 = vld [vmem:[%s8 + $0x8] sm:$0xff]
    %v1961 = vld [vmem:[%s8 + $0x10] sm:$0xff]
    %v1962 = vld [vmem:[%s8 + $0x18] sm:$0xff]
    %vm1963 = vcmask 130048
    %v1965 = vsel %vm1963, %v1955, 0
    %1967 = vmatprep.subr.mxu0 %v1960
    %1968 = vmatpush1.msra.mxu0 %v1959
    %1969 = vmatprep.subr.mxu0 %v1962
    %1970 = vmatpush1.msra.mxu0 %v1961
    %1971 = vmatprep.subr.mxu0 0.0
    %1972 = vmatpush1.msra.mxu0 0.0
    %1973 = vmatprep.subr.mxu0 0.0
    %1974 = vmatpush1.msra.mxu0 0.0
    %1975 = vmatprep.subr.mxu0 0.0
    %1976 = vmatpush1.msra.mxu0 0.0
    %1977 = vmatprep.subr.mxu0 0.0
    %1978 = vmatpush1.msra.mxu0 0.0
    %1979 = vmatprep.subr.mxu0 0.0
    %1980 = vmatpush1.msra.mxu0 0.0
    %1981 = vmatprep.subr.mxu0 0.0
    %1982 = vmatpush1.msra.mxu0 0.0
    %1983 = vmatprep.subr.mxu0 0.0
    %1984 = vmatpush1.msra.mxu0 0.0
    %1985 = vmatprep.subr.mxu0 0.0
    %1986 = vmatpush1.msra.mxu0 0.0
    %1987 = vmatprep.subr.mxu0 0.0
    %1988 = vmatpush1.msra.mxu0 0.0
    %1989 = vmatprep.subr.mxu0 0.0
    %1990 = vmatpush1.msra.mxu0 0.0
    %1991 = vmatprep.subr.mxu0 0.0
    %1992 = vmatpush1.msra.mxu0 0.0
    %1993 = vmatprep.subr.mxu0 0.0
    %1994 = vmatpush1.msra.mxu0 0.0
    %1995 = vmatprep.subr.mxu0 0.0
    %1996 = vmatpush1.msra.mxu0 0.0
    %1997 = vmatprep.subr.mxu0 0.0
    %1998 = vmatpush1.msra.mxu0 0.0
    %1999 = vmatprep.subr.mxu0 0.0
    %2000 = vmatpush1.msra.mxu0 0.0
    %2001 = vmatprep.subr.mxu0 0.0
    %2002 = vmatpush1.msra.mxu0 0.0
    %2003 = vmatprep.subr.mxu0 0.0
    %2004 = vmatpush1.msra.mxu0 0.0
    %2005 = vmatprep.subr.mxu0 0.0
    %2006 = vmatpush1.msra.mxu0 0.0
    %2007 = vmatprep.subr.mxu0 0.0
    %2008 = vmatpush1.msra.mxu0 0.0
    %2009 = vmatprep.subr.mxu0 0.0
    %2010 = vmatpush1.msra.mxu0 0.0
    %2011 = vmatprep.subr.mxu0 0.0
    %2012 = vmatpush1.msra.mxu0 0.0
    %2013 = vmatprep.subr.mxu0 0.0
    %2014 = vmatpush1.msra.mxu0 0.0
    %2015 = vmatprep.subr.mxu0 0.0
    %2016 = vmatpush1.msra.mxu0 0.0
    %2017 = vmatprep.subr.mxu0 0.0
    %2018 = vmatpush1.msra.mxu0 0.0
    %2019 = vmatprep.subr.mxu0 0.0
    %2020 = vmatpush1.msra.mxu0 0.0
    %2021 = vmatprep.subr.mxu0 0.0
    %2022 = vmatpush1.msra.mxu0 0.0
    %2023 = vmatprep.subr.mxu0 0.0
    %2024 = vmatpush1.msra.mxu0 0.0
    %2025 = vmatprep.subr.mxu0 0.0
    %2026 = vmatpush1.msra.mxu0 0.0
    %2027 = vmatprep.subr.mxu0 0.0
    %2028 = vmatpush1.msra.mxu0 0.0
    %2029 = vmatprep.subr.mxu0 0.0
    %2030 = vmatpush1.msra.mxu0 0.0
    %2031 = vmatprep.mubr.f32.mxu0 0.0
    %2032 = vmatmul.mubr.f32.gmra.mrb[0].mxu0 %v1965
    %v2033 = vpop.f32.mrb[0].mxu0
    %v2034 = vadd.f32 0.0, %v2033
    %v2035 = vpop.f32.mrb[0].mxu0
    %v2036 = vadd.f32 0.0, %v2035
    %2037 = vdwg.mxu0
    %v2039 = vsel %vm1963, %v1958, 0
    %2041 = vmatprep.subr.mxu0 %v1960
    %2042 = vmatpush1.msra.mxu0 %v1959
    %2043 = vmatprep.subr.mxu0 %v1962
    %2044 = vmatpush1.msra.mxu0 %v1961
    %2045 = vmatprep.subr.mxu0 0.0
    %2046 = vmatpush1.msra.mxu0 0.0
    %2047 = vmatprep.subr.mxu0 0.0
    %2048 = vmatpush1.msra.mxu0 0.0
    %2049 = vmatprep.subr.mxu0 0.0
    %2050 = vmatpush1.msra.mxu0 0.0
    %2051 = vmatprep.subr.mxu0 0.0
    %2052 = vmatpush1.msra.mxu0 0.0
    %2053 = vmatprep.subr.mxu0 0.0
    %2054 = vmatpush1.msra.mxu0 0.0
    %2055 = vmatprep.subr.mxu0 0.0
    %2056 = vmatpush1.msra.mxu0 0.0
    %2057 = vmatprep.subr.mxu0 0.0
    %2058 = vmatpush1.msra.mxu0 0.0
    %2059 = vmatprep.subr.mxu0 0.0
    %2060 = vmatpush1.msra.mxu0 0.0
    %2061 = vmatprep.subr.mxu0 0.0
    %2062 = vmatpush1.msra.mxu0 0.0
    %2063 = vmatprep.subr.mxu0 0.0
    %2064 = vmatpush1.msra.mxu0 0.0
    %2065 = vmatprep.subr.mxu0 0.0
    %2066 = vmatpush1.msra.mxu0 0.0
    %2067 = vmatprep.subr.mxu0 0.0
    %2068 = vmatpush1.msra.mxu0 0.0
    %2069 = vmatprep.subr.mxu0 0.0
    %2070 = vmatpush1.msra.mxu0 0.0
    %2071 = vmatprep.subr.mxu0 0.0
    %2072 = vmatpush1.msra.mxu0 0.0
    %2073 = vmatprep.subr.mxu0 0.0
    %2074 = vmatpush1.msra.mxu0 0.0
    %2075 = vmatprep.subr.mxu0 0.0
    %2076 = vmatpush1.msra.mxu0 0.0
    %2077 = vmatprep.subr.mxu0 0.0
    %2078 = vmatpush1.msra.mxu0 0.0
    %2079 = vmatprep.subr.mxu0 0.0
    %2080 = vmatpush1.msra.mxu0 0.0
    %2081 = vmatprep.subr.mxu0 0.0
    %2082 = vmatpush1.msra.mxu0 0.0
    %2083 = vmatprep.subr.mxu0 0.0
    %2084 = vmatpush1.msra.mxu0 0.0
    %2085 = vmatprep.subr.mxu0 0.0
    %2086 = vmatpush1.msra.mxu0 0.0
    %2087 = vmatprep.subr.mxu0 0.0
    %2088 = vmatpush1.msra.mxu0 0.0
    %2089 = vmatprep.subr.mxu0 0.0
    %2090 = vmatpush1.msra.mxu0 0.0
    %2091 = vmatprep.subr.mxu0 0.0
    %2092 = vmatpush1.msra.mxu0 0.0
    %2093 = vmatprep.subr.mxu0 0.0
    %2094 = vmatpush1.msra.mxu0 0.0
    %2095 = vmatprep.subr.mxu0 0.0
    %2096 = vmatpush1.msra.mxu0 0.0
    %2097 = vmatprep.subr.mxu0 0.0
    %2098 = vmatpush1.msra.mxu0 0.0
    %2099 = vmatprep.subr.mxu0 0.0
    %2100 = vmatpush1.msra.mxu0 0.0
    %2101 = vmatprep.subr.mxu0 0.0
    %2102 = vmatpush1.msra.mxu0 0.0
    %2103 = vmatprep.subr.mxu0 0.0
    %2104 = vmatpush1.msra.mxu0 0.0
    %2105 = vmatprep.mubr.f32.mxu0 0.0
    %2106 = vmatmul.mubr.f32.gmra.mrb[0].mxu0 %v2039
    %v2107 = vpop.f32.mrb[0].mxu0
    %v2108 = vadd.f32 0.0, %v2107
    %v2109 = vpop.f32.mrb[0].mxu0
    %v2110 = vadd.f32 0.0, %v2109
    %2111 = vdwg.mxu0
    %2112 = vst [vmem:[#allocation2] sm:$0xff] 0.0
    %2113 = vst.msk [vmem:[#allocation2 + $0x8] sm:$0xff] %vm1799, 0.0
    %2114 = vst [vmem:[#allocation2 + $0x10] sm:$0x1] 0.0
    %vm2115 = vcmask 778240
    %2116 = vst.msk [vmem:[#allocation2 + $0x18] sm:$0x1] %vm2115, 0.0
    %2117 = vst [vmem:[#allocation2 + $0x20] sm:$0xff] 0.0
    %2118 = vst.msk [vmem:[#allocation2 + $0x28] sm:$0xff] %vm1799, 0.0
    %2119 = vst [vmem:[#allocation2 + $0x30] sm:$0x1] 0.0
    %2120 = vst.msk [vmem:[#allocation2 + $0x38] sm:$0x1] %vm2115, 0.0
    %2121 = vst [vmem:[#allocation2 + $0x40] sm:$0xff] 0.0
    %2122 = vst.msk [vmem:[#allocation2 + $0x48] sm:$0xff] %vm1799, 0.0
    %2123 = vst [vmem:[#allocation2 + $0x50] sm:$0x1] 0.0
    %2124 = vst.msk [vmem:[#allocation2 + $0x58] sm:$0x1] %vm2115, 0.0
    %2125 = vst [vmem:[#allocation2 + $0x60] sm:$0xff] 0.0
    %2126 = vst.msk [vmem:[#allocation2 + $0x68] sm:$0xff] %vm1799, 0.0
    %2127 = vst [vmem:[#allocation2 + $0x70] sm:$0x1] 0.0
    %2128 = vst.msk [vmem:[#allocation2 + $0x78] sm:$0x1] %vm2115, 0.0
    %v2129 = vlaneseq
    %v2130 = vshrl.u32 %v2129, 7
    %v2131 = vsub.s32 0, %v2130
    %v2132 = vrot.slane %v2034, %v2131
    %v2133 = vlaneseq
    %v2134 = vshrl.u32 %v2133, 7
    %v2135 = vsub.s32 0, %v2134
    %v2136 = vrot.slane %v2036, %v2135
    %v2137 = vmul.f32 %v473, %v2132
    %v2138 = vmul.f32 %v474, %v2136
    %v2139 = vlaneseq
    %v2140 = vshrl.u32 %v2139, 7
    %v2141 = vsub.s32 0, %v2140
    %v2142 = vrot.slane %v2108, %v2141
    %v2143 = vlaneseq
    %v2144 = vshrl.u32 %v2143, 7
    %v2145 = vsub.s32 0, %v2144
    %v2146 = vrot.slane %v2110, %v2145
    %v2147 = vadd.f32 %v2137, %v2142
    %v2148 = vadd.f32 %v2138, %v2146
    %v2149 = vmax.f32 %v2147, 0.0
    %v2150 = vmax.f32 %v2148, 0.0
    %v2153 = vrot.slane %v2149, 7
    %v2154 = vrot.slane %v2150, 7
    %2157 = vst [vmem:[#allocation2] sm:$0xfe] %v2153
    %vm2158 = vcmask 785409
    %2159 = vst.msk [vmem:[#allocation2 + $0x8] sm:$0xfe] %vm2158, %v2154
    %v2160 = vmul.f32 %v895, %v2132
    %v2161 = vmul.f32 %v896, %v2136
    %v2162 = vadd.f32 %v2160, %v2142
    %v2163 = vadd.f32 %v2161, %v2146
    %v2164 = vmax.f32 %v2162, 0.0
    %v2165 = vmax.f32 %v2163, 0.0
    %v2168 = vrot.slane %v2164, 7
    %v2169 = vrot.slane %v2165, 7
    %s2172 = scalar_lea.vmem [#allocation2], 32
    %2173 = vst [vmem:[%s2172] sm:$0xfe] %v2168
    %2174 = vst.msk [vmem:[%s2172 + $0x8] sm:$0xfe] %vm2158, %v2169
    %v2175 = vmul.f32 %v1315, %v2132
    %v2176 = vmul.f32 %v1316, %v2136
    %v2177 = vadd.f32 %v2175, %v2142
    %v2178 = vadd.f32 %v2176, %v2146
    %v2179 = vmax.f32 %v2177, 0.0
    %v2180 = vmax.f32 %v2178, 0.0
    %v2183 = vrot.slane %v2179, 7
    %v2184 = vrot.slane %v2180, 7
    %s2187 = scalar_lea.vmem [#allocation2], 64
    %2188 = vst [vmem:[%s2187] sm:$0xfe] %v2183
    %2189 = vst.msk [vmem:[%s2187 + $0x8] sm:$0xfe] %vm2158, %v2184
    %v2190 = vmul.f32 %v1735, %v2132
    %v2191 = vmul.f32 %v1736, %v2136
    %v2192 = vadd.f32 %v2190, %v2142
    %v2193 = vadd.f32 %v2191, %v2146
    %v2194 = vmax.f32 %v2192, 0.0
    %v2195 = vmax.f32 %v2193, 0.0
    %v2198 = vrot.slane %v2194, 7
    %v2199 = vrot.slane %v2195, 7
    %s2202 = scalar_lea.vmem [#allocation2], 96
    %2203 = vst [vmem:[%s2202] sm:$0xfe] %v2198
    %2204 = vst.msk [vmem:[%s2202 + $0x8] sm:$0xfe] %vm2158, %v2199
    %v2205 = vld [vmem:[#allocation2] sm:$0x7f]
    %v2206 = vld [vmem:[#allocation2 + $0x8] sm:$0x7f]
    %v2207 = vld [vmem:[%s4] sm:$0xff]
    %v2208 = vld [vmem:[%s4 + $0x8] sm:$0xff]
    %v2209 = vld [vmem:[%s4 + $0x10] sm:$0xff]
    %v2210 = vld [vmem:[%s4 + $0x18] sm:$0xff]
    %v2211 = vld [vmem:[%s4 + $0x20] sm:$0xff]
    %v2212 = vld [vmem:[%s4 + $0x28] sm:$0xff]
    %v2213 = vld [vmem:[%s4 + $0x30] sm:$0xff]
    %v2214 = vld [vmem:[%s4 + $0x38] sm:$0xff]
    %v2215 = vld [vmem:[%s4 + $0x40] sm:$0xff]
    %v2216 = vld [vmem:[%s4 + $0x48] sm:$0xff]
    %v2217 = vld [vmem:[%s4 + $0x50] sm:$0xff]
    %v2218 = vld [vmem:[%s4 + $0x58] sm:$0xff]
    %v2219 = vld [vmem:[%s4 + $0x60] sm:$0xff]
    %v2220 = vld [vmem:[%s4 + $0x68] sm:$0xff]
    %v2221 = vld [vmem:[%s4 + $0x70] sm:$0xff]
    %v2222 = vld [vmem:[%s4 + $0x78] sm:$0xff]
    %v2223 = vld [vmem:[%s4 + $0x80] sm:$0xff]
    %v2224 = vld [vmem:[%s4 + $0x88] sm:$0xff]
    %v2225 = vld [vmem:[%s4 + $0x90] sm:$0xff]
    %v2226 = vld [vmem:[%s4 + $0x98] sm:$0xff]
    %v2227 = vld [vmem:[%s4 + $0xa0] sm:$0xff]
    %v2228 = vld [vmem:[%s4 + $0xa8] sm:$0xff]
    %v2229 = vld [vmem:[%s4 + $0xb0] sm:$0xff]
    %v2230 = vld [vmem:[%s4 + $0xb8] sm:$0xff]
    %v2231 = vld [vmem:[%s4 + $0xc0] sm:$0xff]
    %v2232 = vld [vmem:[%s4 + $0xc8] sm:$0xff]
    %v2233 = vld [vmem:[%s4 + $0xd0] sm:$0xff]
    %v2234 = vld [vmem:[%s4 + $0xd8] sm:$0xff]
    %v2235 = vld [vmem:[%s4 + $0xe0] sm:$0xff]
    %v2236 = vld [vmem:[%s4 + $0xe8] sm:$0xff]
    %v2237 = vld [vmem:[%s4 + $0xf0] sm:$0xff]
    %v2238 = vld [vmem:[%s4 + $0xf8] sm:$0xff]
    %v2239 = vld [vmem:[%s4 + $0x100] sm:$0xff]
    %v2240 = vld [vmem:[%s4 + $0x108] sm:$0xff]
    %v2241 = vld [vmem:[%s4 + $0x110] sm:$0xff]
    %v2242 = vld [vmem:[%s4 + $0x118] sm:$0xff]
    %v2243 = vld [vmem:[%s4 + $0x120] sm:$0xff]
    %v2244 = vld [vmem:[%s4 + $0x128] sm:$0xff]
    %v2245 = vld [vmem:[%s4 + $0x130] sm:$0xff]
    %v2246 = vld [vmem:[%s4 + $0x138] sm:$0xff]
    %v2247 = vld [vmem:[%s4 + $0x140] sm:$0xff]
    %v2248 = vld [vmem:[%s4 + $0x148] sm:$0xff]
    %v2249 = vld [vmem:[%s4 + $0x150] sm:$0xff]
    %v2250 = vld [vmem:[%s4 + $0x158] sm:$0xff]
    %v2251 = vld [vmem:[%s4 + $0x160] sm:$0xff]
    %v2252 = vld [vmem:[%s4 + $0x168] sm:$0xff]
    %v2253 = vld [vmem:[%s4 + $0x170] sm:$0xff]
    %v2254 = vld [vmem:[%s4 + $0x178] sm:$0xff]
    %v2255 = vld [vmem:[%s4 + $0x180] sm:$0xff]
    %v2256 = vld [vmem:[%s4 + $0x188] sm:$0xff]
    %v2257 = vld [vmem:[%s4 + $0x190] sm:$0xff]
    %v2258 = vld [vmem:[%s4 + $0x198] sm:$0xff]
    %v2259 = vld [vmem:[%s4 + $0x1a0] sm:$0xff]
    %v2260 = vld [vmem:[%s4 + $0x1a8] sm:$0xff]
    %v2261 = vld [vmem:[%s4 + $0x1b0] sm:$0xff]
    %v2262 = vld [vmem:[%s4 + $0x1b8] sm:$0xff]
    %v2263 = vld [vmem:[%s2187] sm:$0x7f]
    %v2264 = vld [vmem:[%s2187 + $0x8] sm:$0x7f]
    %s2265 = scalar_lea.vmem %s4, 448
    %v2266 = vld [vmem:[%s2265] sm:$0xff]
    %v2267 = vld [vmem:[%s2265 + $0x8] sm:$0xff]
    %v2268 = vld [vmem:[%s2265 + $0x10] sm:$0xff]
    %v2269 = vld [vmem:[%s2265 + $0x18] sm:$0xff]
    %v2270 = vld [vmem:[%s2265 + $0x20] sm:$0xff]
    %v2271 = vld [vmem:[%s2265 + $0x28] sm:$0xff]
    %v2272 = vld [vmem:[%s2265 + $0x30] sm:$0xff]
    %v2273 = vld [vmem:[%s2265 + $0x38] sm:$0xff]
    %v2274 = vld [vmem:[%s2265 + $0x40] sm:$0xff]
    %v2275 = vld [vmem:[%s2265 + $0x48] sm:$0xff]
    %v2276 = vld [vmem:[%s2265 + $0x50] sm:$0xff]
    %v2277 = vld [vmem:[%s2265 + $0x58] sm:$0xff]
    %v2278 = vld [vmem:[%s2265 + $0x60] sm:$0xff]
    %v2279 = vld [vmem:[%s2265 + $0x68] sm:$0xff]
    %v2280 = vld [vmem:[%s2265 + $0x70] sm:$0xff]
    %v2281 = vld [vmem:[%s2265 + $0x78] sm:$0xff]
    %v2282 = vld [vmem:[%s2265 + $0x80] sm:$0xff]
    %v2283 = vld [vmem:[%s2265 + $0x88] sm:$0xff]
    %v2284 = vld [vmem:[%s2265 + $0x90] sm:$0xff]
    %v2285 = vld [vmem:[%s2265 + $0x98] sm:$0xff]
    %v2286 = vld [vmem:[%s2265 + $0xa0] sm:$0xff]
    %v2287 = vld [vmem:[%s2265 + $0xa8] sm:$0xff]
    %v2288 = vld [vmem:[%s2265 + $0xb0] sm:$0xff]
    %v2289 = vld [vmem:[%s2265 + $0xb8] sm:$0xff]
    %v2290 = vld [vmem:[%s2265 + $0xc0] sm:$0xff]
    %v2291 = vld [vmem:[%s2265 + $0xc8] sm:$0xff]
    %v2292 = vld [vmem:[%s2265 + $0xd0] sm:$0xff]
    %v2293 = vld [vmem:[%s2265 + $0xd8] sm:$0xff]
    %v2294 = vld [vmem:[%s2265 + $0xe0] sm:$0xff]
    %v2295 = vld [vmem:[%s2265 + $0xe8] sm:$0xff]
    %v2296 = vld [vmem:[%s2265 + $0xf0] sm:$0xff]
    %v2297 = vld [vmem:[%s2265 + $0xf8] sm:$0xff]
    %v2298 = vld [vmem:[%s2265 + $0x100] sm:$0xff]
    %v2299 = vld [vmem:[%s2265 + $0x108] sm:$0xff]
    %v2300 = vld [vmem:[%s2265 + $0x110] sm:$0xff]
    %v2301 = vld [vmem:[%s2265 + $0x118] sm:$0xff]
    %v2302 = vld [vmem:[%s2265 + $0x120] sm:$0xff]
    %v2303 = vld [vmem:[%s2265 + $0x128] sm:$0xff]
    %v2304 = vld [vmem:[%s2265 + $0x130] sm:$0xff]
    %v2305 = vld [vmem:[%s2265 + $0x138] sm:$0xff]
    %v2306 = vld [vmem:[%s2265 + $0x140] sm:$0xff]
    %v2307 = vld [vmem:[%s2265 + $0x148] sm:$0xff]
    %v2308 = vld [vmem:[%s2265 + $0x150] sm:$0xff]
    %v2309 = vld [vmem:[%s2265 + $0x158] sm:$0xff]
    %v2310 = vld [vmem:[%s2265 + $0x160] sm:$0xff]
    %v2311 = vld [vmem:[%s2265 + $0x168] sm:$0xff]
    %v2312 = vld [vmem:[%s2265 + $0x170] sm:$0xff]
    %v2313 = vld [vmem:[%s2265 + $0x178] sm:$0xff]
    %v2314 = vld [vmem:[%s2265 + $0x180] sm:$0xff]
    %v2315 = vld [vmem:[%s2265 + $0x188] sm:$0xff]
    %v2316 = vld [vmem:[%s2265 + $0x190] sm:$0xff]
    %v2317 = vld [vmem:[%s2265 + $0x198] sm:$0xff]
    %v2318 = vld [vmem:[%s2265 + $0x1a0] sm:$0xff]
    %v2319 = vld [vmem:[%s2265 + $0x1a8] sm:$0xff]
    %v2320 = vld [vmem:[%s2265 + $0x1b0] sm:$0xff]
    %v2321 = vld [vmem:[%s2265 + $0x1b8] sm:$0xff]
    %v2323 = vsel %vm1799, %v2264, 0
    %2325 = vmatprep.subr.mxu0 %v2267
    %2326 = vmatpush1.msra.mxu0 %v2266
    %2327 = vmatprep.subr.mxu0 %v2269
    %2328 = vmatpush1.msra.mxu0 %v2268
    %2329 = vmatprep.subr.mxu0 %v2271
    %2330 = vmatpush1.msra.mxu0 %v2270
    %2331 = vmatprep.subr.mxu0 %v2273
    %2332 = vmatpush1.msra.mxu0 %v2272
    %2333 = vmatprep.subr.mxu0 %v2275
    %2334 = vmatpush1.msra.mxu0 %v2274
    %2335 = vmatprep.subr.mxu0 %v2277
    %2336 = vmatpush1.msra.mxu0 %v2276
    %2337 = vmatprep.subr.mxu0 %v2279
    %2338 = vmatpush1.msra.mxu0 %v2278
    %2339 = vmatprep.subr.mxu0 %v2281
    %2340 = vmatpush1.msra.mxu0 %v2280
    %2341 = vmatprep.subr.mxu0 %v2283
    %2342 = vmatpush1.msra.mxu0 %v2282
    %2343 = vmatprep.subr.mxu0 %v2285
    %2344 = vmatpush1.msra.mxu0 %v2284
    %2345 = vmatprep.subr.mxu0 %v2287
    %2346 = vmatpush1.msra.mxu0 %v2286
    %2347 = vmatprep.subr.mxu0 %v2289
    %2348 = vmatpush1.msra.mxu0 %v2288
    %2349 = vmatprep.subr.mxu0 %v2291
    %2350 = vmatpush1.msra.mxu0 %v2290
    %2351 = vmatprep.subr.mxu0 %v2293
    %2352 = vmatpush1.msra.mxu0 %v2292
    %2353 = vmatprep.subr.mxu0 %v2295
    %2354 = vmatpush1.msra.mxu0 %v2294
    %2355 = vmatprep.subr.mxu0 %v2297
    %2356 = vmatpush1.msra.mxu0 %v2296
    %2357 = vmatprep.subr.mxu0 %v2299
    %2358 = vmatpush1.msra.mxu0 %v2298
    %2359 = vmatprep.subr.mxu0 %v2301
    %2360 = vmatpush1.msra.mxu0 %v2300
    %2361 = vmatprep.subr.mxu0 %v2303
    %2362 = vmatpush1.msra.mxu0 %v2302
    %2363 = vmatprep.subr.mxu0 %v2305
    %2364 = vmatpush1.msra.mxu0 %v2304
    %2365 = vmatprep.subr.mxu0 %v2307
    %2366 = vmatpush1.msra.mxu0 %v2306
    %2367 = vmatprep.subr.mxu0 %v2309
    %2368 = vmatpush1.msra.mxu0 %v2308
    %2369 = vmatprep.subr.mxu0 %v2311
    %2370 = vmatpush1.msra.mxu0 %v2310
    %2371 = vmatprep.subr.mxu0 %v2313
    %2372 = vmatpush1.msra.mxu0 %v2312
    %2373 = vmatprep.subr.mxu0 %v2315
    %2374 = vmatpush1.msra.mxu0 %v2314
    %2375 = vmatprep.subr.mxu0 %v2317
    %2376 = vmatpush1.msra.mxu0 %v2316
    %2377 = vmatprep.subr.mxu0 %v2319
    %2378 = vmatpush1.msra.mxu0 %v2318
    %2379 = vmatprep.subr.mxu0 %v2321
    %2380 = vmatpush1.msra.mxu0 %v2320
    %2381 = vmatprep.subr.mxu0 0.0
    %2382 = vmatpush1.msra.mxu0 0.0
    %2383 = vmatprep.subr.mxu0 0.0
    %2384 = vmatpush1.msra.mxu0 0.0
    %2385 = vmatprep.subr.mxu0 0.0
    %2386 = vmatpush1.msra.mxu0 0.0
    %2387 = vmatprep.subr.mxu0 0.0
    %2388 = vmatpush1.msra.mxu0 0.0
    %2389 = vmatprep.mubr.f32.mxu0 %v2323
    %2390 = vmatmul.mubr.f32.gmra.mrb[0].mxu0 %v2263
    %v2391 = vpop.f32.mrb[0].mxu0
    %v2392 = vadd.f32 0.0, %v2391
    %v2393 = vpop.f32.mrb[0].mxu0
    %v2394 = vadd.f32 0.0, %v2393
    %2395 = vdwg.mxu0
    %v2397 = vsel %vm1799, %v2206, 0
    %2399 = vmatprep.subr.mxu0 %v2208
    %2400 = vmatpush1.msra.mxu0 %v2207
    %2401 = vmatprep.subr.mxu0 %v2210
    %2402 = vmatpush1.msra.mxu0 %v2209
    %2403 = vmatprep.subr.mxu0 %v2212
    %2404 = vmatpush1.msra.mxu0 %v2211
    %2405 = vmatprep.subr.mxu0 %v2214
    %2406 = vmatpush1.msra.mxu0 %v2213
    %2407 = vmatprep.subr.mxu0 %v2216
    %2408 = vmatpush1.msra.mxu0 %v2215
    %2409 = vmatprep.subr.mxu0 %v2218
    %2410 = vmatpush1.msra.mxu0 %v2217
    %2411 = vmatprep.subr.mxu0 %v2220
    %2412 = vmatpush1.msra.mxu0 %v2219
    %2413 = vmatprep.subr.mxu0 %v2222
    %2414 = vmatpush1.msra.mxu0 %v2221
    %2415 = vmatprep.subr.mxu0 %v2224
    %2416 = vmatpush1.msra.mxu0 %v2223
    %2417 = vmatprep.subr.mxu0 %v2226
    %2418 = vmatpush1.msra.mxu0 %v2225
    %2419 = vmatprep.subr.mxu0 %v2228
    %2420 = vmatpush1.msra.mxu0 %v2227
    %2421 = vmatprep.subr.mxu0 %v2230
    %2422 = vmatpush1.msra.mxu0 %v2229
    %2423 = vmatprep.subr.mxu0 %v2232
    %2424 = vmatpush1.msra.mxu0 %v2231
    %2425 = vmatprep.subr.mxu0 %v2234
    %2426 = vmatpush1.msra.mxu0 %v2233
    %2427 = vmatprep.subr.mxu0 %v2236
    %2428 = vmatpush1.msra.mxu0 %v2235
    %2429 = vmatprep.subr.mxu0 %v2238
    %2430 = vmatpush1.msra.mxu0 %v2237
    %2431 = vmatprep.subr.mxu0 %v2240
    %2432 = vmatpush1.msra.mxu0 %v2239
    %2433 = vmatprep.subr.mxu0 %v2242
    %2434 = vmatpush1.msra.mxu0 %v2241
    %2435 = vmatprep.subr.mxu0 %v2244
    %2436 = vmatpush1.msra.mxu0 %v2243
    %2437 = vmatprep.subr.mxu0 %v2246
    %2438 = vmatpush1.msra.mxu0 %v2245
    %2439 = vmatprep.subr.mxu0 %v2248
    %2440 = vmatpush1.msra.mxu0 %v2247
    %2441 = vmatprep.subr.mxu0 %v2250
    %2442 = vmatpush1.msra.mxu0 %v2249
    %2443 = vmatprep.subr.mxu0 %v2252
    %2444 = vmatpush1.msra.mxu0 %v2251
    %2445 = vmatprep.subr.mxu0 %v2254
    %2446 = vmatpush1.msra.mxu0 %v2253
    %2447 = vmatprep.subr.mxu0 %v2256
    %2448 = vmatpush1.msra.mxu0 %v2255
    %2449 = vmatprep.subr.mxu0 %v2258
    %2450 = vmatpush1.msra.mxu0 %v2257
    %2451 = vmatprep.subr.mxu0 %v2260
    %2452 = vmatpush1.msra.mxu0 %v2259
    %2453 = vmatprep.subr.mxu0 %v2262
    %2454 = vmatpush1.msra.mxu0 %v2261
    %2455 = vmatprep.subr.mxu0 0.0
    %2456 = vmatpush1.msra.mxu0 0.0
    %2457 = vmatprep.subr.mxu0 0.0
    %2458 = vmatpush1.msra.mxu0 0.0
    %2459 = vmatprep.subr.mxu0 0.0
    %2460 = vmatpush1.msra.mxu0 0.0
    %2461 = vmatprep.subr.mxu0 0.0
    %2462 = vmatpush1.msra.mxu0 0.0
    %2463 = vmatprep.mubr.f32.mxu0 %v2397
    %2464 = vmatmul.mubr.f32.gmra.mrb[0].mxu0 %v2205
    %v2465 = vpop.f32.mrb[0].mxu0
    %v2466 = vadd.f32 %v2392, %v2465
    %v2467 = vpop.f32.mrb[0].mxu0
    %v2468 = vadd.f32 %v2394, %v2467
    %2469 = vdwg.mxu0
    %v2470 = vld [vmem:[#allocation2] sm:$0xfe]
    %v2471 = vld [vmem:[#allocation2 + $0x8] sm:$0xfe]
    %s2472 = scalar_lea.vmem %s4, 896
    %v2473 = vld [vmem:[%s2472] sm:$0xff]
    %v2474 = vld [vmem:[%s2472 + $0x8] sm:$0xff]
    %v2475 = vld [vmem:[%s2472 + $0x10] sm:$0xff]
    %v2476 = vld [vmem:[%s2472 + $0x18] sm:$0xff]
    %v2477 = vld [vmem:[%s2472 + $0x20] sm:$0xff]
    %v2478 = vld [vmem:[%s2472 + $0x28] sm:$0xff]
    %v2479 = vld [vmem:[%s2472 + $0x30] sm:$0xff]
    %v2480 = vld [vmem:[%s2472 + $0x38] sm:$0xff]
    %v2481 = vld [vmem:[%s2472 + $0x40] sm:$0xff]
    %v2482 = vld [vmem:[%s2472 + $0x48] sm:$0xff]
    %v2483 = vld [vmem:[%s2472 + $0x50] sm:$0xff]
    %v2484 = vld [vmem:[%s2472 + $0x58] sm:$0xff]
    %v2485 = vld [vmem:[%s2472 + $0x60] sm:$0xff]
    %v2486 = vld [vmem:[%s2472 + $0x68] sm:$0xff]
    %v2487 = vld [vmem:[%s2472 + $0x70] sm:$0xff]
    %v2488 = vld [vmem:[%s2472 + $0x78] sm:$0xff]
    %v2489 = vld [vmem:[%s2472 + $0x80] sm:$0xff]
    %v2490 = vld [vmem:[%s2472 + $0x88] sm:$0xff]
    %v2491 = vld [vmem:[%s2472 + $0x90] sm:$0xff]
    %v2492 = vld [vmem:[%s2472 + $0x98] sm:$0xff]
    %v2493 = vld [vmem:[%s2472 + $0xa0] sm:$0xff]
    %v2494 = vld [vmem:[%s2472 + $0xa8] sm:$0xff]
    %v2495 = vld [vmem:[%s2472 + $0xb0] sm:$0xff]
    %v2496 = vld [vmem:[%s2472 + $0xb8] sm:$0xff]
    %v2497 = vld [vmem:[%s2472 + $0xc0] sm:$0xff]
    %v2498 = vld [vmem:[%s2472 + $0xc8] sm:$0xff]
    %v2499 = vld [vmem:[%s2472 + $0xd0] sm:$0xff]
    %v2500 = vld [vmem:[%s2472 + $0xd8] sm:$0xff]
    %v2501 = vld [vmem:[%s2472 + $0xe0] sm:$0xff]
    %v2502 = vld [vmem:[%s2472 + $0xe8] sm:$0xff]
    %v2503 = vld [vmem:[%s2472 + $0xf0] sm:$0xff]
    %v2504 = vld [vmem:[%s2472 + $0xf8] sm:$0xff]
    %v2505 = vld [vmem:[%s2472 + $0x100] sm:$0xff]
    %v2506 = vld [vmem:[%s2472 + $0x108] sm:$0xff]
    %v2507 = vld [vmem:[%s2472 + $0x110] sm:$0xff]
    %v2508 = vld [vmem:[%s2472 + $0x118] sm:$0xff]
    %v2509 = vld [vmem:[%s2472 + $0x120] sm:$0xff]
    %v2510 = vld [vmem:[%s2472 + $0x128] sm:$0xff]
    %v2511 = vld [vmem:[%s2472 + $0x130] sm:$0xff]
    %v2512 = vld [vmem:[%s2472 + $0x138] sm:$0xff]
    %v2513 = vld [vmem:[%s2472 + $0x140] sm:$0xff]
    %v2514 = vld [vmem:[%s2472 + $0x148] sm:$0xff]
    %v2515 = vld [vmem:[%s2472 + $0x150] sm:$0xff]
    %v2516 = vld [vmem:[%s2472 + $0x158] sm:$0xff]
    %v2517 = vld [vmem:[%s2472 + $0x160] sm:$0xff]
    %v2518 = vld [vmem:[%s2472 + $0x168] sm:$0xff]
    %v2519 = vld [vmem:[%s2472 + $0x170] sm:$0xff]
    %v2520 = vld [vmem:[%s2472 + $0x178] sm:$0xff]
    %v2521 = vld [vmem:[%s2472 + $0x180] sm:$0xff]
    %v2522 = vld [vmem:[%s2472 + $0x188] sm:$0xff]
    %v2523 = vld [vmem:[%s2472 + $0x190] sm:$0xff]
    %v2524 = vld [vmem:[%s2472 + $0x198] sm:$0xff]
    %v2525 = vld [vmem:[%s2472 + $0x1a0] sm:$0xff]
    %v2526 = vld [vmem:[%s2472 + $0x1a8] sm:$0xff]
    %v2527 = vld [vmem:[%s2472 + $0x1b0] sm:$0xff]
    %v2528 = vld [vmem:[%s2472 + $0x1b8] sm:$0xff]
    %v2531 = vrot.slane %v2470, 1
    %v2532 = vrot.slane %v2471, 1
    %v2534 = vsel %vm1799, %v2532, 0
    %2536 = vmatprep.subr.mxu0 %v2474
    %2537 = vmatpush1.msra.mxu0 %v2473
    %2538 = vmatprep.subr.mxu0 %v2476
    %2539 = vmatpush1.msra.mxu0 %v2475
    %2540 = vmatprep.subr.mxu0 %v2478
    %2541 = vmatpush1.msra.mxu0 %v2477
    %2542 = vmatprep.subr.mxu0 %v2480
    %2543 = vmatpush1.msra.mxu0 %v2479
    %2544 = vmatprep.subr.mxu0 %v2482
    %2545 = vmatpush1.msra.mxu0 %v2481
    %2546 = vmatprep.subr.mxu0 %v2484
    %2547 = vmatpush1.msra.mxu0 %v2483
    %2548 = vmatprep.subr.mxu0 %v2486
    %2549 = vmatpush1.msra.mxu0 %v2485
    %2550 = vmatprep.subr.mxu0 %v2488
    %2551 = vmatpush1.msra.mxu0 %v2487
    %2552 = vmatprep.subr.mxu0 %v2490
    %2553 = vmatpush1.msra.mxu0 %v2489
    %2554 = vmatprep.subr.mxu0 %v2492
    %2555 = vmatpush1.msra.mxu0 %v2491
    %2556 = vmatprep.subr.mxu0 %v2494
    %2557 = vmatpush1.msra.mxu0 %v2493
    %2558 = vmatprep.subr.mxu0 %v2496
    %2559 = vmatpush1.msra.mxu0 %v2495
    %2560 = vmatprep.subr.mxu0 %v2498
    %2561 = vmatpush1.msra.mxu0 %v2497
    %2562 = vmatprep.subr.mxu0 %v2500
    %2563 = vmatpush1.msra.mxu0 %v2499
    %2564 = vmatprep.subr.mxu0 %v2502
    %2565 = vmatpush1.msra.mxu0 %v2501
    %2566 = vmatprep.subr.mxu0 %v2504
    %2567 = vmatpush1.msra.mxu0 %v2503
    %2568 = vmatprep.subr.mxu0 %v2506
    %2569 = vmatpush1.msra.mxu0 %v2505
    %2570 = vmatprep.subr.mxu0 %v2508
    %2571 = vmatpush1.msra.mxu0 %v2507
    %2572 = vmatprep.subr.mxu0 %v2510
    %2573 = vmatpush1.msra.mxu0 %v2509
    %2574 = vmatprep.subr.mxu0 %v2512
    %2575 = vmatpush1.msra.mxu0 %v2511
    %2576 = vmatprep.subr.mxu0 %v2514
    %2577 = vmatpush1.msra.mxu0 %v2513
    %2578 = vmatprep.subr.mxu0 %v2516
    %2579 = vmatpush1.msra.mxu0 %v2515
    %2580 = vmatprep.subr.mxu0 %v2518
    %2581 = vmatpush1.msra.mxu0 %v2517
    %2582 = vmatprep.subr.mxu0 %v2520
    %2583 = vmatpush1.msra.mxu0 %v2519
    %2584 = vmatprep.subr.mxu0 %v2522
    %2585 = vmatpush1.msra.mxu0 %v2521
    %2586 = vmatprep.subr.mxu0 %v2524
    %2587 = vmatpush1.msra.mxu0 %v2523
    %2588 = vmatprep.subr.mxu0 %v2526
    %2589 = vmatpush1.msra.mxu0 %v2525
    %2590 = vmatprep.subr.mxu0 %v2528
    %2591 = vmatpush1.msra.mxu0 %v2527
    %2592 = vmatprep.subr.mxu0 0.0
    %2593 = vmatpush1.msra.mxu0 0.0
    %2594 = vmatprep.subr.mxu0 0.0
    %2595 = vmatpush1.msra.mxu0 0.0
    %2596 = vmatprep.subr.mxu0 0.0
    %2597 = vmatpush1.msra.mxu0 0.0
    %2598 = vmatprep.subr.mxu0 0.0
    %2599 = vmatpush1.msra.mxu0 0.0
    %2600 = vmatprep.mubr.f32.mxu0 %v2534
    %2601 = vmatmul.mubr.f32.gmra.mrb[0].mxu0 %v2531
    %v2602 = vpop.f32.mrb[0].mxu0
    %v2603 = vadd.f32 0.0, %v2602
    %v2604 = vpop.f32.mrb[0].mxu0
    %v2605 = vadd.f32 0.0, %v2604
    %2606 = vdwg.mxu0
    %v2607 = vadd.f32 %v2466, %v2603
    %v2608 = vadd.f32 %v2468, %v2605
    %v2609 = vld [vmem:[%s2187] sm:$0xfe]
    %v2610 = vld [vmem:[%s2187 + $0x8] sm:$0xfe]
    %s2611 = scalar_lea.vmem %s4, 1344
    %v2612 = vld [vmem:[%s2611] sm:$0xff]
    %v2613 = vld [vmem:[%s2611 + $0x8] sm:$0xff]
    %v2614 = vld [vmem:[%s2611 + $0x10] sm:$0xff]
    %v2615 = vld [vmem:[%s2611 + $0x18] sm:$0xff]
    %v2616 = vld [vmem:[%s2611 + $0x20] sm:$0xff]
    %v2617 = vld [vmem:[%s2611 + $0x28] sm:$0xff]
    %v2618 = vld [vmem:[%s2611 + $0x30] sm:$0xff]
    %v2619 = vld [vmem:[%s2611 + $0x38] sm:$0xff]
    %v2620 = vld [vmem:[%s2611 + $0x40] sm:$0xff]
    %v2621 = vld [vmem:[%s2611 + $0x48] sm:$0xff]
    %v2622 = vld [vmem:[%s2611 + $0x50] sm:$0xff]
    %v2623 = vld [vmem:[%s2611 + $0x58] sm:$0xff]
    %v2624 = vld [vmem:[%s2611 + $0x60] sm:$0xff]
    %v2625 = vld [vmem:[%s2611 + $0x68] sm:$0xff]
    %v2626 = vld [vmem:[%s2611 + $0x70] sm:$0xff]
    %v2627 = vld [vmem:[%s2611 + $0x78] sm:$0xff]
    %v2628 = vld [vmem:[%s2611 + $0x80] sm:$0xff]
    %v2629 = vld [vmem:[%s2611 + $0x88] sm:$0xff]
    %v2630 = vld [vmem:[%s2611 + $0x90] sm:$0xff]
    %v2631 = vld [vmem:[%s2611 + $0x98] sm:$0xff]
    %v2632 = vld [vmem:[%s2611 + $0xa0] sm:$0xff]
    %v2633 = vld [vmem:[%s2611 + $0xa8] sm:$0xff]
    %v2634 = vld [vmem:[%s2611 + $0xb0] sm:$0xff]
    %v2635 = vld [vmem:[%s2611 + $0xb8] sm:$0xff]
    %v2636 = vld [vmem:[%s2611 + $0xc0] sm:$0xff]
    %v2637 = vld [vmem:[%s2611 + $0xc8] sm:$0xff]
    %v2638 = vld [vmem:[%s2611 + $0xd0] sm:$0xff]
    %v2639 = vld [vmem:[%s2611 + $0xd8] sm:$0xff]
    %v2640 = vld [vmem:[%s2611 + $0xe0] sm:$0xff]
    %v2641 = vld [vmem:[%s2611 + $0xe8] sm:$0xff]
    %v2642 = vld [vmem:[%s2611 + $0xf0] sm:$0xff]
    %v2643 = vld [vmem:[%s2611 + $0xf8] sm:$0xff]
    %v2644 = vld [vmem:[%s2611 + $0x100] sm:$0xff]
    %v2645 = vld [vmem:[%s2611 + $0x108] sm:$0xff]
    %v2646 = vld [vmem:[%s2611 + $0x110] sm:$0xff]
    %v2647 = vld [vmem:[%s2611 + $0x118] sm:$0xff]
    %v2648 = vld [vmem:[%s2611 + $0x120] sm:$0xff]
    %v2649 = vld [vmem:[%s2611 + $0x128] sm:$0xff]
    %v2650 = vld [vmem:[%s2611 + $0x130] sm:$0xff]
    %v2651 = vld [vmem:[%s2611 + $0x138] sm:$0xff]
    %v2652 = vld [vmem:[%s2611 + $0x140] sm:$0xff]
    %v2653 = vld [vmem:[%s2611 + $0x148] sm:$0xff]
    %v2654 = vld [vmem:[%s2611 + $0x150] sm:$0xff]
    %v2655 = vld [vmem:[%s2611 + $0x158] sm:$0xff]
    %v2656 = vld [vmem:[%s2611 + $0x160] sm:$0xff]
    %v2657 = vld [vmem:[%s2611 + $0x168] sm:$0xff]
    %v2658 = vld [vmem:[%s2611 + $0x170] sm:$0xff]
    %v2659 = vld [vmem:[%s2611 + $0x178] sm:$0xff]
    %v2660 = vld [vmem:[%s2611 + $0x180] sm:$0xff]
    %v2661 = vld [vmem:[%s2611 + $0x188] sm:$0xff]
    %v2662 = vld [vmem:[%s2611 + $0x190] sm:$0xff]
    %v2663 = vld [vmem:[%s2611 + $0x198] sm:$0xff]
    %v2664 = vld [vmem:[%s2611 + $0x1a0] sm:$0xff]
    %v2665 = vld [vmem:[%s2611 + $0x1a8] sm:$0xff]
    %v2666 = vld [vmem:[%s2611 + $0x1b0] sm:$0xff]
    %v2667 = vld [vmem:[%s2611 + $0x1b8] sm:$0xff]
    %v2670 = vrot.slane %v2609, 1
    %v2671 = vrot.slane %v2610, 1
    %v2673 = vsel %vm1799, %v2671, 0
    %2675 = vmatprep.subr.mxu0 %v2613
    %2676 = vmatpush1.msra.mxu0 %v2612
    %2677 = vmatprep.subr.mxu0 %v2615
    %2678 = vmatpush1.msra.mxu0 %v2614
    %2679 = vmatprep.subr.mxu0 %v2617
    %2680 = vmatpush1.msra.mxu0 %v2616
    %2681 = vmatprep.subr.mxu0 %v2619
    %2682 = vmatpush1.msra.mxu0 %v2618
    %2683 = vmatprep.subr.mxu0 %v2621
    %2684 = vmatpush1.msra.mxu0 %v2620
    %2685 = vmatprep.subr.mxu0 %v2623
    %2686 = vmatpush1.msra.mxu0 %v2622
    %2687 = vmatprep.subr.mxu0 %v2625
    %2688 = vmatpush1.msra.mxu0 %v2624
    %2689 = vmatprep.subr.mxu0 %v2627
    %2690 = vmatpush1.msra.mxu0 %v2626
    %2691 = vmatprep.subr.mxu0 %v2629
    %2692 = vmatpush1.msra.mxu0 %v2628
    %2693 = vmatprep.subr.mxu0 %v2631
    %2694 = vmatpush1.msra.mxu0 %v2630
    %2695 = vmatprep.subr.mxu0 %v2633
    %2696 = vmatpush1.msra.mxu0 %v2632
    %2697 = vmatprep.subr.mxu0 %v2635
    %2698 = vmatpush1.msra.mxu0 %v2634
    %2699 = vmatprep.subr.mxu0 %v2637
    %2700 = vmatpush1.msra.mxu0 %v2636
    %2701 = vmatprep.subr.mxu0 %v2639
    %2702 = vmatpush1.msra.mxu0 %v2638
    %2703 = vmatprep.subr.mxu0 %v2641
    %2704 = vmatpush1.msra.mxu0 %v2640
    %2705 = vmatprep.subr.mxu0 %v2643
    %2706 = vmatpush1.msra.mxu0 %v2642
    %2707 = vmatprep.subr.mxu0 %v2645
    %2708 = vmatpush1.msra.mxu0 %v2644
    %2709 = vmatprep.subr.mxu0 %v2647
    %2710 = vmatpush1.msra.mxu0 %v2646
    %2711 = vmatprep.subr.mxu0 %v2649
    %2712 = vmatpush1.msra.mxu0 %v2648
    %2713 = vmatprep.subr.mxu0 %v2651
    %2714 = vmatpush1.msra.mxu0 %v2650
    %2715 = vmatprep.subr.mxu0 %v2653
    %2716 = vmatpush1.msra.mxu0 %v2652
    %2717 = vmatprep.subr.mxu0 %v2655
    %2718 = vmatpush1.msra.mxu0 %v2654
    %2719 = vmatprep.subr.mxu0 %v2657
    %2720 = vmatpush1.msra.mxu0 %v2656
    %2721 = vmatprep.subr.mxu0 %v2659
    %2722 = vmatpush1.msra.mxu0 %v2658
    %2723 = vmatprep.subr.mxu0 %v2661
    %2724 = vmatpush1.msra.mxu0 %v2660
    %2725 = vmatprep.subr.mxu0 %v2663
    %2726 = vmatpush1.msra.mxu0 %v2662
    %2727 = vmatprep.subr.mxu0 %v2665
    %2728 = vmatpush1.msra.mxu0 %v2664
    %2729 = vmatprep.subr.mxu0 %v2667
    %2730 = vmatpush1.msra.mxu0 %v2666
    %2731 = vmatprep.subr.mxu0 0.0
    %2732 = vmatpush1.msra.mxu0 0.0
    %2733 = vmatprep.subr.mxu0 0.0
    %2734 = vmatpush1.msra.mxu0 0.0
    %2735 = vmatprep.subr.mxu0 0.0
    %2736 = vmatpush1.msra.mxu0 0.0
    %2737 = vmatprep.subr.mxu0 0.0
    %2738 = vmatpush1.msra.mxu0 0.0
    %2739 = vmatprep.mubr.f32.mxu0 %v2673
    %2740 = vmatmul.mubr.f32.gmra.mrb[0].mxu0 %v2670
    %v2741 = vpop.f32.mrb[0].mxu0
    %v2742 = vadd.f32 0.0, %v2741
    %v2743 = vpop.f32.mrb[0].mxu0
    %v2744 = vadd.f32 0.0, %v2743
    %2745 = vdwg.mxu0
    %v2746 = vadd.f32 %v2607, %v2742
    %v2747 = vadd.f32 %v2608, %v2744
    %v2748 = vld [vmem:[#allocation2] sm:$0xfc]
    %v2749 = vld [vmem:[#allocation2 + $0x8] sm:$0xfc]
    %v2750 = vld [vmem:[#allocation2 + $0x10] sm:$0x1]
    %v2751 = vld [vmem:[#allocation2 + $0x18] sm:$0x1]
    %s2752 = scalar_lea.vmem %s4, 1792
    %v2753 = vld [vmem:[%s2752] sm:$0xff]
    %v2754 = vld [vmem:[%s2752 + $0x8] sm:$0xff]
    %v2755 = vld [vmem:[%s2752 + $0x10] sm:$0xff]
    %v2756 = vld [vmem:[%s2752 + $0x18] sm:$0xff]
    %v2757 = vld [vmem:[%s2752 + $0x20] sm:$0xff]
    %v2758 = vld [vmem:[%s2752 + $0x28] sm:$0xff]
    %v2759 = vld [vmem:[%s2752 + $0x30] sm:$0xff]
    %v2760 = vld [vmem:[%s2752 + $0x38] sm:$0xff]
    %v2761 = vld [vmem:[%s2752 + $0x40] sm:$0xff]
    %v2762 = vld [vmem:[%s2752 + $0x48] sm:$0xff]
    %v2763 = vld [vmem:[%s2752 + $0x50] sm:$0xff]
    %v2764 = vld [vmem:[%s2752 + $0x58] sm:$0xff]
    %v2765 = vld [vmem:[%s2752 + $0x60] sm:$0xff]
    %v2766 = vld [vmem:[%s2752 + $0x68] sm:$0xff]
    %v2767 = vld [vmem:[%s2752 + $0x70] sm:$0xff]
    %v2768 = vld [vmem:[%s2752 + $0x78] sm:$0xff]
    %v2769 = vld [vmem:[%s2752 + $0x80] sm:$0xff]
    %v2770 = vld [vmem:[%s2752 + $0x88] sm:$0xff]
    %v2771 = vld [vmem:[%s2752 + $0x90] sm:$0xff]
    %v2772 = vld [vmem:[%s2752 + $0x98] sm:$0xff]
    %v2773 = vld [vmem:[%s2752 + $0xa0] sm:$0xff]
    %v2774 = vld [vmem:[%s2752 + $0xa8] sm:$0xff]
    %v2775 = vld [vmem:[%s2752 + $0xb0] sm:$0xff]
    %v2776 = vld [vmem:[%s2752 + $0xb8] sm:$0xff]
    %v2777 = vld [vmem:[%s2752 + $0xc0] sm:$0xff]
    %v2778 = vld [vmem:[%s2752 + $0xc8] sm:$0xff]
    %v2779 = vld [vmem:[%s2752 + $0xd0] sm:$0xff]
    %v2780 = vld [vmem:[%s2752 + $0xd8] sm:$0xff]
    %v2781 = vld [vmem:[%s2752 + $0xe0] sm:$0xff]
    %v2782 = vld [vmem:[%s2752 + $0xe8] sm:$0xff]
    %v2783 = vld [vmem:[%s2752 + $0xf0] sm:$0xff]
    %v2784 = vld [vmem:[%s2752 + $0xf8] sm:$0xff]
    %v2785 = vld [vmem:[%s2752 + $0x100] sm:$0xff]
    %v2786 = vld [vmem:[%s2752 + $0x108] sm:$0xff]
    %v2787 = vld [vmem:[%s2752 + $0x110] sm:$0xff]
    %v2788 = vld [vmem:[%s2752 + $0x118] sm:$0xff]
    %v2789 = vld [vmem:[%s2752 + $0x120] sm:$0xff]
    %v2790 = vld [vmem:[%s2752 + $0x128] sm:$0xff]
    %v2791 = vld [vmem:[%s2752 + $0x130] sm:$0xff]
    %v2792 = vld [vmem:[%s2752 + $0x138] sm:$0xff]
    %v2793 = vld [vmem:[%s2752 + $0x140] sm:$0xff]
    %v2794 = vld [vmem:[%s2752 + $0x148] sm:$0xff]
    %v2795 = vld [vmem:[%s2752 + $0x150] sm:$0xff]
    %v2796 = vld [vmem:[%s2752 + $0x158] sm:$0xff]
    %v2797 = vld [vmem:[%s2752 + $0x160] sm:$0xff]
    %v2798 = vld [vmem:[%s2752 + $0x168] sm:$0xff]
    %v2799 = vld [vmem:[%s2752 + $0x170] sm:$0xff]
    %v2800 = vld [vmem:[%s2752 + $0x178] sm:$0xff]
    %v2801 = vld [vmem:[%s2752 + $0x180] sm:$0xff]
    %v2802 = vld [vmem:[%s2752 + $0x188] sm:$0xff]
    %v2803 = vld [vmem:[%s2752 + $0x190] sm:$0xff]
    %v2804 = vld [vmem:[%s2752 + $0x198] sm:$0xff]
    %v2805 = vld [vmem:[%s2752 + $0x1a0] sm:$0xff]
    %v2806 = vld [vmem:[%s2752 + $0x1a8] sm:$0xff]
    %v2807 = vld [vmem:[%s2752 + $0x1b0] sm:$0xff]
    %v2808 = vld [vmem:[%s2752 + $0x1b8] sm:$0xff]
    %vm2813 = vcmask 1045504
    %v2814 = vrot.slane %v2748, 2
    %v2815 = vrot.slane %v2750, 2
    %v2816 = vsel %vm2813, %v2814, %v2815
    %v2817 = vrot.slane %v2749, 2
    %v2818 = vrot.slane %v2751, 2
    %v2819 = vsel %vm2813, %v2817, %v2818
    %v2821 = vsel %vm1799, %v2819, 0
    %2823 = vmatprep.subr.mxu0 %v2754
    %2824 = vmatpush1.msra.mxu0 %v2753
    %2825 = vmatprep.subr.mxu0 %v2756
    %2826 = vmatpush1.msra.mxu0 %v2755
    %2827 = vmatprep.subr.mxu0 %v2758
    %2828 = vmatpush1.msra.mxu0 %v2757
    %2829 = vmatprep.subr.mxu0 %v2760
    %2830 = vmatpush1.msra.mxu0 %v2759
    %2831 = vmatprep.subr.mxu0 %v2762
    %2832 = vmatpush1.msra.mxu0 %v2761
    %2833 = vmatprep.subr.mxu0 %v2764
    %2834 = vmatpush1.msra.mxu0 %v2763
    %2835 = vmatprep.subr.mxu0 %v2766
    %2836 = vmatpush1.msra.mxu0 %v2765
    %2837 = vmatprep.subr.mxu0 %v2768
    %2838 = vmatpush1.msra.mxu0 %v2767
    %2839 = vmatprep.subr.mxu0 %v2770
    %2840 = vmatpush1.msra.mxu0 %v2769
    %2841 = vmatprep.subr.mxu0 %v2772
    %2842 = vmatpush1.msra.mxu0 %v2771
    %2843 = vmatprep.subr.mxu0 %v2774
    %2844 = vmatpush1.msra.mxu0 %v2773
    %2845 = vmatprep.subr.mxu0 %v2776
    %2846 = vmatpush1.msra.mxu0 %v2775
    %2847 = vmatprep.subr.mxu0 %v2778
    %2848 = vmatpush1.msra.mxu0 %v2777
    %2849 = vmatprep.subr.mxu0 %v2780
    %2850 = vmatpush1.msra.mxu0 %v2779
    %2851 = vmatprep.subr.mxu0 %v2782
    %2852 = vmatpush1.msra.mxu0 %v2781
    %2853 = vmatprep.subr.mxu0 %v2784
    %2854 = vmatpush1.msra.mxu0 %v2783
    %2855 = vmatprep.subr.mxu0 %v2786
    %2856 = vmatpush1.msra.mxu0 %v2785
    %2857 = vmatprep.subr.mxu0 %v2788
    %2858 = vmatpush1.msra.mxu0 %v2787
    %2859 = vmatprep.subr.mxu0 %v2790
    %2860 = vmatpush1.msra.mxu0 %v2789
    %2861 = vmatprep.subr.mxu0 %v2792
    %2862 = vmatpush1.msra.mxu0 %v2791
    %2863 = vmatprep.subr.mxu0 %v2794
    %2864 = vmatpush1.msra.mxu0 %v2793
    %2865 = vmatprep.subr.mxu0 %v2796
    %2866 = vmatpush1.msra.mxu0 %v2795
    %2867 = vmatprep.subr.mxu0 %v2798
    %2868 = vmatpush1.msra.mxu0 %v2797
    %2869 = vmatprep.subr.mxu0 %v2800
    %2870 = vmatpush1.msra.mxu0 %v2799
    %2871 = vmatprep.subr.mxu0 %v2802
    %2872 = vmatpush1.msra.mxu0 %v2801
    %2873 = vmatprep.subr.mxu0 %v2804
    %2874 = vmatpush1.msra.mxu0 %v2803
    %2875 = vmatprep.subr.mxu0 %v2806
    %2876 = vmatpush1.msra.mxu0 %v2805
    %2877 = vmatprep.subr.mxu0 %v2808
    %2878 = vmatpush1.msra.mxu0 %v2807
    %2879 = vmatprep.subr.mxu0 0.0
    %2880 = vmatpush1.msra.mxu0 0.0
    %2881 = vmatprep.subr.mxu0 0.0
    %2882 = vmatpush1.msra.mxu0 0.0
    %2883 = vmatprep.subr.mxu0 0.0
    %2884 = vmatpush1.msra.mxu0 0.0
    %2885 = vmatprep.subr.mxu0 0.0
    %2886 = vmatpush1.msra.mxu0 0.0
    %2887 = vmatprep.mubr.f32.mxu0 %v2821
    %2888 = vmatmul.mubr.f32.gmra.mrb[0].mxu0 %v2816
    %v2889 = vpop.f32.mrb[0].mxu0
    %v2890 = vadd.f32 0.0, %v2889
    %v2891 = vpop.f32.mrb[0].mxu0
    %v2892 = vadd.f32 0.0, %v2891
    %2893 = vdwg.mxu0
    %v2894 = vadd.f32 %v2746, %v2890
    %v2895 = vadd.f32 %v2747, %v2892
    %v2896 = vsel %vm475, %v2894, 0.0
    %v2897 = vrot.slane %v2896, 4
    %v2898 = vadd.f32 %v2896, %v2897
    %v2899 = vrot.slane %v2898, 2
    %v2900 = vadd.f32 %v2898, %v2899
    %v2901 = vrot.slane %v2900, 1
    %v2902 = vadd.f32 %v2900, %v2901
    %v2903 = vsel %vm483, %v2895, 0.0
    %v2904 = vrot.slane %v2903, 4
    %v2905 = vadd.f32 %v2903, %v2904
    %v2906 = vrot.slane %v2905, 2
    %v2907 = vadd.f32 %v2905, %v2906
    %v2908 = vrot.slane %v2907, 1
    %v2909 = vadd.f32 %v2907, %v2908
    %v2910 = vadd.f32 %v2902, 0.0
    %v2911 = vadd.f32 %v2909, 0.0
    %v2912 = vmul.f32 %v2894, %v2894
    %v2913 = vmul.f32 %v2895, %v2895
    %v2914 = vsel %vm475, %v2912, 0.0
    %v2915 = vrot.slane %v2914, 4
    %v2916 = vadd.f32 %v2914, %v2915
    %v2917 = vrot.slane %v2916, 2
    %v2918 = vadd.f32 %v2916, %v2917
    %v2919 = vrot.slane %v2918, 1
    %v2920 = vadd.f32 %v2918, %v2919
    %v2921 = vsel %vm483, %v2913, 0.0
    %v2922 = vrot.slane %v2921, 4
    %v2923 = vadd.f32 %v2921, %v2922
    %v2924 = vrot.slane %v2923, 2
    %v2925 = vadd.f32 %v2923, %v2924
    %v2926 = vrot.slane %v2925, 1
    %v2927 = vadd.f32 %v2925, %v2926
    %v2928 = vadd.f32 %v2920, 0.0
    %v2929 = vadd.f32 %v2927, 0.0
    %v2930 = vld [vmem:[%s2172] sm:$0x7f]
    %v2931 = vld [vmem:[%s2172 + $0x8] sm:$0x7f]
    %v2932 = vld [vmem:[%s2202] sm:$0x7f]
    %v2933 = vld [vmem:[%s2202 + $0x8] sm:$0x7f]
    %v2935 = vsel %vm1799, %v2933, 0
    %2937 = vmatprep.subr.mxu0 %v2267
    %2938 = vmatpush1.msra.mxu0 %v2266
    %2939 = vmatprep.subr.mxu0 %v2269
    %2940 = vmatpush1.msra.mxu0 %v2268
    %2941 = vmatprep.subr.mxu0 %v2271
    %2942 = vmatpush1.msra.mxu0 %v2270
    %2943 = vmatprep.subr.mxu0 %v2273
    %2944 = vmatpush1.msra.mxu0 %v2272
    %2945 = vmatprep.subr.mxu0 %v2275
    %2946 = vmatpush1.msra.mxu0 %v2274
    %2947 = vmatprep.subr.mxu0 %v2277
    %2948 = vmatpush1.msra.mxu0 %v2276
    %2949 = vmatprep.subr.mxu0 %v2279
    %2950 = vmatpush1.msra.mxu0 %v2278
    %2951 = vmatprep.subr.mxu0 %v2281
    %2952 = vmatpush1.msra.mxu0 %v2280
    %2953 = vmatprep.subr.mxu0 %v2283
    %2954 = vmatpush1.msra.mxu0 %v2282
    %2955 = vmatprep.subr.mxu0 %v2285
    %2956 = vmatpush1.msra.mxu0 %v2284
    %2957 = vmatprep.subr.mxu0 %v2287
    %2958 = vmatpush1.msra.mxu0 %v2286
    %2959 = vmatprep.subr.mxu0 %v2289
    %2960 = vmatpush1.msra.mxu0 %v2288
    %2961 = vmatprep.subr.mxu0 %v2291
    %2962 = vmatpush1.msra.mxu0 %v2290
    %2963 = vmatprep.subr.mxu0 %v2293
    %2964 = vmatpush1.msra.mxu0 %v2292
    %2965 = vmatprep.subr.mxu0 %v2295
    %2966 = vmatpush1.msra.mxu0 %v2294
    %2967 = vmatprep.subr.mxu0 %v2297
    %2968 = vmatpush1.msra.mxu0 %v2296
    %2969 = vmatprep.subr.mxu0 %v2299
    %2970 = vmatpush1.msra.mxu0 %v2298
    %2971 = vmatprep.subr.mxu0 %v2301
    %2972 = vmatpush1.msra.mxu0 %v2300
    %2973 = vmatprep.subr.mxu0 %v2303
    %2974 = vmatpush1.msra.mxu0 %v2302
    %2975 = vmatprep.subr.mxu0 %v2305
    %2976 = vmatpush1.msra.mxu0 %v2304
    %2977 = vmatprep.subr.mxu0 %v2307
    %2978 = vmatpush1.msra.mxu0 %v2306
    %2979 = vmatprep.subr.mxu0 %v2309
    %2980 = vmatpush1.msra.mxu0 %v2308
    %2981 = vmatprep.subr.mxu0 %v2311
    %2982 = vmatpush1.msra.mxu0 %v2310
    %2983 = vmatprep.subr.mxu0 %v2313
    %2984 = vmatpush1.msra.mxu0 %v2312
    %2985 = vmatprep.subr.mxu0 %v2315
    %2986 = vmatpush1.msra.mxu0 %v2314
    %2987 = vmatprep.subr.mxu0 %v2317
    %2988 = vmatpush1.msra.mxu0 %v2316
    %2989 = vmatprep.subr.mxu0 %v2319
    %2990 = vmatpush1.msra.mxu0 %v2318
    %2991 = vmatprep.subr.mxu0 %v2321
    %2992 = vmatpush1.msra.mxu0 %v2320
    %2993 = vmatprep.subr.mxu0 0.0
    %2994 = vmatpush1.msra.mxu0 0.0
    %2995 = vmatprep.subr.mxu0 0.0
    %2996 = vmatpush1.msra.mxu0 0.0
    %2997 = vmatprep.subr.mxu0 0.0
    %2998 = vmatpush1.msra.mxu0 0.0
    %2999 = vmatprep.subr.mxu0 0.0
    %3000 = vmatpush1.msra.mxu0 0.0
    %3001 = vmatprep.mubr.f32.mxu0 %v2935
    %3002 = vmatmul.mubr.f32.gmra.mrb[0].mxu0 %v2932
    %v3003 = vpop.f32.mrb[0].mxu0
    %v3004 = vadd.f32 0.0, %v3003
    %v3005 = vpop.f32.mrb[0].mxu0
    %v3006 = vadd.f32 0.0, %v3005
    %3007 = vdwg.mxu0
    %v3009 = vsel %vm1799, %v2931, 0
    %3011 = vmatprep.subr.mxu0 %v2208
    %3012 = vmatpush1.msra.mxu0 %v2207
    %3013 = vmatprep.subr.mxu0 %v2210
    %3014 = vmatpush1.msra.mxu0 %v2209
    %3015 = vmatprep.subr.mxu0 %v2212
    %3016 = vmatpush1.msra.mxu0 %v2211
    %3017 = vmatprep.subr.mxu0 %v2214
    %3018 = vmatpush1.msra.mxu0 %v2213
    %3019 = vmatprep.subr.mxu0 %v2216
    %3020 = vmatpush1.msra.mxu0 %v2215
    %3021 = vmatprep.subr.mxu0 %v2218
    %3022 = vmatpush1.msra.mxu0 %v2217
    %3023 = vmatprep.subr.mxu0 %v2220
    %3024 = vmatpush1.msra.mxu0 %v2219
    %3025 = vmatprep.subr.mxu0 %v2222
    %3026 = vmatpush1.msra.mxu0 %v2221
    %3027 = vmatprep.subr.mxu0 %v2224
    %3028 = vmatpush1.msra.mxu0 %v2223
    %3029 = vmatprep.subr.mxu0 %v2226
    %3030 = vmatpush1.msra.mxu0 %v2225
    %3031 = vmatprep.subr.mxu0 %v2228
    %3032 = vmatpush1.msra.mxu0 %v2227
    %3033 = vmatprep.subr.mxu0 %v2230
    %3034 = vmatpush1.msra.mxu0 %v2229
    %3035 = vmatprep.subr.mxu0 %v2232
    %3036 = vmatpush1.msra.mxu0 %v2231
    %3037 = vmatprep.subr.mxu0 %v2234
    %3038 = vmatpush1.msra.mxu0 %v2233
    %3039 = vmatprep.subr.mxu0 %v2236
    %3040 = vmatpush1.msra.mxu0 %v2235
    %3041 = vmatprep.subr.mxu0 %v2238
    %3042 = vmatpush1.msra.mxu0 %v2237
    %3043 = vmatprep.subr.mxu0 %v2240
    %3044 = vmatpush1.msra.mxu0 %v2239
    %3045 = vmatprep.subr.mxu0 %v2242
    %3046 = vmatpush1.msra.mxu0 %v2241
    %3047 = vmatprep.subr.mxu0 %v2244
    %3048 = vmatpush1.msra.mxu0 %v2243
    %3049 = vmatprep.subr.mxu0 %v2246
    %3050 = vmatpush1.msra.mxu0 %v2245
    %3051 = vmatprep.subr.mxu0 %v2248
    %3052 = vmatpush1.msra.mxu0 %v2247
    %3053 = vmatprep.subr.mxu0 %v2250
    %3054 = vmatpush1.msra.mxu0 %v2249
    %3055 = vmatprep.subr.mxu0 %v2252
    %3056 = vmatpush1.msra.mxu0 %v2251
    %3057 = vmatprep.subr.mxu0 %v2254
    %3058 = vmatpush1.msra.mxu0 %v2253
    %3059 = vmatprep.subr.mxu0 %v2256
    %3060 = vmatpush1.msra.mxu0 %v2255
    %3061 = vmatprep.subr.mxu0 %v2258
    %3062 = vmatpush1.msra.mxu0 %v2257
    %3063 = vmatprep.subr.mxu0 %v2260
    %3064 = vmatpush1.msra.mxu0 %v2259
    %3065 = vmatprep.subr.mxu0 %v2262
    %3066 = vmatpush1.msra.mxu0 %v2261
    %3067 = vmatprep.subr.mxu0 0.0
    %3068 = vmatpush1.msra.mxu0 0.0
    %3069 = vmatprep.subr.mxu0 0.0
    %3070 = vmatpush1.msra.mxu0 0.0
    %3071 = vmatprep.subr.mxu0 0.0
    %3072 = vmatpush1.msra.mxu0 0.0
    %3073 = vmatprep.subr.mxu0 0.0
    %3074 = vmatpush1.msra.mxu0 0.0
    %3075 = vmatprep.mubr.f32.mxu0 %v3009
    %3076 = vmatmul.mubr.f32.gmra.mrb[0].mxu0 %v2930
    %v3077 = vpop.f32.mrb[0].mxu0
    %v3078 = vadd.f32 %v3004, %v3077
    %v3079 = vpop.f32.mrb[0].mxu0
    %v3080 = vadd.f32 %v3006, %v3079
    %3081 = vdwg.mxu0
    %v3082 = vld [vmem:[%s2172] sm:$0xfe]
    %v3083 = vld [vmem:[%s2172 + $0x8] sm:$0xfe]
    %v3086 = vrot.slane %v3082, 1
    %v3087 = vrot.slane %v3083, 1
    %v3089 = vsel %vm1799, %v3087, 0
    %3091 = vmatprep.subr.mxu0 %v2474
    %3092 = vmatpush1.msra.mxu0 %v2473
    %3093 = vmatprep.subr.mxu0 %v2476
    %3094 = vmatpush1.msra.mxu0 %v2475
    %3095 = vmatprep.subr.mxu0 %v2478
    %3096 = vmatpush1.msra.mxu0 %v2477
    %3097 = vmatprep.subr.mxu0 %v2480
    %3098 = vmatpush1.msra.mxu0 %v2479
    %3099 = vmatprep.subr.mxu0 %v2482
    %3100 = vmatpush1.msra.mxu0 %v2481
    %3101 = vmatprep.subr.mxu0 %v2484
    %3102 = vmatpush1.msra.mxu0 %v2483
    %3103 = vmatprep.subr.mxu0 %v2486
    %3104 = vmatpush1.msra.mxu0 %v2485
    %3105 = vmatprep.subr.mxu0 %v2488
    %3106 = vmatpush1.msra.mxu0 %v2487
    %3107 = vmatprep.subr.mxu0 %v2490
    %3108 = vmatpush1.msra.mxu0 %v2489
    %3109 = vmatprep.subr.mxu0 %v2492
    %3110 = vmatpush1.msra.mxu0 %v2491
    %3111 = vmatprep.subr.mxu0 %v2494
    %3112 = vmatpush1.msra.mxu0 %v2493
    %3113 = vmatprep.subr.mxu0 %v2496
    %3114 = vmatpush1.msra.mxu0 %v2495
    %3115 = vmatprep.subr.mxu0 %v2498
    %3116 = vmatpush1.msra.mxu0 %v2497
    %3117 = vmatprep.subr.mxu0 %v2500
    %3118 = vmatpush1.msra.mxu0 %v2499
    %3119 = vmatprep.subr.mxu0 %v2502
    %3120 = vmatpush1.msra.mxu0 %v2501
    %3121 = vmatprep.subr.mxu0 %v2504
    %3122 = vmatpush1.msra.mxu0 %v2503
    %3123 = vmatprep.subr.mxu0 %v2506
    %3124 = vmatpush1.msra.mxu0 %v2505
    %3125 = vmatprep.subr.mxu0 %v2508
    %3126 = vmatpush1.msra.mxu0 %v2507
    %3127 = vmatprep.subr.mxu0 %v2510
    %3128 = vmatpush1.msra.mxu0 %v2509
    %3129 = vmatprep.subr.mxu0 %v2512
    %3130 = vmatpush1.msra.mxu0 %v2511
    %3131 = vmatprep.subr.mxu0 %v2514
    %3132 = vmatpush1.msra.mxu0 %v2513
    %3133 = vmatprep.subr.mxu0 %v2516
    %3134 = vmatpush1.msra.mxu0 %v2515
    %3135 = vmatprep.subr.mxu0 %v2518
    %3136 = vmatpush1.msra.mxu0 %v2517
    %3137 = vmatprep.subr.mxu0 %v2520
    %3138 = vmatpush1.msra.mxu0 %v2519
    %3139 = vmatprep.subr.mxu0 %v2522
    %3140 = vmatpush1.msra.mxu0 %v2521
    %3141 = vmatprep.subr.mxu0 %v2524
    %3142 = vmatpush1.msra.mxu0 %v2523
    %3143 = vmatprep.subr.mxu0 %v2526
    %3144 = vmatpush1.msra.mxu0 %v2525
    %3145 = vmatprep.subr.mxu0 %v2528
    %3146 = vmatpush1.msra.mxu0 %v2527
    %3147 = vmatprep.subr.mxu0 0.0
    %3148 = vmatpush1.msra.mxu0 0.0
    %3149 = vmatprep.subr.mxu0 0.0
    %3150 = vmatpush1.msra.mxu0 0.0
    %3151 = vmatprep.subr.mxu0 0.0
    %3152 = vmatpush1.msra.mxu0 0.0
    %3153 = vmatprep.subr.mxu0 0.0
    %3154 = vmatpush1.msra.mxu0 0.0
    %3155 = vmatprep.mubr.f32.mxu0 %v3089
    %3156 = vmatmul.mubr.f32.gmra.mrb[0].mxu0 %v3086
    %v3157 = vpop.f32.mrb[0].mxu0
    %v3158 = vadd.f32 0.0, %v3157
    %v3159 = vpop.f32.mrb[0].mxu0
    %v3160 = vadd.f32 0.0, %v3159
    %3161 = vdwg.mxu0
    %v3162 = vadd.f32 %v3078, %v3158
    %v3163 = vadd.f32 %v3080, %v3160
    %v3164 = vld [vmem:[%s2202] sm:$0xfe]
    %v3165 = vld [vmem:[%s2202 + $0x8] sm:$0xfe]
    %v3168 = vrot.slane %v3164, 1
    %v3169 = vrot.slane %v3165, 1
    %v3171 = vsel %vm1799, %v3169, 0
    %3173 = vmatprep.subr.mxu0 %v2613
    %3174 = vmatpush1.msra.mxu0 %v2612
    %3175 = vmatprep.subr.mxu0 %v2615
    %3176 = vmatpush1.msra.mxu0 %v2614
    %3177 = vmatprep.subr.mxu0 %v2617
    %3178 = vmatpush1.msra.mxu0 %v2616
    %3179 = vmatprep.subr.mxu0 %v2619
    %3180 = vmatpush1.msra.mxu0 %v2618
    %3181 = vmatprep.subr.mxu0 %v2621
    %3182 = vmatpush1.msra.mxu0 %v2620
    %3183 = vmatprep.subr.mxu0 %v2623
    %3184 = vmatpush1.msra.mxu0 %v2622
    %3185 = vmatprep.subr.mxu0 %v2625
    %3186 = vmatpush1.msra.mxu0 %v2624
    %3187 = vmatprep.subr.mxu0 %v2627
    %3188 = vmatpush1.msra.mxu0 %v2626
    %3189 = vmatprep.subr.mxu0 %v2629
    %3190 = vmatpush1.msra.mxu0 %v2628
    %3191 = vmatprep.subr.mxu0 %v2631
    %3192 = vmatpush1.msra.mxu0 %v2630
    %3193 = vmatprep.subr.mxu0 %v2633
    %3194 = vmatpush1.msra.mxu0 %v2632
    %3195 = vmatprep.subr.mxu0 %v2635
    %3196 = vmatpush1.msra.mxu0 %v2634
    %3197 = vmatprep.subr.mxu0 %v2637
    %3198 = vmatpush1.msra.mxu0 %v2636
    %3199 = vmatprep.subr.mxu0 %v2639
    %3200 = vmatpush1.msra.mxu0 %v2638
    %3201 = vmatprep.subr.mxu0 %v2641
    %3202 = vmatpush1.msra.mxu0 %v2640
    %3203 = vmatprep.subr.mxu0 %v2643
    %3204 = vmatpush1.msra.mxu0 %v2642
    %3205 = vmatprep.subr.mxu0 %v2645
    %3206 = vmatpush1.msra.mxu0 %v2644
    %3207 = vmatprep.subr.mxu0 %v2647
    %3208 = vmatpush1.msra.mxu0 %v2646
    %3209 = vmatprep.subr.mxu0 %v2649
    %3210 = vmatpush1.msra.mxu0 %v2648
    %3211 = vmatprep.subr.mxu0 %v2651
    %3212 = vmatpush1.msra.mxu0 %v2650
    %3213 = vmatprep.subr.mxu0 %v2653
    %3214 = vmatpush1.msra.mxu0 %v2652
    %3215 = vmatprep.subr.mxu0 %v2655
    %3216 = vmatpush1.msra.mxu0 %v2654
    %3217 = vmatprep.subr.mxu0 %v2657
    %3218 = vmatpush1.msra.mxu0 %v2656
    %3219 = vmatprep.subr.mxu0 %v2659
    %3220 = vmatpush1.msra.mxu0 %v2658
    %3221 = vmatprep.subr.mxu0 %v2661
    %3222 = vmatpush1.msra.mxu0 %v2660
    %3223 = vmatprep.subr.mxu0 %v2663
    %3224 = vmatpush1.msra.mxu0 %v2662
    %3225 = vmatprep.subr.mxu0 %v2665
    %3226 = vmatpush1.msra.mxu0 %v2664
    %3227 = vmatprep.subr.mxu0 %v2667
    %3228 = vmatpush1.msra.mxu0 %v2666
    %3229 = vmatprep.subr.mxu0 0.0
    %3230 = vmatpush1.msra.mxu0 0.0
    %3231 = vmatprep.subr.mxu0 0.0
    %3232 = vmatpush1.msra.mxu0 0.0
    %3233 = vmatprep.subr.mxu0 0.0
    %3234 = vmatpush1.msra.mxu0 0.0
    %3235 = vmatprep.subr.mxu0 0.0
    %3236 = vmatpush1.msra.mxu0 0.0
    %3237 = vmatprep.mubr.f32.mxu0 %v3171
    %3238 = vmatmul.mubr.f32.gmra.mrb[0].mxu0 %v3168
    %v3239 = vpop.f32.mrb[0].mxu0
    %v3240 = vadd.f32 0.0, %v3239
    %v3241 = vpop.f32.mrb[0].mxu0
    %v3242 = vadd.f32 0.0, %v3241
    %3243 = vdwg.mxu0
    %v3244 = vadd.f32 %v3162, %v3240
    %v3245 = vadd.f32 %v3163, %v3242
    %v3246 = vld [vmem:[%s2172] sm:$0xfc]
    %v3247 = vld [vmem:[%s2172 + $0x8] sm:$0xfc]
    %v3248 = vld [vmem:[%s2172 + $0x10] sm:$0x1]
    %v3249 = vld [vmem:[%s2172 + $0x18] sm:$0x1]
    %v3254 = vrot.slane %v3246, 2
    %v3255 = vrot.slane %v3248, 2
    %v3256 = vsel %vm2813, %v3254, %v3255
    %v3257 = vrot.slane %v3247, 2
    %v3258 = vrot.slane %v3249, 2
    %v3259 = vsel %vm2813, %v3257, %v3258
    %v3261 = vsel %vm1799, %v3259, 0
    %3263 = vmatprep.subr.mxu0 %v2754
    %3264 = vmatpush1.msra.mxu0 %v2753
    %3265 = vmatprep.subr.mxu0 %v2756
    %3266 = vmatpush1.msra.mxu0 %v2755
    %3267 = vmatprep.subr.mxu0 %v2758
    %3268 = vmatpush1.msra.mxu0 %v2757
    %3269 = vmatprep.subr.mxu0 %v2760
    %3270 = vmatpush1.msra.mxu0 %v2759
    %3271 = vmatprep.subr.mxu0 %v2762
    %3272 = vmatpush1.msra.mxu0 %v2761
    %3273 = vmatprep.subr.mxu0 %v2764
    %3274 = vmatpush1.msra.mxu0 %v2763
    %3275 = vmatprep.subr.mxu0 %v2766
    %3276 = vmatpush1.msra.mxu0 %v2765
    %3277 = vmatprep.subr.mxu0 %v2768
    %3278 = vmatpush1.msra.mxu0 %v2767
    %3279 = vmatprep.subr.mxu0 %v2770
    %3280 = vmatpush1.msra.mxu0 %v2769
    %3281 = vmatprep.subr.mxu0 %v2772
    %3282 = vmatpush1.msra.mxu0 %v2771
    %3283 = vmatprep.subr.mxu0 %v2774
    %3284 = vmatpush1.msra.mxu0 %v2773
    %3285 = vmatprep.subr.mxu0 %v2776
    %3286 = vmatpush1.msra.mxu0 %v2775
    %3287 = vmatprep.subr.mxu0 %v2778
    %3288 = vmatpush1.msra.mxu0 %v2777
    %3289 = vmatprep.subr.mxu0 %v2780
    %3290 = vmatpush1.msra.mxu0 %v2779
    %3291 = vmatprep.subr.mxu0 %v2782
    %3292 = vmatpush1.msra.mxu0 %v2781
    %3293 = vmatprep.subr.mxu0 %v2784
    %3294 = vmatpush1.msra.mxu0 %v2783
    %3295 = vmatprep.subr.mxu0 %v2786
    %3296 = vmatpush1.msra.mxu0 %v2785
    %3297 = vmatprep.subr.mxu0 %v2788
    %3298 = vmatpush1.msra.mxu0 %v2787
    %3299 = vmatprep.subr.mxu0 %v2790
    %3300 = vmatpush1.msra.mxu0 %v2789
    %3301 = vmatprep.subr.mxu0 %v2792
    %3302 = vmatpush1.msra.mxu0 %v2791
    %3303 = vmatprep.subr.mxu0 %v2794
    %3304 = vmatpush1.msra.mxu0 %v2793
    %3305 = vmatprep.subr.mxu0 %v2796
    %3306 = vmatpush1.msra.mxu0 %v2795
    %3307 = vmatprep.subr.mxu0 %v2798
    %3308 = vmatpush1.msra.mxu0 %v2797
    %3309 = vmatprep.subr.mxu0 %v2800
    %3310 = vmatpush1.msra.mxu0 %v2799
    %3311 = vmatprep.subr.mxu0 %v2802
    %3312 = vmatpush1.msra.mxu0 %v2801
    %3313 = vmatprep.subr.mxu0 %v2804
    %3314 = vmatpush1.msra.mxu0 %v2803
    %3315 = vmatprep.subr.mxu0 %v2806
    %3316 = vmatpush1.msra.mxu0 %v2805
    %3317 = vmatprep.subr.mxu0 %v2808
    %3318 = vmatpush1.msra.mxu0 %v2807
    %3319 = vmatprep.subr.mxu0 0.0
    %3320 = vmatpush1.msra.mxu0 0.0
    %3321 = vmatprep.subr.mxu0 0.0
    %3322 = vmatpush1.msra.mxu0 0.0
    %3323 = vmatprep.subr.mxu0 0.0
    %3324 = vmatpush1.msra.mxu0 0.0
    %3325 = vmatprep.subr.mxu0 0.0
    %3326 = vmatpush1.msra.mxu0 0.0
    %3327 = vmatprep.mubr.f32.mxu0 %v3261
    %3328 = vmatmul.mubr.f32.gmra.mrb[0].mxu0 %v3256
    %v3329 = vpop.f32.mrb[0].mxu0
    %v3330 = vadd.f32 0.0, %v3329
    %v3331 = vpop.f32.mrb[0].mxu0
    %v3332 = vadd.f32 0.0, %v3331
    %3333 = vdwg.mxu0
    %v3334 = vadd.f32 %v3244, %v3330
    %v3335 = vadd.f32 %v3245, %v3332
    %v3336 = vsel %vm475, %v3334, 0.0
    %v3337 = vrot.slane %v3336, 4
    %v3338 = vadd.f32 %v3336, %v3337
    %v3339 = vrot.slane %v3338, 2
    %v3340 = vadd.f32 %v3338, %v3339
    %v3341 = vrot.slane %v3340, 1
    %v3342 = vadd.f32 %v3340, %v3341
    %v3343 = vsel %vm483, %v3335, 0.0
    %v3344 = vrot.slane %v3343, 4
    %v3345 = vadd.f32 %v3343, %v3344
    %v3346 = vrot.slane %v3345, 2
    %v3347 = vadd.f32 %v3345, %v3346
    %v3348 = vrot.slane %v3347, 1
    %v3349 = vadd.f32 %v3347, %v3348
    %v3350 = vadd.f32 %v2910, %v3342
    %v3351 = vadd.f32 %v2911, %v3349
    %v3352 = vmul.f32 %v3334, %v3334
    %v3353 = vmul.f32 %v3335, %v3335
    %v3354 = vsel %vm475, %v3352, 0.0
    %v3355 = vrot.slane %v3354, 4
    %v3356 = vadd.f32 %v3354, %v3355
    %v3357 = vrot.slane %v3356, 2
    %v3358 = vadd.f32 %v3356, %v3357
    %v3359 = vrot.slane %v3358, 1
    %v3360 = vadd.f32 %v3358, %v3359
    %v3361 = vsel %vm483, %v3353, 0.0
    %v3362 = vrot.slane %v3361, 4
    %v3363 = vadd.f32 %v3361, %v3362
    %v3364 = vrot.slane %v3363, 2
    %v3365 = vadd.f32 %v3363, %v3364
    %v3366 = vrot.slane %v3365, 1
    %v3367 = vadd.f32 %v3365, %v3366
    %v3368 = vadd.f32 %v2928, %v3360
    %v3369 = vadd.f32 %v2929, %v3367
    %v3370 = vld [vmem:[%s9] sm:$0xff]
    %v3371 = vld [vmem:[%s9 + $0x8] sm:$0xff]
    %v3372 = vld [vmem:[%s9 + $0x10] sm:$0xff]
    %v3373 = vld [vmem:[%s9 + $0x18] sm:$0xff]
    %v3374 = vld [vmem:[%s9 + $0x20] sm:$0xff]
    %v3375 = vld [vmem:[%s9 + $0x28] sm:$0xff]
    %v3376 = vld [vmem:[%s9 + $0x30] sm:$0xff]
    %v3377 = vld [vmem:[%s9 + $0x38] sm:$0xff]
    %v3378 = vld [vmem:[%s9 + $0x40] sm:$0xff]
    %v3379 = vld [vmem:[%s9 + $0x48] sm:$0xff]
    %v3380 = vld [vmem:[%s9 + $0x50] sm:$0xff]
    %v3381 = vld [vmem:[%s9 + $0x58] sm:$0xff]
    %v3382 = vld [vmem:[%s9 + $0x60] sm:$0xff]
    %v3383 = vld [vmem:[%s9 + $0x68] sm:$0xff]
    %v3384 = vld [vmem:[%s9 + $0x70] sm:$0xff]
    %v3385 = vld [vmem:[%s9 + $0x78] sm:$0xff]
    %v3386 = vld [vmem:[%s9 + $0x80] sm:$0xff]
    %v3387 = vld [vmem:[%s9 + $0x88] sm:$0xff]
    %v3388 = vld [vmem:[%s9 + $0x90] sm:$0xff]
    %v3389 = vld [vmem:[%s9 + $0x98] sm:$0xff]
    %v3390 = vld [vmem:[%s9 + $0xa0] sm:$0xff]
    %v3391 = vld [vmem:[%s9 + $0xa8] sm:$0xff]
    %v3392 = vld [vmem:[%s9 + $0xb0] sm:$0xff]
    %v3393 = vld [vmem:[%s9 + $0xb8] sm:$0xff]
    %v3394 = vld [vmem:[%s9 + $0xc0] sm:$0xff]
    %v3395 = vld [vmem:[%s9 + $0xc8] sm:$0xff]
    %v3396 = vld [vmem:[%s9 + $0xd0] sm:$0xff]
    %v3397 = vld [vmem:[%s9 + $0xd8] sm:$0xff]
    %v3399 = vsel %vm1799, %v3351, 0
    %3401 = vmatprep.subr.mxu0 0.0
    %3402 = vmatpush1.msra.mxu0 %v3370
    %3403 = vmatprep.subr.mxu0 0.0
    %3404 = vmatpush1.msra.mxu0 %v3371
    %3405 = vmatprep.subr.mxu0 0.0
    %3406 = vmatpush1.msra.mxu0 %v3372
    %3407 = vmatprep.subr.mxu0 0.0
    %3408 = vmatpush1.msra.mxu0 %v3373
    %3409 = vmatprep.subr.mxu0 0.0
    %3410 = vmatpush1.msra.mxu0 %v3374
    %3411 = vmatprep.subr.mxu0 0.0
    %3412 = vmatpush1.msra.mxu0 %v3375
    %3413 = vmatprep.subr.mxu0 0.0
    %3414 = vmatpush1.msra.mxu0 %v3376
    %3415 = vmatprep.subr.mxu0 0.0
    %3416 = vmatpush1.msra.mxu0 %v3377
    %3417 = vmatprep.subr.mxu0 0.0
    %3418 = vmatpush1.msra.mxu0 %v3378
    %3419 = vmatprep.subr.mxu0 0.0
    %3420 = vmatpush1.msra.mxu0 %v3379
    %3421 = vmatprep.subr.mxu0 0.0
    %3422 = vmatpush1.msra.mxu0 %v3380
    %3423 = vmatprep.subr.mxu0 0.0
    %3424 = vmatpush1.msra.mxu0 %v3381
    %3425 = vmatprep.subr.mxu0 0.0
    %3426 = vmatpush1.msra.mxu0 %v3382
    %3427 = vmatprep.subr.mxu0 0.0
    %3428 = vmatpush1.msra.mxu0 %v3383
    %3429 = vmatprep.subr.mxu0 0.0
    %3430 = vmatpush1.msra.mxu0 %v3384
    %3431 = vmatprep.subr.mxu0 0.0
    %3432 = vmatpush1.msra.mxu0 %v3385
    %3433 = vmatprep.subr.mxu0 0.0
    %3434 = vmatpush1.msra.mxu0 %v3386
    %3435 = vmatprep.subr.mxu0 0.0
    %3436 = vmatpush1.msra.mxu0 %v3387
    %3437 = vmatprep.subr.mxu0 0.0
    %3438 = vmatpush1.msra.mxu0 %v3388
    %3439 = vmatprep.subr.mxu0 0.0
    %3440 = vmatpush1.msra.mxu0 %v3389
    %3441 = vmatprep.subr.mxu0 0.0
    %3442 = vmatpush1.msra.mxu0 %v3390
    %3443 = vmatprep.subr.mxu0 0.0
    %3444 = vmatpush1.msra.mxu0 %v3391
    %3445 = vmatprep.subr.mxu0 0.0
    %3446 = vmatpush1.msra.mxu0 %v3392
    %3447 = vmatprep.subr.mxu0 0.0
    %3448 = vmatpush1.msra.mxu0 %v3393
    %3449 = vmatprep.subr.mxu0 0.0
    %3450 = vmatpush1.msra.mxu0 %v3394
    %3451 = vmatprep.subr.mxu0 0.0
    %3452 = vmatpush1.msra.mxu0 %v3395
    %3453 = vmatprep.subr.mxu0 0.0
    %3454 = vmatpush1.msra.mxu0 %v3396
    %3455 = vmatprep.subr.mxu0 0.0
    %3456 = vmatpush1.msra.mxu0 %v3397
    %3457 = vmatprep.subr.mxu0 0.0
    %3458 = vmatpush1.msra.mxu0 0.0
    %3459 = vmatprep.subr.mxu0 0.0
    %3460 = vmatpush1.msra.mxu0 0.0
    %3461 = vmatprep.subr.mxu0 0.0
    %3462 = vmatpush1.msra.mxu0 0.0
    %3463 = vmatprep.subr.mxu0 0.0
    %3464 = vmatpush1.msra.mxu0 0.0
    %3465 = vmatprep.mubr.f32.mxu0 %v3399
    %3466 = vmatmul.mubr.f32.gmra.mrb[0].mxu0 %v3350
    %v3467 = vpop.f32.mrb[0].mxu0
    %v3468 = vadd.f32 0.0, %v3467
    %v3469 = vpop.f32.mrb[0].mxu0
    %3470 = vdwg.mxu0
    %v3472 = vsel %vm1799, %v3369, 0
    %3474 = vmatprep.subr.mxu0 0.0
    %3475 = vmatpush1.msra.mxu0 %v3370
    %3476 = vmatprep.subr.mxu0 0.0
    %3477 = vmatpush1.msra.mxu0 %v3371
    %3478 = vmatprep.subr.mxu0 0.0
    %3479 = vmatpush1.msra.mxu0 %v3372
    %3480 = vmatprep.subr.mxu0 0.0
    %3481 = vmatpush1.msra.mxu0 %v3373
    %3482 = vmatprep.subr.mxu0 0.0
    %3483 = vmatpush1.msra.mxu0 %v3374
    %3484 = vmatprep.subr.mxu0 0.0
    %3485 = vmatpush1.msra.mxu0 %v3375
    %3486 = vmatprep.subr.mxu0 0.0
    %3487 = vmatpush1.msra.mxu0 %v3376
    %3488 = vmatprep.subr.mxu0 0.0
    %3489 = vmatpush1.msra.mxu0 %v3377
    %3490 = vmatprep.subr.mxu0 0.0
    %3491 = vmatpush1.msra.mxu0 %v3378
    %3492 = vmatprep.subr.mxu0 0.0
    %3493 = vmatpush1.msra.mxu0 %v3379
    %3494 = vmatprep.subr.mxu0 0.0
    %3495 = vmatpush1.msra.mxu0 %v3380
    %3496 = vmatprep.subr.mxu0 0.0
    %3497 = vmatpush1.msra.mxu0 %v3381
    %3498 = vmatprep.subr.mxu0 0.0
    %3499 = vmatpush1.msra.mxu0 %v3382
    %3500 = vmatprep.subr.mxu0 0.0
    %3501 = vmatpush1.msra.mxu0 %v3383
    %3502 = vmatprep.subr.mxu0 0.0
    %3503 = vmatpush1.msra.mxu0 %v3384
    %3504 = vmatprep.subr.mxu0 0.0
    %3505 = vmatpush1.msra.mxu0 %v3385
    %3506 = vmatprep.subr.mxu0 0.0
    %3507 = vmatpush1.msra.mxu0 %v3386
    %3508 = vmatprep.subr.mxu0 0.0
    %3509 = vmatpush1.msra.mxu0 %v3387
    %3510 = vmatprep.subr.mxu0 0.0
    %3511 = vmatpush1.msra.mxu0 %v3388
    %3512 = vmatprep.subr.mxu0 0.0
    %3513 = vmatpush1.msra.mxu0 %v3389
    %3514 = vmatprep.subr.mxu0 0.0
    %3515 = vmatpush1.msra.mxu0 %v3390
    %3516 = vmatprep.subr.mxu0 0.0
    %3517 = vmatpush1.msra.mxu0 %v3391
    %3518 = vmatprep.subr.mxu0 0.0
    %3519 = vmatpush1.msra.mxu0 %v3392
    %3520 = vmatprep.subr.mxu0 0.0
    %3521 = vmatpush1.msra.mxu0 %v3393
    %3522 = vmatprep.subr.mxu0 0.0
    %3523 = vmatpush1.msra.mxu0 %v3394
    %3524 = vmatprep.subr.mxu0 0.0
    %3525 = vmatpush1.msra.mxu0 %v3395
    %3526 = vmatprep.subr.mxu0 0.0
    %3527 = vmatpush1.msra.mxu0 %v3396
    %3528 = vmatprep.subr.mxu0 0.0
    %3529 = vmatpush1.msra.mxu0 %v3397
    %3530 = vmatprep.subr.mxu0 0.0
    %3531 = vmatpush1.msra.mxu0 0.0
    %3532 = vmatprep.subr.mxu0 0.0
    %3533 = vmatpush1.msra.mxu0 0.0
    %3534 = vmatprep.subr.mxu0 0.0
    %3535 = vmatpush1.msra.mxu0 0.0
    %3536 = vmatprep.subr.mxu0 0.0
    %3537 = vmatpush1.msra.mxu0 0.0
    %3538 = vmatprep.mubr.f32.mxu0 %v3472
    %3539 = vmatmul.mubr.f32.gmra.mrb[0].mxu0 %v3368
    %v3540 = vpop.f32.mrb[0].mxu0
    %v3541 = vadd.f32 0.0, %v3540
    %v3542 = vpop.f32.mrb[0].mxu0
    %3543 = vdwg.mxu0
    %v3544 = vrcp.pop 98.0
    %v3545 = vmul.f32 %v3468, %v3544
    %v3546 = vmul.f32 %v3541, %v3544
    %v3547 = vmul.f32 %v3545, %v3545
    %v3548 = vsub.f32 %v3546, %v3547
    %v3549 = vmax.f32 %v3548, 0.0
    %v3550 = vld [vmem:[%s5] sm:$0x1]
    %v3551 = vadd.f32 %v3549, 1e-05
    %v3552 = vrsqrt.pop %v3551
    %v3553 = vmul.f32 %v3550, %v3552
    %v3554 = vld [vmem:[%s6] sm:$0x1]
    %v3555 = vmul.f32 %v3545, %v3553
    %v3556 = vsub.f32 %v3554, %v3555
    %v3557 = vld [vmem:[%s10] sm:$0xff]
    %v3558 = vld [vmem:[%s10 + $0x8] sm:$0xff]
    %v3559 = vld [vmem:[%s10 + $0x10] sm:$0xff]
    %v3560 = vld [vmem:[%s10 + $0x18] sm:$0xff]
    %v3561 = vld [vmem:[%s10 + $0x20] sm:$0xff]
    %v3562 = vld [vmem:[%s10 + $0x28] sm:$0xff]
    %v3563 = vld [vmem:[%s10 + $0x30] sm:$0xff]
    %v3564 = vld [vmem:[%s10 + $0x38] sm:$0xff]
    %v3566 = vsel %vm65, %v3553, 0
    %3568 = vmatprep.subr.mxu0 %v3558
    %3569 = vmatpush1.msra.mxu0 %v3557
    %3570 = vmatprep.subr.mxu0 %v3560
    %3571 = vmatpush1.msra.mxu0 %v3559
    %3572 = vmatprep.subr.mxu0 %v3562
    %3573 = vmatpush1.msra.mxu0 %v3561
    %3574 = vmatprep.subr.mxu0 %v3564
    %3575 = vmatpush1.msra.mxu0 %v3563
    %3576 = vmatprep.subr.mxu0 0.0
    %3577 = vmatpush1.msra.mxu0 0.0
    %3578 = vmatprep.subr.mxu0 0.0
    %3579 = vmatpush1.msra.mxu0 0.0
    %3580 = vmatprep.subr.mxu0 0.0
    %3581 = vmatpush1.msra.mxu0 0.0
    %3582 = vmatprep.subr.mxu0 0.0
    %3583 = vmatpush1.msra.mxu0 0.0
    %3584 = vmatprep.subr.mxu0 0.0
    %3585 = vmatpush1.msra.mxu0 0.0
    %3586 = vmatprep.subr.mxu0 0.0
    %3587 = vmatpush1.msra.mxu0 0.0
    %3588 = vmatprep.subr.mxu0 0.0
    %3589 = vmatpush1.msra.mxu0 0.0
    %3590 = vmatprep.subr.mxu0 0.0
    %3591 = vmatpush1.msra.mxu0 0.0
    %3592 = vmatprep.subr.mxu0 0.0
    %3593 = vmatpush1.msra.mxu0 0.0
    %3594 = vmatprep.subr.mxu0 0.0
    %3595 = vmatpush1.msra.mxu0 0.0
    %3596 = vmatprep.subr.mxu0 0.0
    %3597 = vmatpush1.msra.mxu0 0.0
    %3598 = vmatprep.subr.mxu0 0.0
    %3599 = vmatpush1.msra.mxu0 0.0
    %3600 = vmatprep.subr.mxu0 0.0
    %3601 = vmatpush1.msra.mxu0 0.0
    %3602 = vmatprep.subr.mxu0 0.0
    %3603 = vmatpush1.msra.mxu0 0.0
    %3604 = vmatprep.subr.mxu0 0.0
    %3605 = vmatpush1.msra.mxu0 0.0
    %3606 = vmatprep.subr.mxu0 0.0
    %3607 = vmatpush1.msra.mxu0 0.0
    %3608 = vmatprep.subr.mxu0 0.0
    %3609 = vmatpush1.msra.mxu0 0.0
    %3610 = vmatprep.subr.mxu0 0.0
    %3611 = vmatpush1.msra.mxu0 0.0
    %3612 = vmatprep.subr.mxu0 0.0
    %3613 = vmatpush1.msra.mxu0 0.0
    %3614 = vmatprep.subr.mxu0 0.0
    %3615 = vmatpush1.msra.mxu0 0.0
    %3616 = vmatprep.subr.mxu0 0.0
    %3617 = vmatpush1.msra.mxu0 0.0
    %3618 = vmatprep.subr.mxu0 0.0
    %3619 = vmatpush1.msra.mxu0 0.0
    %3620 = vmatprep.subr.mxu0 0.0
    %3621 = vmatpush1.msra.mxu0 0.0
    %3622 = vmatprep.subr.mxu0 0.0
    %3623 = vmatpush1.msra.mxu0 0.0
    %3624 = vmatprep.subr.mxu0 0.0
    %3625 = vmatpush1.msra.mxu0 0.0
    %3626 = vmatprep.subr.mxu0 0.0
    %3627 = vmatpush1.msra.mxu0 0.0
    %3628 = vmatprep.subr.mxu0 0.0
    %3629 = vmatpush1.msra.mxu0 0.0
    %3630 = vmatprep.subr.mxu0 0.0
    %3631 = vmatpush1.msra.mxu0 0.0
    %3632 = vmatprep.mubr.f32.mxu0 0.0
    %3633 = vmatmul.mubr.f32.gmra.mrb[0].mxu0 %v3566
    %v3634 = vpop.f32.mrb[0].mxu0
    %v3635 = vadd.f32 0.0, %v3634
    %v3636 = vpop.f32.mrb[0].mxu0
    %v3637 = vadd.f32 0.0, %v3636
    %3638 = vdwg.mxu0
    %v3640 = vsel %vm65, %v3556, 0
    %3642 = vmatprep.subr.mxu0 %v3558
    %3643 = vmatpush1.msra.mxu0 %v3557
    %3644 = vmatprep.subr.mxu0 %v3560
    %3645 = vmatpush1.msra.mxu0 %v3559
    %3646 = vmatprep.subr.mxu0 %v3562
    %3647 = vmatpush1.msra.mxu0 %v3561
    %3648 = vmatprep.subr.mxu0 %v3564
    %3649 = vmatpush1.msra.mxu0 %v3563
    %3650 = vmatprep.subr.mxu0 0.0
    %3651 = vmatpush1.msra.mxu0 0.0
    %3652 = vmatprep.subr.mxu0 0.0
    %3653 = vmatpush1.msra.mxu0 0.0
    %3654 = vmatprep.subr.mxu0 0.0
    %3655 = vmatpush1.msra.mxu0 0.0
    %3656 = vmatprep.subr.mxu0 0.0
    %3657 = vmatpush1.msra.mxu0 0.0
    %3658 = vmatprep.subr.mxu0 0.0
    %3659 = vmatpush1.msra.mxu0 0.0
    %3660 = vmatprep.subr.mxu0 0.0
    %3661 = vmatpush1.msra.mxu0 0.0
    %3662 = vmatprep.subr.mxu0 0.0
    %3663 = vmatpush1.msra.mxu0 0.0
    %3664 = vmatprep.subr.mxu0 0.0
    %3665 = vmatpush1.msra.mxu0 0.0
    %3666 = vmatprep.subr.mxu0 0.0
    %3667 = vmatpush1.msra.mxu0 0.0
    %3668 = vmatprep.subr.mxu0 0.0
    %3669 = vmatpush1.msra.mxu0 0.0
    %3670 = vmatprep.subr.mxu0 0.0
    %3671 = vmatpush1.msra.mxu0 0.0
    %3672 = vmatprep.subr.mxu0 0.0
    %3673 = vmatpush1.msra.mxu0 0.0
    %3674 = vmatprep.subr.mxu0 0.0
    %3675 = vmatpush1.msra.mxu0 0.0
    %3676 = vmatprep.subr.mxu0 0.0
    %3677 = vmatpush1.msra.mxu0 0.0
    %3678 = vmatprep.subr.mxu0 0.0
    %3679 = vmatpush1.msra.mxu0 0.0
    %3680 = vmatprep.subr.mxu0 0.0
    %3681 = vmatpush1.msra.mxu0 0.0
    %3682 = vmatprep.subr.mxu0 0.0
    %3683 = vmatpush1.msra.mxu0 0.0
    %3684 = vmatprep.subr.mxu0 0.0
    %3685 = vmatpush1.msra.mxu0 0.0
    %3686 = vmatprep.subr.mxu0 0.0
    %3687 = vmatpush1.msra.mxu0 0.0
    %3688 = vmatprep.subr.mxu0 0.0
    %3689 = vmatpush1.msra.mxu0 0.0
    %3690 = vmatprep.subr.mxu0 0.0
    %3691 = vmatpush1.msra.mxu0 0.0
    %3692 = vmatprep.subr.mxu0 0.0
    %3693 = vmatpush1.msra.mxu0 0.0
    %3694 = vmatprep.subr.mxu0 0.0
    %3695 = vmatpush1.msra.mxu0 0.0
    %3696 = vmatprep.subr.mxu0 0.0
    %3697 = vmatpush1.msra.mxu0 0.0
    %3698 = vmatprep.subr.mxu0 0.0
    %3699 = vmatpush1.msra.mxu0 0.0
    %3700 = vmatprep.subr.mxu0 0.0
    %3701 = vmatpush1.msra.mxu0 0.0
    %3702 = vmatprep.subr.mxu0 0.0
    %3703 = vmatpush1.msra.mxu0 0.0
    %3704 = vmatprep.subr.mxu0 0.0
    %3705 = vmatpush1.msra.mxu0 0.0
    %3706 = vmatprep.mubr.f32.mxu0 0.0
    %3707 = vmatmul.mubr.f32.gmra.mrb[0].mxu0 %v3640
    %v3708 = vpop.f32.mrb[0].mxu0
    %v3709 = vadd.f32 0.0, %v3708
    %v3710 = vpop.f32.mrb[0].mxu0
    %v3711 = vadd.f32 0.0, %v3710
    %3712 = vdwg.mxu0
    %v3713 = vlaneseq
    %v3714 = vshrl.u32 %v3713, 7
    %v3715 = vsub.s32 0, %v3714
    %v3716 = vrot.slane %v3635, %v3715
    %v3717 = vlaneseq
    %v3718 = vshrl.u32 %v3717, 7
    %v3719 = vsub.s32 0, %v3718
    %v3720 = vrot.slane %v3637, %v3719
    %v3721 = vmul.f32 %v2894, %v3716
    %v3722 = vmul.f32 %v2895, %v3720
    %v3723 = vlaneseq
    %v3724 = vshrl.u32 %v3723, 7
    %v3725 = vsub.s32 0, %v3724
    %v3726 = vrot.slane %v3709, %v3725
    %v3727 = vlaneseq
    %v3728 = vshrl.u32 %v3727, 7
    %v3729 = vsub.s32 0, %v3728
    %v3730 = vrot.slane %v3711, %v3729
    %v3731 = vadd.f32 %v3721, %v3726
    %v3732 = vadd.f32 %v3722, %v3730
    %v3733 = vmax.f32 %v3731, 0.0
    %v3734 = vmax.f32 %v3732, 0.0
    %v3735 = vsel %vm475, %v3733, 0.0
    %v3736 = vrot.slane %v3735, 4
    %v3737 = vadd.f32 %v3735, %v3736
    %v3738 = vrot.slane %v3737, 2
    %v3739 = vadd.f32 %v3737, %v3738
    %v3740 = vrot.slane %v3739, 1
    %v3741 = vadd.f32 %v3739, %v3740
    %v3742 = vsel %vm483, %v3734, 0.0
    %v3743 = vrot.slane %v3742, 4
    %v3744 = vadd.f32 %v3742, %v3743
    %v3745 = vrot.slane %v3744, 2
    %v3746 = vadd.f32 %v3744, %v3745
    %v3747 = vrot.slane %v3746, 1
    %v3748 = vadd.f32 %v3746, %v3747
    %v3750 = vsel %vm1799, %v3748, 0
    %3752 = vmatprep.subr.mxu0 0.0
    %3753 = vmatpush1.msra.mxu0 %v3370
    %3754 = vmatprep.subr.mxu0 0.0
    %3755 = vmatpush1.msra.mxu0 %v3371
    %3756 = vmatprep.subr.mxu0 0.0
    %3757 = vmatpush1.msra.mxu0 %v3372
    %3758 = vmatprep.subr.mxu0 0.0
    %3759 = vmatpush1.msra.mxu0 %v3373
    %3760 = vmatprep.subr.mxu0 0.0
    %3761 = vmatpush1.msra.mxu0 %v3374
    %3762 = vmatprep.subr.mxu0 0.0
    %3763 = vmatpush1.msra.mxu0 %v3375
    %3764 = vmatprep.subr.mxu0 0.0
    %3765 = vmatpush1.msra.mxu0 %v3376
    %3766 = vmatprep.subr.mxu0 0.0
    %3767 = vmatpush1.msra.mxu0 %v3377
    %3768 = vmatprep.subr.mxu0 0.0
    %3769 = vmatpush1.msra.mxu0 %v3378
    %3770 = vmatprep.subr.mxu0 0.0
    %3771 = vmatpush1.msra.mxu0 %v3379
    %3772 = vmatprep.subr.mxu0 0.0
    %3773 = vmatpush1.msra.mxu0 %v3380
    %3774 = vmatprep.subr.mxu0 0.0
    %3775 = vmatpush1.msra.mxu0 %v3381
    %3776 = vmatprep.subr.mxu0 0.0
    %3777 = vmatpush1.msra.mxu0 %v3382
    %3778 = vmatprep.subr.mxu0 0.0
    %3779 = vmatpush1.msra.mxu0 %v3383
    %3780 = vmatprep.subr.mxu0 0.0
    %3781 = vmatpush1.msra.mxu0 %v3384
    %3782 = vmatprep.subr.mxu0 0.0
    %3783 = vmatpush1.msra.mxu0 %v3385
    %3784 = vmatprep.subr.mxu0 0.0
    %3785 = vmatpush1.msra.mxu0 %v3386
    %3786 = vmatprep.subr.mxu0 0.0
    %3787 = vmatpush1.msra.mxu0 %v3387
    %3788 = vmatprep.subr.mxu0 0.0
    %3789 = vmatpush1.msra.mxu0 %v3388
    %3790 = vmatprep.subr.mxu0 0.0
    %3791 = vmatpush1.msra.mxu0 %v3389
    %3792 = vmatprep.subr.mxu0 0.0
    %3793 = vmatpush1.msra.mxu0 %v3390
    %3794 = vmatprep.subr.mxu0 0.0
    %3795 = vmatpush1.msra.mxu0 %v3391
    %3796 = vmatprep.subr.mxu0 0.0
    %3797 = vmatpush1.msra.mxu0 %v3392
    %3798 = vmatprep.subr.mxu0 0.0
    %3799 = vmatpush1.msra.mxu0 %v3393
    %3800 = vmatprep.subr.mxu0 0.0
    %3801 = vmatpush1.msra.mxu0 %v3394
    %3802 = vmatprep.subr.mxu0 0.0
    %3803 = vmatpush1.msra.mxu0 %v3395
    %3804 = vmatprep.subr.mxu0 0.0
    %3805 = vmatpush1.msra.mxu0 %v3396
    %3806 = vmatprep.subr.mxu0 0.0
    %3807 = vmatpush1.msra.mxu0 %v3397
    %3808 = vmatprep.subr.mxu0 0.0
    %3809 = vmatpush1.msra.mxu0 0.0
    %3810 = vmatprep.subr.mxu0 0.0
    %3811 = vmatpush1.msra.mxu0 0.0
    %3812 = vmatprep.subr.mxu0 0.0
    %3813 = vmatpush1.msra.mxu0 0.0
    %3814 = vmatprep.subr.mxu0 0.0
    %3815 = vmatpush1.msra.mxu0 0.0
    %3816 = vmatprep.mubr.f32.mxu0 %v3750
    %3817 = vmatmul.mubr.f32.gmra.mrb[0].mxu0 %v3741
    %v3818 = vpop.f32.mrb[0].mxu0
    %v3819 = vadd.f32 0.0, %v3818
    %v3820 = vpop.f32.mrb[0].mxu0
    %3821 = vdwg.mxu0
    %v3822 = vmul.f32 %v3819, 0.020408163
    %v3823 = vld [vmem:[%s11] sm:$0xff]
    %v3824 = vld [vmem:[%s11 + $0x8] sm:$0xff]
    %v3825 = vld [vmem:[%s11 + $0x10] sm:$0xff]
    %v3826 = vld [vmem:[%s11 + $0x18] sm:$0xff]
    %v3827 = vld [vmem:[%s12] sm:$0x1]
    %v3829 = vsel %vm65, %v3822, 0
    %3831 = vmatprep.subr.mxu0 0.0
    %3832 = vmatpush1.msra.mxu0 %v3823
    %3833 = vmatprep.subr.mxu0 0.0
    %3834 = vmatpush1.msra.mxu0 %v3824
    %3835 = vmatprep.subr.mxu0 0.0
    %3836 = vmatpush1.msra.mxu0 %v3825
    %3837 = vmatprep.subr.mxu0 0.0
    %3838 = vmatpush1.msra.mxu0 %v3826
    %3839 = vmatprep.subr.mxu0 0.0
    %3840 = vmatpush1.msra.mxu0 0.0
    %3841 = vmatprep.subr.mxu0 0.0
    %3842 = vmatpush1.msra.mxu0 0.0
    %3843 = vmatprep.subr.mxu0 0.0
    %3844 = vmatpush1.msra.mxu0 0.0
    %3845 = vmatprep.subr.mxu0 0.0
    %3846 = vmatpush1.msra.mxu0 0.0
    %3847 = vmatprep.subr.mxu0 0.0
    %3848 = vmatpush1.msra.mxu0 0.0
    %3849 = vmatprep.subr.mxu0 0.0
    %3850 = vmatpush1.msra.mxu0 0.0
    %3851 = vmatprep.subr.mxu0 0.0
    %3852 = vmatpush1.msra.mxu0 0.0
    %3853 = vmatprep.subr.mxu0 0.0
    %3854 = vmatpush1.msra.mxu0 0.0
    %3855 = vmatprep.subr.mxu0 0.0
    %3856 = vmatpush1.msra.mxu0 0.0
    %3857 = vmatprep.subr.mxu0 0.0
    %3858 = vmatpush1.msra.mxu0 0.0
    %3859 = vmatprep.subr.mxu0 0.0
    %3860 = vmatpush1.msra.mxu0 0.0
    %3861 = vmatprep.subr.mxu0 0.0
    %3862 = vmatpush1.msra.mxu0 0.0
    %3863 = vmatprep.subr.mxu0 0.0
    %3864 = vmatpush1.msra.mxu0 0.0
    %3865 = vmatprep.subr.mxu0 0.0
    %3866 = vmatpush1.msra.mxu0 0.0
    %3867 = vmatprep.subr.mxu0 0.0
    %3868 = vmatpush1.msra.mxu0 0.0
    %3869 = vmatprep.subr.mxu0 0.0
    %3870 = vmatpush1.msra.mxu0 0.0
    %3871 = vmatprep.subr.mxu0 0.0
    %3872 = vmatpush1.msra.mxu0 0.0
    %3873 = vmatprep.subr.mxu0 0.0
    %3874 = vmatpush1.msra.mxu0 0.0
    %3875 = vmatprep.subr.mxu0 0.0
    %3876 = vmatpush1.msra.mxu0 0.0
    %3877 = vmatprep.subr.mxu0 0.0
    %3878 = vmatpush1.msra.mxu0 0.0
    %3879 = vmatprep.subr.mxu0 0.0
    %3880 = vmatpush1.msra.mxu0 0.0
    %3881 = vmatprep.subr.mxu0 0.0
    %3882 = vmatpush1.msra.mxu0 0.0
    %3883 = vmatprep.subr.mxu0 0.0
    %3884 = vmatpush1.msra.mxu0 0.0
    %3885 = vmatprep.subr.mxu0 0.0
    %3886 = vmatpush1.msra.mxu0 0.0
    %3887 = vmatprep.subr.mxu0 0.0
    %3888 = vmatpush1.msra.mxu0 0.0
    %3889 = vmatprep.subr.mxu0 0.0
    %3890 = vmatpush1.msra.mxu0 0.0
    %3891 = vmatprep.subr.mxu0 0.0
    %3892 = vmatpush1.msra.mxu0 0.0
    %3893 = vmatprep.subr.mxu0 0.0
    %3894 = vmatpush1.msra.mxu0 0.0
    %3895 = vmatprep.mubr.f32.mxu0 0.0
    %3896 = vmatmul.mubr.f32.gmra.mrb[0].mxu0 %v3829
    %v3897 = vpop.f32.mrb[0].mxu0
    %v3898 = vadd.f32 %v3827, %v3897
    %v3899 = vpop.f32.mrb[0].mxu0
    %3900 = vdwg.mxu0
    %v3901 = vmul.f32 %v3334, %v3716
    %v3902 = vmul.f32 %v3335, %v3720
    %v3903 = vadd.f32 %v3901, %v3726
    %v3904 = vadd.f32 %v3902, %v3730
    %v3905 = vmax.f32 %v3903, 0.0
    %v3906 = vmax.f32 %v3904, 0.0
    %v3907 = vsel %vm475, %v3905, 0.0
    %v3908 = vrot.slane %v3907, 4
    %v3909 = vadd.f32 %v3907, %v3908
    %v3910 = vrot.slane %v3909, 2
    %v3911 = vadd.f32 %v3909, %v3910
    %v3912 = vrot.slane %v3911, 1
    %v3913 = vadd.f32 %v3911, %v3912
    %v3914 = vsel %vm483, %v3906, 0.0
    %v3915 = vrot.slane %v3914, 4
    %v3916 = vadd.f32 %v3914, %v3915
    %v3917 = vrot.slane %v3916, 2
    %v3918 = vadd.f32 %v3916, %v3917
    %v3919 = vrot.slane %v3918, 1
    %v3920 = vadd.f32 %v3918, %v3919
    %v3922 = vsel %vm1799, %v3920, 0
    %3924 = vmatprep.subr.mxu0 0.0
    %3925 = vmatpush1.msra.mxu0 %v3370
    %3926 = vmatprep.subr.mxu0 0.0
    %3927 = vmatpush1.msra.mxu0 %v3371
    %3928 = vmatprep.subr.mxu0 0.0
    %3929 = vmatpush1.msra.mxu0 %v3372
    %3930 = vmatprep.subr.mxu0 0.0
    %3931 = vmatpush1.msra.mxu0 %v3373
    %3932 = vmatprep.subr.mxu0 0.0
    %3933 = vmatpush1.msra.mxu0 %v3374
    %3934 = vmatprep.subr.mxu0 0.0
    %3935 = vmatpush1.msra.mxu0 %v3375
    %3936 = vmatprep.subr.mxu0 0.0
    %3937 = vmatpush1.msra.mxu0 %v3376
    %3938 = vmatprep.subr.mxu0 0.0
    %3939 = vmatpush1.msra.mxu0 %v3377
    %3940 = vmatprep.subr.mxu0 0.0
    %3941 = vmatpush1.msra.mxu0 %v3378
    %3942 = vmatprep.subr.mxu0 0.0
    %3943 = vmatpush1.msra.mxu0 %v3379
    %3944 = vmatprep.subr.mxu0 0.0
    %3945 = vmatpush1.msra.mxu0 %v3380
    %3946 = vmatprep.subr.mxu0 0.0
    %3947 = vmatpush1.msra.mxu0 %v3381
    %3948 = vmatprep.subr.mxu0 0.0
    %3949 = vmatpush1.msra.mxu0 %v3382
    %3950 = vmatprep.subr.mxu0 0.0
    %3951 = vmatpush1.msra.mxu0 %v3383
    %3952 = vmatprep.subr.mxu0 0.0
    %3953 = vmatpush1.msra.mxu0 %v3384
    %3954 = vmatprep.subr.mxu0 0.0
    %3955 = vmatpush1.msra.mxu0 %v3385
    %3956 = vmatprep.subr.mxu0 0.0
    %3957 = vmatpush1.msra.mxu0 %v3386
    %3958 = vmatprep.subr.mxu0 0.0
    %3959 = vmatpush1.msra.mxu0 %v3387
    %3960 = vmatprep.subr.mxu0 0.0
    %3961 = vmatpush1.msra.mxu0 %v3388
    %3962 = vmatprep.subr.mxu0 0.0
    %3963 = vmatpush1.msra.mxu0 %v3389
    %3964 = vmatprep.subr.mxu0 0.0
    %3965 = vmatpush1.msra.mxu0 %v3390
    %3966 = vmatprep.subr.mxu0 0.0
    %3967 = vmatpush1.msra.mxu0 %v3391
    %3968 = vmatprep.subr.mxu0 0.0
    %3969 = vmatpush1.msra.mxu0 %v3392
    %3970 = vmatprep.subr.mxu0 0.0
    %3971 = vmatpush1.msra.mxu0 %v3393
    %3972 = vmatprep.subr.mxu0 0.0
    %3973 = vmatpush1.msra.mxu0 %v3394
    %3974 = vmatprep.subr.mxu0 0.0
    %3975 = vmatpush1.msra.mxu0 %v3395
    %3976 = vmatprep.subr.mxu0 0.0
    %3977 = vmatpush1.msra.mxu0 %v3396
    %3978 = vmatprep.subr.mxu0 0.0
    %3979 = vmatpush1.msra.mxu0 %v3397
    %3980 = vmatprep.subr.mxu0 0.0
    %3981 = vmatpush1.msra.mxu0 0.0
    %3982 = vmatprep.subr.mxu0 0.0
    %3983 = vmatpush1.msra.mxu0 0.0
    %3984 = vmatprep.subr.mxu0 0.0
    %3985 = vmatpush1.msra.mxu0 0.0
    %3986 = vmatprep.subr.mxu0 0.0
    %3987 = vmatpush1.msra.mxu0 0.0
    %3988 = vmatprep.mubr.f32.mxu0 %v3922
    %3989 = vmatmul.mubr.f32.gmra.mrb[0].mxu0 %v3913
    %v3990 = vpop.f32.mrb[0].mxu0
    %v3991 = vadd.f32 0.0, %v3990
    %v3992 = vpop.f32.mrb[0].mxu0
    %3993 = vdwg.mxu0
    %v3994 = vmul.f32 %v3991, 0.020408163
    %v3996 = vsel %vm65, %v3994, 0
    %3998 = vmatprep.subr.mxu0 0.0
    %3999 = vmatpush1.msra.mxu0 %v3823
    %4000 = vmatprep.subr.mxu0 0.0
    %4001 = vmatpush1.msra.mxu0 %v3824
    %4002 = vmatprep.subr.mxu0 0.0
    %4003 = vmatpush1.msra.mxu0 %v3825
    %4004 = vmatprep.subr.mxu0 0.0
    %4005 = vmatpush1.msra.mxu0 %v3826
    %4006 = vmatprep.subr.mxu0 0.0
    %4007 = vmatpush1.msra.mxu0 0.0
    %4008 = vmatprep.subr.mxu0 0.0
    %4009 = vmatpush1.msra.mxu0 0.0
    %4010 = vmatprep.subr.mxu0 0.0
    %4011 = vmatpush1.msra.mxu0 0.0
    %4012 = vmatprep.subr.mxu0 0.0
    %4013 = vmatpush1.msra.mxu0 0.0
    %4014 = vmatprep.subr.mxu0 0.0
    %4015 = vmatpush1.msra.mxu0 0.0
    %4016 = vmatprep.subr.mxu0 0.0
    %4017 = vmatpush1.msra.mxu0 0.0
    %4018 = vmatprep.subr.mxu0 0.0
    %4019 = vmatpush1.msra.mxu0 0.0
    %4020 = vmatprep.subr.mxu0 0.0
    %4021 = vmatpush1.msra.mxu0 0.0
    %4022 = vmatprep.subr.mxu0 0.0
    %4023 = vmatpush1.msra.mxu0 0.0
    %4024 = vmatprep.subr.mxu0 0.0
    %4025 = vmatpush1.msra.mxu0 0.0
    %4026 = vmatprep.subr.mxu0 0.0
    %4027 = vmatpush1.msra.mxu0 0.0
    %4028 = vmatprep.subr.mxu0 0.0
    %4029 = vmatpush1.msra.mxu0 0.0
    %4030 = vmatprep.subr.mxu0 0.0
    %4031 = vmatpush1.msra.mxu0 0.0
    %4032 = vmatprep.subr.mxu0 0.0
    %4033 = vmatpush1.msra.mxu0 0.0
    %4034 = vmatprep.subr.mxu0 0.0
    %4035 = vmatpush1.msra.mxu0 0.0
    %4036 = vmatprep.subr.mxu0 0.0
    %4037 = vmatpush1.msra.mxu0 0.0
    %4038 = vmatprep.subr.mxu0 0.0
    %4039 = vmatpush1.msra.mxu0 0.0
    %4040 = vmatprep.subr.mxu0 0.0
    %4041 = vmatpush1.msra.mxu0 0.0
    %4042 = vmatprep.subr.mxu0 0.0
    %4043 = vmatpush1.msra.mxu0 0.0
    %4044 = vmatprep.subr.mxu0 0.0
    %4045 = vmatpush1.msra.mxu0 0.0
    %4046 = vmatprep.subr.mxu0 0.0
    %4047 = vmatpush1.msra.mxu0 0.0
    %4048 = vmatprep.subr.mxu0 0.0
    %4049 = vmatpush1.msra.mxu0 0.0
    %4050 = vmatprep.subr.mxu0 0.0
    %4051 = vmatpush1.msra.mxu0 0.0
    %4052 = vmatprep.subr.mxu0 0.0
    %4053 = vmatpush1.msra.mxu0 0.0
    %4054 = vmatprep.subr.mxu0 0.0
    %4055 = vmatpush1.msra.mxu0 0.0
    %4056 = vmatprep.subr.mxu0 0.0
    %4057 = vmatpush1.msra.mxu0 0.0
    %4058 = vmatprep.subr.mxu0 0.0
    %4059 = vmatpush1.msra.mxu0 0.0
    %4060 = vmatprep.subr.mxu0 0.0
    %4061 = vmatpush1.msra.mxu0 0.0
    %4062 = vmatprep.mubr.f32.mxu0 0.0
    %4063 = vmatmul.mubr.f32.gmra.mrb[0].mxu0 %v3996
    %v4064 = vpop.f32.mrb[0].mxu0
    %v4065 = vadd.f32 %v3827, %v4064
    %v4066 = vpop.f32.mrb[0].mxu0
    %4067 = vdwg.mxu0
    %v4069 = vrot.slane %v4065, 7
    %vm4071 = vcmask 1040384
    %v4072 = vsel %vm4071, %v3898, %v4069
    %vm4073 = vcmask 74752
    %4074 = vst.msk [vmem:[#allocation3] sm:$0x3] %vm4073, %v4072
    // Predicated region
    $region54: #{_net_forward.1} parent=1 // pred_check
      _
    $region55: #{_net_forward.1} parent=1 // pred_check_branch
      %4076 = sbr.rel (0) target = $region57
    $region56: #{_net_forward.1} parent=1 // pred_region
      %s4078 = ssub.s32 32, 32
      %4079 = vsyncadd [#allocation4], %s4078
      %s4081 = sshll.u32 [#allocation3], 4
      %s4082 = int_to_ptr.vmem [resolvable:$true] %s4081
      %4084 = dma.vmem_to_hbm [thread:$0]  %s4082, 32, %s13, [#allocation4]
    $region57: #{_net_forward.1} parent=1 // pred_fallthru
      _
    // Predicated region
    $region58: #{_net_forward.1} parent=1 // pred_check
      _
    $region59: #{_net_forward.1} parent=1 // pred_check_branch
      %4086 = sbr.rel (0) target = $region61
    $region60: #{_net_forward.1} parent=1 // pred_region
      %4087 = dma.done [#allocation4], 32
    $region61: #{_net_forward.1} parent=1 // pred_fallthru
      _
    %4088 = vsyncpa [#allocation4], 1

</llo_original>
